<compile_context>
chip_gen: v7x
topology: tpu7x:2x2x1
jax: 0.10.0
libtpu: 0.0.40
codegen_flags: <defaults>
</compile_context>

<pallas_src>
import math

import jax
import jax.numpy as jnp
from jax.experimental import pallas as pl
from jax.experimental.pallas import tpu as pltpu


def _round_up(x, m):
    return (x + m - 1) // m * m


# --------------------------- Pallas kernels ---------------------------------
def layer1_kernel(a_ref, xk_ref, xi_ref, w1rel_ref, w1root_ref, b1_ref,
                  w2_ref, b2_ref, trel_ref, troot_ref, acc_ref):
    """Layer-1 mean aggregation + linears + sigmoid, then project h onto the
    layer-2 weights (associativity), emitting t_rel and t_root."""
    k = pl.program_id(1)

    @pl.when(k == 0)
    def _init():
        acc_ref[...] = jnp.zeros_like(acc_ref)

    # A tile [TM, TK] (bf16) @ x tile [TK, FinP] (bf16) -> f32 accumulate
    acc_ref[...] += jnp.dot(a_ref[...], xk_ref[...],
                            preferred_element_type=jnp.float32)

    @pl.when(k == pl.num_programs(1) - 1)
    def _finalize():
        outp = trel_ref.shape[-1]
        # Split rel/root matmuls (no lane-dim concat), bf16 operands, f32 acc.
        pre = (jnp.dot(acc_ref[...].astype(jnp.bfloat16), w1rel_ref[...],
                       preferred_element_type=jnp.float32)
               + jnp.dot(xi_ref[...], w1root_ref[...],
                         preferred_element_type=jnp.float32)
               + b1_ref[...])
        h = jax.nn.sigmoid(pre).astype(jnp.bfloat16)
        # Fused layer-2 projection:  h @ [Wrel2 | Wroot2]   (bf16, f32 acc)
        t = jnp.dot(h, w2_ref[...], preferred_element_type=jnp.float32)
        trel_ref[...] = t[:, :outp].astype(trel_ref.dtype)
        troot_ref[...] = (t[:, outp:] + b2_ref[...]).astype(troot_ref.dtype)


def layer2_kernel(a_ref, trel_ref, troot_ref, out_ref, acc_ref):
    """out = A @ t_rel + t_root  (layer-2 mean aggregation, reordered)."""
    k = pl.program_id(1)

    @pl.when(k == 0)
    def _init():
        acc_ref[...] = jnp.zeros_like(acc_ref)

    acc_ref[...] += jnp.dot(a_ref[...], trel_ref[...],
                            preferred_element_type=jnp.float32)

    @pl.when(k == pl.num_programs(1) - 1)
    def _finalize():
        out_ref[...] = acc_ref[...] + troot_ref[...].astype(jnp.float32)


# ------------------------------ wrapper --------------------------------------
def sage_forward(x, edge_index, edge_attr, params, *, tm=512, tk=512):
    """x: [N, Fin] f32; edge_index: [2, E] int32 (row0=src j, row1=dst i);
    edge_attr: [E] f32 edge weights."""
    wrel1, wroot1, b1, wrel2, wroot2, b2 = params
    N, fin = x.shape
    hid = wrel1.shape[1]
    out_feats = wrel2.shape[1]

    lane = 128
    assert tm % lane == 0 and tk % lane == 0
    finp = _round_up(fin, lane)
    hidp = _round_up(hid, lane)
    outp = _round_up(out_feats, lane)

    # Tile / padding selection.
    npad0 = _round_up(N, lane)
    tm = min(tm, npad0)
    tk = min(tk, npad0)
    npad = _round_up(N, math.lcm(tm, tk))
    # Keep >= 2 row tiles when possible: the "parallel" row axis is what feeds
    # v7x's two TensorCores (one row tile would idle a TC).
    while npad // tm < 2 and tm > lane:
        tm //= 2
    assert npad % tm == 0 and npad % tk == 0

    # Glue: dense degree-mean-normalized weighted adjacency (scatter -> dense).
    src, dst = edge_index[0], edge_index[1]
    A = jnp.zeros((npad, npad), jnp.float32).at[dst, src].add(edge_attr)
    cnt = jnp.zeros((npad,), jnp.float32).at[dst].add(1.0)
    A = (A / jnp.clip(cnt, 1.0, None)[:, None]).astype(jnp.bfloat16)

    # Single bf16 copy of x (feeds both the aggregation and root streams).
    xp_bf16 = (jnp.zeros((npad, finp), jnp.float32)
               .at[:N, :fin].set(x)).astype(jnp.bfloat16)

    # Lane-dense, zero-padded weights (bf16 for MXU); biases stay f32.
    w1rel_p = jnp.zeros((finp, hidp), jnp.float32).at[:fin, :hid].set(wrel1)
    w1root_p = jnp.zeros((finp, hidp), jnp.float32).at[:fin, :hid].set(wroot1)
    w1rel_p = w1rel_p.astype(jnp.bfloat16)
    w1root_p = w1root_p.astype(jnp.bfloat16)
    b1p = jnp.zeros((1, hidp), jnp.float32).at[0, :hid].set(b1)
    w2p = jnp.zeros((hidp, 2 * outp), jnp.float32)
    w2p = w2p.at[:hid, :out_feats].set(wrel2)
    w2p = w2p.at[:hid, outp:outp + out_feats].set(wroot2)
    w2p = w2p.astype(jnp.bfloat16)
    b2p = jnp.zeros((1, outp), jnp.float32).at[0, :out_feats].set(b2)

    grid = (npad // tm, npad // tk)
    cparams = pltpu.CompilerParams(
        dimension_semantics=("parallel", "arbitrary"),
        vmem_limit_bytes=48 * 1024 * 1024)

    def full_spec(arr):
        return pl.BlockSpec(arr.shape, lambda i, k: (0, 0))

    # ---- pass 1: layer 1 (+ sigmoid) + projection onto layer-2 weights ----
    trel, troot = pl.pallas_call(
        layer1_kernel,
        out_shape=(jax.ShapeDtypeStruct((npad, outp), jnp.bfloat16),
                   jax.ShapeDtypeStruct((npad, outp), jnp.bfloat16)),
        grid_spec=pltpu.PrefetchScalarGridSpec(
            num_scalar_prefetch=0,
            grid=grid,
            in_specs=[
                pl.BlockSpec((tm, tk), lambda i, k: (i, k)),     # A tile
                pl.BlockSpec((tk, finp), lambda i, k: (k, 0)),   # x (agg, k)
                pl.BlockSpec((tm, finp), lambda i, k: (i, 0)),   # x (root, i)
                full_spec(w1rel_p), full_spec(w1root_p), full_spec(b1p),
                full_spec(w2p), full_spec(b2p),
            ],
            out_specs=[
                pl.BlockSpec((tm, outp), lambda i, k: (i, 0)),   # t_rel
                pl.BlockSpec((tm, outp), lambda i, k: (i, 0)),   # t_root
            ],
            scratch_shapes=[pltpu.VMEM((tm, finp), jnp.float32)],
        ),
        compiler_params=cparams,
    )(A, xp_bf16, xp_bf16, w1rel_p, w1root_p, b1p, w2p, b2p)

    # ---- pass 2: layer-2 aggregation + root/bias add ----
    out_p = pl.pallas_call(
        layer2_kernel,
        out_shape=jax.ShapeDtypeStruct((npad, outp), jnp.float32),
        grid_spec=pltpu.PrefetchScalarGridSpec(
            num_scalar_prefetch=0,
            grid=grid,
            in_specs=[
                pl.BlockSpec((tm, tk), lambda i, k: (i, k)),     # A tile
                pl.BlockSpec((tk, outp), lambda i, k: (k, 0)),   # t_rel
                pl.BlockSpec((tm, outp), lambda i, k: (i, 0)),   # t_root
            ],
            out_specs=pl.BlockSpec((tm, outp), lambda i, k: (i, 0)),
            scratch_shapes=[pltpu.VMEM((tm, outp), jnp.float32)],
        ),
        compiler_params=cparams,
    )(A, trel, troot)

    return out_p[:N, :out_feats]


# --------------------------- pure-JAX reference -------------------------------
def graphconv_ref(x, edge_index, edge_w, wrel, wroot, b):
    N = x.shape[0]
    src, dst = edge_index[0], edge_index[1]
    msgs = x[src] * edge_w[:, None]
    agg = jnp.zeros((N, x.shape[1]), jnp.float32).at[dst].add(msgs)
    cnt = jnp.zeros((N,), jnp.float32).at[dst].add(1.0)
    agg = agg / jnp.clip(cnt, 1.0, None)[:, None]
    return agg @ wrel + b + x @ wroot


def sage_ref(x, edge_index, edge_attr, params):
    wrel1, wroot1, b1, wrel2, wroot2, b2 = params
    h = graphconv_ref(x, edge_index, edge_attr, wrel1, wroot1, b1)
    h = jax.nn.sigmoid(h)
    return graphconv_ref(h, edge_index, edge_attr, wrel2, wroot2, b2)


# --------------------------------- main ---------------------------------------
if __name__ == "__main__":
    # N=600 -> npad=1024 with the default 512-tiles: exercises a (2, 2) grid
    # (both the parallel row axis and the k-reduction accumulator path).
    N, E = 600, 2400
    in_feats, hid_feats, out_feats = 8, 32, 8

    key = jax.random.PRNGKey(0)
    kx, ke, kw1, kw2, kw3, kw4, kb1, kb2, ks, kd = jax.random.split(key, 10)

    x = jax.random.normal(kx, (N, in_feats), jnp.float32)
    src = jax.random.randint(ks, (E,), 0, N, jnp.int32)
    dst = jax.random.randint(kd, (E,), 0, N, jnp.int32)
    edge_index = jnp.stack([src, dst], axis=0)                # [2, E]
    edge_attr = jax.random.uniform(ke, (E,), jnp.float32)     # edge weights

    # Deterministic params (weights stored already-transposed: [in, out]).
    params = (
        0.1 * jax.random.normal(kw1, (in_feats, hid_feats), jnp.float32),   # conv1.lin_rel.W^T
        0.1 * jax.random.normal(kw2, (in_feats, hid_feats), jnp.float32),   # conv1.lin_root.W^T
        0.1 * jax.random.normal(kb1, (hid_feats,), jnp.float32),            # conv1.lin_rel.bias
        0.1 * jax.random.normal(kw3, (hid_feats, out_feats), jnp.float32),  # conv2.lin_rel.W^T
        0.1 * jax.random.normal(kw4, (hid_feats, out_feats), jnp.float32),  # conv2.lin_root.W^T
        0.1 * jax.random.normal(kb2, (out_feats,), jnp.float32),            # conv2.lin_rel.bias
    )

    out = jax.block_until_ready(sage_forward(x, edge_index, edge_attr, params))
    ref = jax.block_until_ready(sage_ref(x, edge_index, edge_attr, params))

    assert out.shape == (N, out_feats)
    # bf16 A-matmuls + bf16 finalize matmuls with f32 accumulation.
    assert jnp.max(jnp.abs(out - ref)) < 5e-2, "mismatch vs reference"
    print("KERNEL_OK")
</pallas_src>

<mosaic_0001>
module attributes {stable_mosaic.version = 11 : i64} {
  func.func @layer1_kernel(%arg0: i32, %arg1: i32, %arg2: memref<512x512xbf16, #tpu.memory_space<vmem>>, %arg3: memref<512x128xbf16, #tpu.memory_space<vmem>>, %arg4: memref<512x128xbf16, #tpu.memory_space<vmem>>, %arg5: memref<128x128xbf16, #tpu.memory_space<vmem>>, %arg6: memref<128x128xbf16, #tpu.memory_space<vmem>>, %arg7: memref<1x128xf32, #tpu.memory_space<vmem>>, %arg8: memref<128x256xbf16, #tpu.memory_space<vmem>>, %arg9: memref<1x128xf32, #tpu.memory_space<vmem>>, %arg10: memref<512x128xbf16, #tpu.memory_space<vmem>>, %arg11: memref<512x128xbf16, #tpu.memory_space<vmem>>, %arg12: memref<512x128xf32, #tpu.memory_space<vmem>>) attributes {dimension_semantics = [#tpu.dimension_semantics<parallel>, #tpu.dimension_semantics<arbitrary>], iteration_bounds = array<i64: 2, 2>, scalar_prefetch = 0 : i64, scratch_operands = 1 : i64, tpu.core_type = #tpu.core_type<tc>, window_params = [{transform_indices = @transform_0, window_bounds = array<i64: 512, 512>}, {transform_indices = @transform_1, window_bounds = array<i64: 512, 128>}, {transform_indices = @transform_2, window_bounds = array<i64: 512, 128>}, {pipeline_mode = #tpu.pipeline_mode<synchronous>, transform_indices = @transform_3, window_bounds = array<i64: 128, 128>}, {pipeline_mode = #tpu.pipeline_mode<synchronous>, transform_indices = @transform_4, window_bounds = array<i64: 128, 128>}, {pipeline_mode = #tpu.pipeline_mode<synchronous>, transform_indices = @transform_5, window_bounds = array<i64: 1, 128>}, {pipeline_mode = #tpu.pipeline_mode<synchronous>, transform_indices = @transform_6, window_bounds = array<i64: 128, 256>}, {pipeline_mode = #tpu.pipeline_mode<synchronous>, transform_indices = @transform_7, window_bounds = array<i64: 1, 128>}, {transform_indices = @transform_8, window_bounds = array<i64: 512, 128>}, {transform_indices = @transform_9, window_bounds = array<i64: 512, 128>}]} {
    %c0_i32 = arith.constant 0 : i32
    %0 = arith.cmpi eq, %arg1, %c0_i32 : i32
    %1 = arith.extui %0 : i1 to i32
    %c0_i32_0 = arith.constant 0 : i32
    %2 = arith.cmpi ne, %1, %c0_i32_0 : i32
    scf.if %2 {
      %cst_9 = arith.constant 0.000000e+00 : f32
      %12 = vector.broadcast %cst_9 : f32 to vector<512x128xf32>
      %c0_10 = arith.constant 0 : index
      %c0_11 = arith.constant 0 : index
      %13 = vector.load %arg12[%c0_10, %c0_11] : memref<512x128xf32, #tpu.memory_space<vmem>>, vector<512x128xf32>
      tpu.vector_store %arg12[%c0_10, %c0_11], %12 {strides = array<i32>} : memref<512x128xf32, #tpu.memory_space<vmem>>, vector<512x128xf32>,
    } else {
    }
    %c0 = arith.constant 0 : index
    %c0_1 = arith.constant 0 : index
    %3 = vector.load %arg12[%c0, %c0_1] : memref<512x128xf32, #tpu.memory_space<vmem>>, vector<512x128xf32>
    %c0_2 = arith.constant 0 : index
    %c0_3 = arith.constant 0 : index
    %4 = vector.load %arg2[%c0_2, %c0_3] : memref<512x512xbf16, #tpu.memory_space<vmem>>, vector<512x512xbf16>
    %c0_4 = arith.constant 0 : index
    %c0_5 = arith.constant 0 : index
    %5 = vector.load %arg3[%c0_4, %c0_5] : memref<512x128xbf16, #tpu.memory_space<vmem>>, vector<512x128xbf16>
    %cst = arith.constant dense<0.000000e+00> : vector<512x128xf32>
    %6 = tpu.matmul %4, %5, %cst {dimension_numbers = #tpu.dot_dimension_numbers<[1], [0], [0], [1], [0, 0, 1, 1], [], []>} : vector<512x512xbf16>, vector<512x128xbf16>, vector<512x128xf32> -> vector<512x128xf32>
    %7 = arith.addf %3, %6 : vector<512x128xf32>
    %c0_6 = arith.constant 0 : index
    %c0_7 = arith.constant 0 : index
    %8 = vector.load %arg12[%c0_6, %c0_7] : memref<512x128xf32, #tpu.memory_space<vmem>>, vector<512x128xf32>
    tpu.vector_store %arg12[%c0_6, %c0_7], %7 {strides = array<i32>} : memref<512x128xf32, #tpu.memory_space<vmem>>, vector<512x128xf32>,
    %c1_i32 = arith.constant 1 : i32
    %9 = arith.cmpi eq, %arg1, %c1_i32 : i32
    %10 = arith.extui %9 : i1 to i32
    %c0_i32_8 = arith.constant 0 : i32
    %11 = arith.cmpi ne, %10, %c0_i32_8 : i32
    scf.if %11 {
      %c0_9 = arith.constant 0 : index
      %c0_10 = arith.constant 0 : index
      %12 = vector.load %arg12[%c0_9, %c0_10] : memref<512x128xf32, #tpu.memory_space<vmem>>, vector<512x128xf32>
      %13 = arith.truncf %12 : vector<512x128xf32> to vector<512x128xbf16>
      %c0_11 = arith.constant 0 : index
      %c0_12 = arith.constant 0 : index
      %14 = vector.load %arg5[%c0_11, %c0_12] : memref<128x128xbf16, #tpu.memory_space<vmem>>, vector<128x128xbf16>
      %cst_13 = arith.constant dense<0.000000e+00> : vector<512x128xf32>
      %15 = tpu.matmul %13, %14, %cst_13 {dimension_numbers = #tpu.dot_dimension_numbers<[1], [0], [0], [1], [0, 0, 1, 1], [], []>} : vector<512x128xbf16>, vector<128x128xbf16>, vector<512x128xf32> -> vector<512x128xf32>
      %c0_14 = arith.constant 0 : index
      %c0_15 = arith.constant 0 : index
      %16 = vector.load %arg4[%c0_14, %c0_15] : memref<512x128xbf16, #tpu.memory_space<vmem>>, vector<512x128xbf16>
      %c0_16 = arith.constant 0 : index
      %c0_17 = arith.constant 0 : index
      %17 = vector.load %arg6[%c0_16, %c0_17] : memref<128x128xbf16, #tpu.memory_space<vmem>>, vector<128x128xbf16>
      %cst_18 = arith.constant dense<0.000000e+00> : vector<512x128xf32>
      %18 = tpu.matmul %16, %17, %cst_18 {dimension_numbers = #tpu.dot_dimension_numbers<[1], [0], [0], [1], [0, 0, 1, 1], [], []>} : vector<512x128xbf16>, vector<128x128xbf16>, vector<512x128xf32> -> vector<512x128xf32>
      %19 = arith.addf %15, %18 : vector<512x128xf32>
      %c0_19 = arith.constant 0 : index
      %c0_20 = arith.constant 0 : index
      %20 = vector.load %arg7[%c0_19, %c0_20] : memref<1x128xf32, #tpu.memory_space<vmem>>, vector<1x128xf32>
      %21 = vector.broadcast %20 : vector<1x128xf32> to vector<512x128xf32>
      %22 = arith.addf %19, %21 : vector<512x128xf32>
      %23 = arith.negf %22 : vector<512x128xf32>
      %24 = math.exp %23 : vector<512x128xf32>
      %cst_21 = arith.constant 1.000000e+00 : f32
      %25 = vector.broadcast %cst_21 : f32 to vector<512x128xf32>
      %26 = arith.addf %25, %24 : vector<512x128xf32>
      %27 = arith.divf %25, %26 : vector<512x128xf32>
      %28 = arith.truncf %27 : vector<512x128xf32> to vector<512x128xbf16>
      %c0_22 = arith.constant 0 : index
      %c0_23 = arith.constant 0 : index
      %29 = vector.load %arg8[%c0_22, %c0_23] : memref<128x256xbf16, #tpu.memory_space<vmem>>, vector<128x256xbf16>
      %cst_24 = arith.constant dense<0.000000e+00> : vector<512x256xf32>
      %30 = tpu.matmul %28, %29, %cst_24 {dimension_numbers = #tpu.dot_dimension_numbers<[1], [0], [0], [1], [0, 0, 1, 1], [], []>} : vector<512x128xbf16>, vector<128x256xbf16>, vector<512x256xf32> -> vector<512x256xf32>
      %31 = vector.extract_strided_slice %30 {offsets = [0, 0], sizes = [512, 128], strides = [1, 1]} : vector<512x256xf32> to vector<512x128xf32>
      %32 = arith.truncf %31 : vector<512x128xf32> to vector<512x128xbf16>
      %c0_25 = arith.constant 0 : index
      %c0_26 = arith.constant 0 : index
      %33 = vector.load %arg10[%c0_25, %c0_26] : memref<512x128xbf16, #tpu.memory_space<vmem>>, vector<512x128xbf16>
      tpu.vector_store %arg10[%c0_25, %c0_26], %32 {strides = array<i32>} : memref<512x128xbf16, #tpu.memory_space<vmem>>, vector<512x128xbf16>,
      %34 = vector.extract_strided_slice %30 {offsets = [0, 128], sizes = [512, 128], strides = [1, 1]} : vector<512x256xf32> to vector<512x128xf32>
      %c0_27 = arith.constant 0 : index
      %c0_28 = arith.constant 0 : index
      %35 = vector.load %arg9[%c0_27, %c0_28] : memref<1x128xf32, #tpu.memory_space<vmem>>, vector<1x128xf32>
      %36 = vector.broadcast %35 : vector<1x128xf32> to vector<512x128xf32>
      %37 = arith.addf %34, %36 : vector<512x128xf32>
      %38 = arith.truncf %37 : vector<512x128xf32> to vector<512x128xbf16>
      %c0_29 = arith.constant 0 : index
      %c0_30 = arith.constant 0 : index
      %39 = vector.load %arg11[%c0_29, %c0_30] : memref<512x128xbf16, #tpu.memory_space<vmem>>, vector<512x128xbf16>
      tpu.vector_store %arg11[%c0_29, %c0_30], %38 {strides = array<i32>} : memref<512x128xbf16, #tpu.memory_space<vmem>>, vector<512x128xbf16>,
    } else {
    }
    return
  }
  func.func @transform_0(%arg0: i32, %arg1: i32) -> (i32, i32) {
    %c0_i32 = arith.constant 0 : i32
    return %arg0, %arg1 : i32, i32
  }
  func.func @transform_1(%arg0: i32, %arg1: i32) -> (i32, i32) {
    %c0_i32 = arith.constant 0 : i32
    %c0_i32_0 = arith.constant 0 : i32
    return %arg1, %c0_i32 : i32, i32
  }
  func.func @transform_2(%arg0: i32, %arg1: i32) -> (i32, i32) {
    %c0_i32 = arith.constant 0 : i32
    %c0_i32_0 = arith.constant 0 : i32
    return %arg0, %c0_i32 : i32, i32
  }
  func.func @transform_3(%arg0: i32, %arg1: i32) -> (i32, i32) {
    %c0_i32 = arith.constant 0 : i32
    %c0_i32_0 = arith.constant 0 : i32
    %c0_i32_1 = arith.constant 0 : i32
    return %c0_i32, %c0_i32_0 : i32, i32
  }
  func.func @transform_4(%arg0: i32, %arg1: i32) -> (i32, i32) {
    %c0_i32 = arith.constant 0 : i32
    %c0_i32_0 = arith.constant 0 : i32
    %c0_i32_1 = arith.constant 0 : i32
    return %c0_i32, %c0_i32_0 : i32, i32
  }
  func.func @transform_5(%arg0: i32, %arg1: i32) -> (i32, i32) {
    %c0_i32 = arith.constant 0 : i32
    %c0_i32_0 = arith.constant 0 : i32
    %c0_i32_1 = arith.constant 0 : i32
    return %c0_i32, %c0_i32_0 : i32, i32
  }
  func.func @transform_6(%arg0: i32, %arg1: i32) -> (i32, i32) {
    %c0_i32 = arith.constant 0 : i32
    %c0_i32_0 = arith.constant 0 : i32
    %c0_i32_1 = arith.constant 0 : i32
    return %c0_i32, %c0_i32_0 : i32, i32
  }
  func.func @transform_7(%arg0: i32, %arg1: i32) -> (i32, i32) {
    %c0_i32 = arith.constant 0 : i32
    %c0_i32_0 = arith.constant 0 : i32
    %c0_i32_1 = arith.constant 0 : i32
    return %c0_i32, %c0_i32_0 : i32, i32
  }
  func.func @transform_8(%arg0: i32, %arg1: i32) -> (i32, i32) {
    %c0_i32 = arith.constant 0 : i32
    %c0_i32_0 = arith.constant 0 : i32
    return %arg0, %c0_i32 : i32, i32
  }
  func.func @transform_9(%arg0: i32, %arg1: i32) -> (i32, i32) {
    %c0_i32 = arith.constant 0 : i32
    %c0_i32_0 = arith.constant 0 : i32
    return %arg0, %c0_i32 : i32, i32
  }
}

</mosaic_0001>

<llo_original>
// kernel: tpu_custom_call.1
$region0: #{tpu_custom_call.1}
  #allocation0 [shape = 'u32[]', space=smem, size = 0x4, offset = 0x4, fixed_abs, tag = 'smem constant byte address 0x4 - core index']
  #allocation1 [shape = 'u32[144,128]{1,0:T(1,128)}', space=vmem, size = 0x12000, scoped, tag = 'internal scratch']
  #allocation2 [shape = 'f32[512,128]{1,0:T(8,128)}', space=vmem, size = 0x40000, scoped, tag = 'scratch operand']
  %s0 = inlined_call_operand.hbm [shape: bf16[1024,1024], index: 0, kind: input, shape index: {}]
  %s1 = inlined_call_operand.hbm [shape: bf16[1024,128], index: 1, kind: input, shape index: {}]
  %s2 = inlined_call_operand.hbm [shape: bf16[1024,128], index: 2, kind: input, shape index: {}]
  %s3 = inlined_call_operand.hbm [shape: bf16[128,128], index: 3, kind: input, shape index: {}]
  %s4 = inlined_call_operand.hbm [shape: bf16[128,128], index: 4, kind: input, shape index: {}]
  %s5 = inlined_call_operand.hbm [shape: f32[1,128], index: 5, kind: input, shape index: {}]
  %s6 = inlined_call_operand.hbm [shape: bf16[128,256], index: 6, kind: input, shape index: {}]
  %s7 = inlined_call_operand.hbm [shape: f32[1,128], index: 7, kind: input, shape index: {}]
  %s8 = inlined_call_operand.hbm [shape: bf16[1024,128], index: 8, kind: output, shape index: {0}]
  %s9 = inlined_call_operand.hbm [shape: bf16[1024,128], index: 9, kind: output, shape index: {1}]
  %10 = xla_tuple %s8, %s9
  %s11 = sld [smem:[#allocation0]]
  $region113: #{tpu_custom_call.1} parent=0
    _
  %s13 = ssub.s32 1, %s11
  %s14 = scalar_select 0, %s13, %s11
  $region1: #{tpu_custom_call.1} parent=0
    #allocation3 [shape = 'u8[1048576]{0}', space=vmem, size = 0x100000, scoped, tag = 'input window, operand 0']
    #allocation4 [shape = 's32[2]{0}', space=sflag, size = 0x8, scoped, tag = 'scoped memory for tpu_custom_call.1']
    #allocation5 [shape = 's32[2]{0}', space=sflag, size = 0x8, scoped, tag = 'scoped memory for tpu_custom_call.1']
    #allocation6 [shape = 'u8[262144]{0}', space=vmem, size = 0x40000, scoped, tag = 'input window, operand 1']
    #allocation7 [shape = 's32[2]{0}', space=sflag, size = 0x8, scoped, tag = 'scoped memory for tpu_custom_call.1']
    #allocation8 [shape = 'u8[262144]{0}', space=vmem, size = 0x40000, scoped, tag = 'input window, operand 2']
    #allocation9 [shape = 'u8[32768]{0}', space=vmem, size = 0x8000, scoped, tag = 'input window, operand 3, single buffered']
    #allocation10 [shape = 's32[1]{0}', space=sflag, size = 0x4, scoped, tag = 'scoped memory for tpu_custom_call.1']
    #allocation11 [shape = 'u8[32768]{0}', space=vmem, size = 0x8000, scoped, tag = 'input window, operand 4, single buffered']
    #allocation12 [shape = 'u8[512]{0}', space=vmem, size = 0x400, scoped, tag = 'input window, operand 5, single buffered']
    #allocation13 [shape = 's32[1]{0}', space=sflag, size = 0x4, scoped, tag = 'scoped memory for tpu_custom_call.1']
    #allocation14 [shape = 'u8[65536]{0}', space=vmem, size = 0x10000, scoped, tag = 'input window, operand 6, single buffered']
    #allocation15 [shape = 'u8[512]{0}', space=vmem, size = 0x400, scoped, tag = 'input window, operand 7, single buffered']
    #allocation16 [shape = 's32[1]{0}', space=sflag, size = 0x4, scoped, tag = 'scoped memory for tpu_custom_call.1']
    #allocation17 [shape = 'u8[262144]{0}', space=vmem, size = 0x40000, scoped, tag = 'output window, operand 0']
    #allocation18 [shape = 'u8[262144]{0}', space=vmem, size = 0x40000, scoped, tag = 'output window, operand 1']
    #allocation19 [shape = 's32[2]{0}', space=sflag, size = 0x8, scoped, tag = 'scoped memory for tpu_custom_call.1']
    %15 = vsyncpa [#allocation4], 0
    %s16 = scalar_lea.sflag [#allocation4], 1
    %17 = vsyncpa %s16, 0
    %18 = vsyncpa [#allocation7], 0
    %s19 = scalar_lea.sflag [#allocation7], 1
    %20 = vsyncpa %s19, 0
    %21 = vsyncpa [#allocation10], 0
    %22 = vsyncpa [#allocation13], 0
    %23 = vsyncpa [#allocation16], 0
    %24 = vsyncpa [#allocation5], 0
    %s25 = scalar_lea.sflag [#allocation5], 1
    %26 = vsyncpa %s25, 0
    %27 = vsyncpa [#allocation19], 0
    %s28 = scalar_lea.sflag [#allocation19], 1
    %29 = vsyncpa %s28, 0
    loop: start=0, step=1, limit=6
    $region2: #{tpu_custom_call.1} parent=1 // loop_pre_header
      _
    $region3: #{tpu_custom_call.1} parent=1 // loop_header
      %s31 = sphi 0, %s35
      %p32 = scmp.ge.s32.totalorder %s31, 6
      %s38 = sphi 0, %s50
      %s39 = sphi 0, %s46
      %s40 = sphi 0, %s38
      %s41 = sphi 0, %s39
      %s42 = sphi 0, %s40
      %s43 = sphi 0, %s41
      %s55 = sphi 0, %s57
      %s58 = sphi 0, %s55
      %s59 = sphi 0, %s58
      %s75 = sphi 0, %s59
      %s81 = sphi 0, %s83
      %s84 = sphi 0, %s81
      %s85 = sphi 0, %s84
      %s101 = sphi 0, %s85
      %s107 = sphi 0, %s109
      %s110 = sphi 0, %s107
      %s111 = sphi 0, %s110
      %s127 = sphi 0, %s111
      %s131 = sphi 0, %s131
      %s133 = sphi 0, %s131
      %s134 = sphi 0, %s133
      %s148 = sphi 0, %s134
      %s152 = sphi 0, %s152
      %s154 = sphi 0, %s152
      %s155 = sphi 0, %s154
      %s169 = sphi 0, %s155
      %s173 = sphi 0, %s173
      %s175 = sphi 0, %s173
      %s176 = sphi 0, %s175
      %s190 = sphi 0, %s176
      %s194 = sphi 0, %s194
      %s196 = sphi 0, %s194
      %s197 = sphi 0, %s196
      %s211 = sphi 0, %s197
      %s215 = sphi 0, %s215
      %s217 = sphi 0, %s215
      %s218 = sphi 0, %s217
      %s232 = sphi 0, %s218
      %s238 = sphi 0, %s240
      %s241 = sphi 0, %s238
      %s242 = sphi 0, %s241
      %s258 = sphi 0, %s242
      %s264 = sphi 0, %s266
      %s267 = sphi 0, %s264
      %s268 = sphi 0, %s267
      %s284 = sphi 0, %s268
    $region4: #{tpu_custom_call.1} parent=1 // loop_header_branch
      %34 = sbr.rel (%p32) target = $region8
    $region5: #{tpu_custom_call.1} parent=1 // loop_body
      %s36 = ssub.s32 %s31, 1
      %s37 = ssub.s32 %s31, 2
      %s44 = sadd.s32 1, %s39
      %p45 = scmp.ge.s32.totalorder %s44, 2
      %s46 = scalar_select %p45, 0, %s44
      %s47 = sadd.s32 1, %s38
      %s48 = scalar_select %p45, %s47, %s38
      %p49 = scmp.ge.s32.totalorder %s48, 2
      %s50 = scalar_select %p49, 0, %s48
      %s51 = ssub.s32 %s38, %s50
      %s52 = ssub.s32 %s39, %s46
      %s53 = sor.u32 %s51, %s52
      %p54 = scmp.eq.s32.totalorder %s53, 0
      %s56 = sadd.s32 %s55, 1
      %s57 = scalar_select %p54, %s55, %s56
      %p60 = pneg %p54
      %p61 = scmp.eq.s32.totalorder %s31, 3
      %p62 = por %p60, %p61
      %p63 = scmp.ne.s32.totalorder %s55, %s58
      %p64 = scmp.eq.s32.totalorder %s31, 0
      %p65 = por %p63, %p64
      %p66 = scmp.ne.s32.totalorder %s55, %s58
      %p67 = scmp.eq.s32.totalorder %s36, 3
      %p68 = por %p66, %p67
      %p69 = scmp.ne.s32.totalorder %s58, %s59
      %p70 = scmp.eq.s32.totalorder %s36, 0
      %p71 = por %p69, %p70
      %p72 = scmp.ne.s32.totalorder %s58, %s59
      %p73 = scmp.eq.s32.totalorder %s37, 3
      %p74 = por %p72, %p73
      %p76 = scmp.ne.s32.totalorder %s59, %s75
      %p77 = scmp.eq.s32.totalorder %s37, 0
      %p78 = por %p76, %p77
      %s79 = ssub.s32 %s39, %s46
      %p80 = scmp.eq.s32.totalorder %s79, 0
      %s82 = sadd.s32 %s81, 1
      %s83 = scalar_select %p80, %s81, %s82
      %p86 = pneg %p80
      %p87 = scmp.eq.s32.totalorder %s31, 3
      %p88 = por %p86, %p87
      %p89 = scmp.ne.s32.totalorder %s81, %s84
      %p90 = scmp.eq.s32.totalorder %s31, 0
      %p91 = por %p89, %p90
      %p92 = scmp.ne.s32.totalorder %s81, %s84
      %p93 = scmp.eq.s32.totalorder %s36, 3
      %p94 = por %p92, %p93
      %p95 = scmp.ne.s32.totalorder %s84, %s85
      %p96 = scmp.eq.s32.totalorder %s36, 0
      %p97 = por %p95, %p96
      %p98 = scmp.ne.s32.totalorder %s84, %s85
      %p99 = scmp.eq.s32.totalorder %s37, 3
      %p100 = por %p98, %p99
      %p102 = scmp.ne.s32.totalorder %s85, %s101
      %p103 = scmp.eq.s32.totalorder %s37, 0
      %p104 = por %p102, %p103
      %s105 = ssub.s32 %s38, %s50
      %p106 = scmp.eq.s32.totalorder %s105, 0
      %s108 = sadd.s32 %s107, 1
      %s109 = scalar_select %p106, %s107, %s108
      %p112 = pneg %p106
      %p113 = scmp.eq.s32.totalorder %s31, 3
      %p114 = por %p112, %p113
      %p115 = scmp.ne.s32.totalorder %s107, %s110
      %p116 = scmp.eq.s32.totalorder %s31, 0
      %p117 = por %p115, %p116
      %p118 = scmp.ne.s32.totalorder %s107, %s110
      %p119 = scmp.eq.s32.totalorder %s36, 3
      %p120 = por %p118, %p119
      %p121 = scmp.ne.s32.totalorder %s110, %s111
      %p122 = scmp.eq.s32.totalorder %s36, 0
      %p123 = por %p121, %p122
      %p124 = scmp.ne.s32.totalorder %s110, %s111
      %p125 = scmp.eq.s32.totalorder %s37, 3
      %p126 = por %p124, %p125
      %p128 = scmp.ne.s32.totalorder %s111, %s127
      %p129 = scmp.eq.s32.totalorder %s37, 0
      %p130 = por %p128, %p129
      %s132 = sadd.s32 %s131, 1
      %p135 = scmp.eq.s32.totalorder %s31, 3
      %p136 = scmp.ne.s32.totalorder %s131, %s133
      %p137 = scmp.eq.s32.totalorder %s31, 0
      %p138 = por %p136, %p137
      %p139 = scmp.ne.s32.totalorder %s131, %s133
      %p140 = scmp.eq.s32.totalorder %s36, 3
      %p141 = por %p139, %p140
      %p142 = scmp.ne.s32.totalorder %s133, %s134
      %p143 = scmp.eq.s32.totalorder %s36, 0
      %p144 = por %p142, %p143
      %p145 = scmp.ne.s32.totalorder %s133, %s134
      %p146 = scmp.eq.s32.totalorder %s37, 3
      %p147 = por %p145, %p146
      %p149 = scmp.ne.s32.totalorder %s134, %s148
      %p150 = scmp.eq.s32.totalorder %s37, 0
      %p151 = por %p149, %p150
      %s153 = sadd.s32 %s152, 1
      %p156 = scmp.eq.s32.totalorder %s31, 3
      %p157 = scmp.ne.s32.totalorder %s152, %s154
      %p158 = scmp.eq.s32.totalorder %s31, 0
      %p159 = por %p157, %p158
      %p160 = scmp.ne.s32.totalorder %s152, %s154
      %p161 = scmp.eq.s32.totalorder %s36, 3
      %p162 = por %p160, %p161
      %p163 = scmp.ne.s32.totalorder %s154, %s155
      %p164 = scmp.eq.s32.totalorder %s36, 0
      %p165 = por %p163, %p164
      %p166 = scmp.ne.s32.totalorder %s154, %s155
      %p167 = scmp.eq.s32.totalorder %s37, 3
      %p168 = por %p166, %p167
      %p170 = scmp.ne.s32.totalorder %s155, %s169
      %p171 = scmp.eq.s32.totalorder %s37, 0
      %p172 = por %p170, %p171
      %s174 = sadd.s32 %s173, 1
      %p177 = scmp.eq.s32.totalorder %s31, 3
      %p178 = scmp.ne.s32.totalorder %s173, %s175
      %p179 = scmp.eq.s32.totalorder %s31, 0
      %p180 = por %p178, %p179
      %p181 = scmp.ne.s32.totalorder %s173, %s175
      %p182 = scmp.eq.s32.totalorder %s36, 3
      %p183 = por %p181, %p182
      %p184 = scmp.ne.s32.totalorder %s175, %s176
      %p185 = scmp.eq.s32.totalorder %s36, 0
      %p186 = por %p184, %p185
      %p187 = scmp.ne.s32.totalorder %s175, %s176
      %p188 = scmp.eq.s32.totalorder %s37, 3
      %p189 = por %p187, %p188
      %p191 = scmp.ne.s32.totalorder %s176, %s190
      %p192 = scmp.eq.s32.totalorder %s37, 0
      %p193 = por %p191, %p192
      %s195 = sadd.s32 %s194, 1
      %p198 = scmp.eq.s32.totalorder %s31, 3
      %p199 = scmp.ne.s32.totalorder %s194, %s196
      %p200 = scmp.eq.s32.totalorder %s31, 0
      %p201 = por %p199, %p200
      %p202 = scmp.ne.s32.totalorder %s194, %s196
      %p203 = scmp.eq.s32.totalorder %s36, 3
      %p204 = por %p202, %p203
      %p205 = scmp.ne.s32.totalorder %s196, %s197
      %p206 = scmp.eq.s32.totalorder %s36, 0
      %p207 = por %p205, %p206
      %p208 = scmp.ne.s32.totalorder %s196, %s197
      %p209 = scmp.eq.s32.totalorder %s37, 3
      %p210 = por %p208, %p209
      %p212 = scmp.ne.s32.totalorder %s197, %s211
      %p213 = scmp.eq.s32.totalorder %s37, 0
      %p214 = por %p212, %p213
      %s216 = sadd.s32 %s215, 1
      %p219 = scmp.eq.s32.totalorder %s31, 3
      %p220 = scmp.ne.s32.totalorder %s215, %s217
      %p221 = scmp.eq.s32.totalorder %s31, 0
      %p222 = por %p220, %p221
      %p223 = scmp.ne.s32.totalorder %s215, %s217
      %p224 = scmp.eq.s32.totalorder %s36, 3
      %p225 = por %p223, %p224
      %p226 = scmp.ne.s32.totalorder %s217, %s218
      %p227 = scmp.eq.s32.totalorder %s36, 0
      %p228 = por %p226, %p227
      %p229 = scmp.ne.s32.totalorder %s217, %s218
      %p230 = scmp.eq.s32.totalorder %s37, 3
      %p231 = por %p229, %p230
      %p233 = scmp.ne.s32.totalorder %s218, %s232
      %p234 = scmp.eq.s32.totalorder %s37, 0
      %p235 = por %p233, %p234
      %s236 = ssub.s32 %s38, %s50
      %p237 = scmp.eq.s32.totalorder %s236, 0
      %s239 = sadd.s32 %s238, 1
      %s240 = scalar_select %p237, %s238, %s239
      %p243 = pneg %p237
      %p244 = scmp.eq.s32.totalorder %s31, 3
      %p245 = por %p243, %p244
      %p246 = scmp.ne.s32.totalorder %s238, %s241
      %p247 = scmp.eq.s32.totalorder %s31, 0
      %p248 = por %p246, %p247
      %p249 = scmp.ne.s32.totalorder %s238, %s241
      %p250 = scmp.eq.s32.totalorder %s36, 3
      %p251 = por %p249, %p250
      %p252 = scmp.ne.s32.totalorder %s241, %s242
      %p253 = scmp.eq.s32.totalorder %s36, 0
      %p254 = por %p252, %p253
      %p255 = scmp.ne.s32.totalorder %s241, %s242
      %p256 = scmp.eq.s32.totalorder %s37, 3
      %p257 = por %p255, %p256
      %p259 = scmp.ne.s32.totalorder %s242, %s258
      %p260 = scmp.eq.s32.totalorder %s37, 0
      %p261 = por %p259, %p260
      %s262 = ssub.s32 %s38, %s50
      %p263 = scmp.eq.s32.totalorder %s262, 0
      %s265 = sadd.s32 %s264, 1
      %s266 = scalar_select %p263, %s264, %s265
      %p269 = pneg %p263
      %p270 = scmp.eq.s32.totalorder %s31, 3
      %p271 = por %p269, %p270
      %p272 = scmp.ne.s32.totalorder %s264, %s267
      %p273 = scmp.eq.s32.totalorder %s31, 0
      %p274 = por %p272, %p273
      %p275 = scmp.ne.s32.totalorder %s264, %s267
      %p276 = scmp.eq.s32.totalorder %s36, 3
      %p277 = por %p275, %p276
      %p278 = scmp.ne.s32.totalorder %s267, %s268
      %p279 = scmp.eq.s32.totalorder %s36, 0
      %p280 = por %p278, %p279
      %p281 = scmp.ne.s32.totalorder %s267, %s268
      %p282 = scmp.eq.s32.totalorder %s37, 3
      %p283 = por %p281, %p282
      %p285 = scmp.ne.s32.totalorder %s268, %s284
      %p286 = scmp.eq.s32.totalorder %s37, 0
      %p287 = por %p285, %p286
      %p288 = scmp.le.s32.totalorder 1, %s31
      %p289 = scmp.lt.s32.totalorder %s31, 5
      %p290 = pnand %p288, %p289
      %p291 = pneg %p290
      // Predicated region
      $region9: #{tpu_custom_call.1} parent=5 // pred_check
        _
      $region10: #{tpu_custom_call.1} parent=5 // pred_check_branch
        %293 = sbr.rel (%p290) target = $region12
      $region11: #{tpu_custom_call.1} parent=5 // pred_region
        %s294 = ssub.s32 %s31, 1
        // Predicated region
        $region13: #{tpu_custom_call.1} parent=11 // pred_check
          %p295 = pneg %p144
        $region14: #{tpu_custom_call.1} parent=11 // pred_check_branch
          %297 = sbr.rel (%p295) target = $region16
        $region15: #{tpu_custom_call.1} parent=11 // pred_region
          %s299 = ssub.s32 1024, 1024
          %300 = vsyncadd [#allocation10], %s299
          %s301 = sshll.u32 [#allocation9], 4
          %s302 = int_to_ptr.vmem [resolvable:$true] %s301
          %307 = dma.hbm_to_vmem [thread:$0]  %s3, 1024, %s302, [#allocation10], 64, 64, 4
        $region16: #{tpu_custom_call.1} parent=11 // pred_fallthru
          _
        // Predicated region
        $region17: #{tpu_custom_call.1} parent=11 // pred_check
          %p308 = pneg %p165
        $region18: #{tpu_custom_call.1} parent=11 // pred_check_branch
          %310 = sbr.rel (%p308) target = $region20
        $region19: #{tpu_custom_call.1} parent=11 // pred_region
          %s312 = ssub.s32 1024, 1024
          %313 = vsyncadd [#allocation10], %s312
          %s314 = sshll.u32 [#allocation11], 4
          %s315 = int_to_ptr.vmem [resolvable:$true] %s314
          %320 = dma.hbm_to_vmem [thread:$0]  %s4, 1024, %s315, [#allocation10], 64, 64, 4
        $region20: #{tpu_custom_call.1} parent=11 // pred_fallthru
          _
        // Predicated region
        $region21: #{tpu_custom_call.1} parent=11 // pred_check
          %p321 = pneg %p186
        $region22: #{tpu_custom_call.1} parent=11 // pred_check_branch
          %323 = sbr.rel (%p321) target = $region24
        $region23: #{tpu_custom_call.1} parent=11 // pred_region
          %s325 = ssub.s32 16, 16
          %326 = vsyncadd [#allocation13], %s325
          %s328 = sshll.u32 [#allocation12], 4
          %s329 = int_to_ptr.vmem [resolvable:$true] %s328
          %331 = dma.hbm_to_vmem [thread:$0]  %s5, 16, %s329, [#allocation13]
        $region24: #{tpu_custom_call.1} parent=11 // pred_fallthru
          _
        // Predicated region
        $region25: #{tpu_custom_call.1} parent=11 // pred_check
          %p332 = pneg %p207
        $region26: #{tpu_custom_call.1} parent=11 // pred_check_branch
          %334 = sbr.rel (%p332) target = $region28
        $region27: #{tpu_custom_call.1} parent=11 // pred_region
          %s336 = ssub.s32 2048, 2048
          %337 = vsyncadd [#allocation13], %s336
          %s338 = sshll.u32 [#allocation14], 4
          %s339 = int_to_ptr.vmem [resolvable:$true] %s338
          %344 = dma.hbm_to_vmem [thread:$0]  %s6, 2048, %s339, [#allocation13], 128, 128, 8
        $region28: #{tpu_custom_call.1} parent=11 // pred_fallthru
          _
        // Predicated region
        $region29: #{tpu_custom_call.1} parent=11 // pred_check
          %p345 = pneg %p228
        $region30: #{tpu_custom_call.1} parent=11 // pred_check_branch
          %347 = sbr.rel (%p345) target = $region32
        $region31: #{tpu_custom_call.1} parent=11 // pred_region
          %s349 = ssub.s32 16, 16
          %350 = vsyncadd [#allocation16], %s349
          %s352 = sshll.u32 [#allocation15], 4
          %s353 = int_to_ptr.vmem [resolvable:$true] %s352
          %355 = dma.hbm_to_vmem [thread:$0]  %s7, 16, %s353, [#allocation16]
        $region32: #{tpu_custom_call.1} parent=11 // pred_fallthru
          _
      $region12: #{tpu_custom_call.1} parent=5 // pred_fallthru
        _
      %p356 = scmp.lt.s32.totalorder %s31, 4
      // Predicated region
      $region33: #{tpu_custom_call.1} parent=5 // pred_check
        %p357 = pneg %p356
      $region34: #{tpu_custom_call.1} parent=5 // pred_check_branch
        %359 = sbr.rel (%p357) target = $region36
      $region35: #{tpu_custom_call.1} parent=5 // pred_region
        // Predicated region
        $region37: #{tpu_custom_call.1} parent=35 // pred_check
          %p360 = pneg %p65
        $region38: #{tpu_custom_call.1} parent=35 // pred_check_branch
          %362 = sbr.rel (%p360) target = $region40
        $region39: #{tpu_custom_call.1} parent=35 // pred_region
          %s363 = sand.u32 %s55, 1
          %s364 = scalar_lea.sflag [#allocation4], %s363
          %s365 = sand.u32 %s55, 1
          %s366 = smul.addr %s365, 1024
          %s367 = scalar_lea.vmem [#allocation3], %s366
          %s368 = smul.u32 64, %s38
          %s369 = smul.u32 4, %s39
          %s371 = ssub.s32 16384, 16384
          %372 = vsyncadd %s364, %s371
          %s373 = smul.addr %s368, 8
          %s374 = sadd.s32 %s369, %s373
          %s375 = smul.addr %s374, 64
          %s376 = scalar_lea.hbm %s0, %s375
          %s377 = sshll.u32 %s367, 4
          %s378 = int_to_ptr.vmem [resolvable:$true] %s377
          %383 = dma.hbm_to_vmem [thread:$0]  %s376, 16384, %s378, %s364, 512, 256, 16
        $region40: #{tpu_custom_call.1} parent=35 // pred_fallthru
          _
        // Predicated region
        $region41: #{tpu_custom_call.1} parent=35 // pred_check
          %p384 = pneg %p91
        $region42: #{tpu_custom_call.1} parent=35 // pred_check_branch
          %386 = sbr.rel (%p384) target = $region44
        $region43: #{tpu_custom_call.1} parent=35 // pred_region
          %s387 = sand.u32 %s31, 1
          %s388 = scalar_lea.sflag [#allocation7], %s387
          %s389 = sand.u32 %s81, 1
          %s390 = smul.addr %s389, 256
          %s391 = scalar_lea.vmem [#allocation6], %s390
          %s392 = smul.u32 64, %s39
          %s394 = ssub.s32 4096, 4096
          %395 = vsyncadd %s388, %s394
          %s396 = smul.addr %s392, 64
          %s397 = scalar_lea.hbm %s1, %s396
          %s398 = sshll.u32 %s391, 4
          %s399 = int_to_ptr.vmem [resolvable:$true] %s398
          %404 = dma.hbm_to_vmem [thread:$0]  %s397, 4096, %s399, %s388, 64, 64, 4
        $region44: #{tpu_custom_call.1} parent=35 // pred_fallthru
          _
        // Predicated region
        $region45: #{tpu_custom_call.1} parent=35 // pred_check
          %p405 = pneg %p117
        $region46: #{tpu_custom_call.1} parent=35 // pred_check_branch
          %407 = sbr.rel (%p405) target = $region48
        $region47: #{tpu_custom_call.1} parent=35 // pred_region
          %s408 = sand.u32 %s31, 1
          %s409 = scalar_lea.sflag [#allocation7], %s408
          %s410 = sand.u32 %s107, 1
          %s411 = smul.addr %s410, 256
          %s412 = scalar_lea.vmem [#allocation8], %s411
          %s413 = smul.u32 64, %s38
          %s415 = ssub.s32 4096, 4096
          %416 = vsyncadd %s409, %s415
          %s417 = smul.addr %s413, 64
          %s418 = scalar_lea.hbm %s2, %s417
          %s419 = sshll.u32 %s412, 4
          %s420 = int_to_ptr.vmem [resolvable:$true] %s419
          %425 = dma.hbm_to_vmem [thread:$0]  %s418, 4096, %s420, %s409, 64, 64, 4
        $region48: #{tpu_custom_call.1} parent=35 // pred_fallthru
          _
      $region36: #{tpu_custom_call.1} parent=5 // pred_fallthru
        _
      %p426 = scmp.le.s32.totalorder 1, %s31
      %p427 = scmp.lt.s32.totalorder %s31, 5
      %p428 = pnand %p426, %p427
      %p429 = pneg %p428
      // Predicated region
      $region49: #{tpu_custom_call.1} parent=5 // pred_check
        _
      $region50: #{tpu_custom_call.1} parent=5 // pred_check_branch
        %431 = sbr.rel (%p428) target = $region52
      $region51: #{tpu_custom_call.1} parent=5 // pred_region
        %s432 = ssub.s32 %s31, 1
        %s433 = sand.u32 %s58, 1
        %s434 = scalar_lea.sflag [#allocation4], %s433
        %s435 = sand.u32 %s58, 1
        %s436 = smul.addr %s435, 1024
        %s437 = scalar_lea.vmem [#allocation3], %s436
        // Predicated region
        $region53: #{tpu_custom_call.1} parent=51 // pred_check
          %p438 = pneg %p71
        $region54: #{tpu_custom_call.1} parent=51 // pred_check_branch
          %440 = sbr.rel (%p438) target = $region56
        $region55: #{tpu_custom_call.1} parent=51 // pred_region
          %441 = dma.done %s434, 16384
        $region56: #{tpu_custom_call.1} parent=51 // pred_fallthru
          _
        %s442 = sand.u32 %s36, 1
        %s443 = scalar_lea.sflag [#allocation7], %s442
        %s444 = sand.u32 %s84, 1
        %s445 = smul.addr %s444, 256
        %s446 = scalar_lea.vmem [#allocation6], %s445
        // Predicated region
        $region57: #{tpu_custom_call.1} parent=51 // pred_check
          %p447 = pneg %p97
        $region58: #{tpu_custom_call.1} parent=51 // pred_check_branch
          %449 = sbr.rel (%p447) target = $region60
        $region59: #{tpu_custom_call.1} parent=51 // pred_region
          %450 = dma.done %s443, 4096
        $region60: #{tpu_custom_call.1} parent=51 // pred_fallthru
          _
        %s451 = sand.u32 %s36, 1
        %s452 = scalar_lea.sflag [#allocation7], %s451
        %s453 = sand.u32 %s110, 1
        %s454 = smul.addr %s453, 256
        %s455 = scalar_lea.vmem [#allocation8], %s454
        // Predicated region
        $region61: #{tpu_custom_call.1} parent=51 // pred_check
          %p456 = pneg %p123
        $region62: #{tpu_custom_call.1} parent=51 // pred_check_branch
          %458 = sbr.rel (%p456) target = $region64
        $region63: #{tpu_custom_call.1} parent=51 // pred_region
          %459 = dma.done %s452, 4096
        $region64: #{tpu_custom_call.1} parent=51 // pred_fallthru
          _
        // Predicated region
        $region65: #{tpu_custom_call.1} parent=51 // pred_check
          %p460 = pneg %p144
        $region66: #{tpu_custom_call.1} parent=51 // pred_check_branch
          %462 = sbr.rel (%p460) target = $region68
        $region67: #{tpu_custom_call.1} parent=51 // pred_region
          %463 = dma.done [#allocation10], 1024
        $region68: #{tpu_custom_call.1} parent=51 // pred_fallthru
          _
        // Predicated region
        $region69: #{tpu_custom_call.1} parent=51 // pred_check
          %p464 = pneg %p165
        $region70: #{tpu_custom_call.1} parent=51 // pred_check_branch
          %466 = sbr.rel (%p464) target = $region72
        $region71: #{tpu_custom_call.1} parent=51 // pred_region
          %467 = dma.done [#allocation10], 1024
        $region72: #{tpu_custom_call.1} parent=51 // pred_fallthru
          _
        // Predicated region
        $region73: #{tpu_custom_call.1} parent=51 // pred_check
          %p468 = pneg %p186
        $region74: #{tpu_custom_call.1} parent=51 // pred_check_branch
          %470 = sbr.rel (%p468) target = $region76
        $region75: #{tpu_custom_call.1} parent=51 // pred_region
          %471 = dma.done [#allocation13], 16
        $region76: #{tpu_custom_call.1} parent=51 // pred_fallthru
          _
        // Predicated region
        $region77: #{tpu_custom_call.1} parent=51 // pred_check
          %p472 = pneg %p207
        $region78: #{tpu_custom_call.1} parent=51 // pred_check_branch
          %474 = sbr.rel (%p472) target = $region80
        $region79: #{tpu_custom_call.1} parent=51 // pred_region
          %475 = dma.done [#allocation13], 2048
        $region80: #{tpu_custom_call.1} parent=51 // pred_fallthru
          _
        // Predicated region
        $region81: #{tpu_custom_call.1} parent=51 // pred_check
          %p476 = pneg %p228
        $region82: #{tpu_custom_call.1} parent=51 // pred_check_branch
          %478 = sbr.rel (%p476) target = $region84
        $region83: #{tpu_custom_call.1} parent=51 // pred_region
          %479 = dma.done [#allocation16], 16
        $region84: #{tpu_custom_call.1} parent=51 // pred_fallthru
          _
        %s480 = sand.u32 %s58, 1
        %s481 = scalar_lea.sflag [#allocation4], %s480
        %s482 = sand.u32 %s58, 1
        %s483 = smul.addr %s482, 1024
        %s484 = scalar_lea.vmem [#allocation3], %s483
        %p485 = pneg %p71
        %p486 = pneg %p68
        %s487 = sand.u32 %s36, 1
        %s488 = scalar_lea.sflag [#allocation7], %s487
        %s489 = sand.u32 %s84, 1
        %s490 = smul.addr %s489, 256
        %s491 = scalar_lea.vmem [#allocation6], %s490
        %p492 = pneg %p97
        %p493 = pneg %p94
        %s494 = sand.u32 %s36, 1
        %s495 = scalar_lea.sflag [#allocation7], %s494
        %s496 = sand.u32 %s110, 1
        %s497 = smul.addr %s496, 256
        %s498 = scalar_lea.vmem [#allocation8], %s497
        %p499 = pneg %p123
        %p500 = pneg %p120
        %p501 = pneg %p144
        %p502 = pneg %p141
        %p503 = pneg %p165
        %p504 = pneg %p162
        %p505 = pneg %p186
        %p506 = pneg %p183
        %p507 = pneg %p207
        %p508 = pneg %p204
        %p509 = pneg %p228
        %p510 = pneg %p225
        %p511 = pneg %p254
        %p512 = pneg %p251
        %s513 = sand.u32 %s241, 1
        %s514 = scalar_lea.sflag [#allocation5], %s513
        %s515 = sand.u32 %s241, 1
        %s516 = smul.addr %s515, 256
        %s517 = scalar_lea.vmem [#allocation17], %s516
        %p518 = pneg %p280
        %p519 = pneg %p277
        %s520 = sand.u32 %s267, 1
        %s521 = scalar_lea.sflag [#allocation19], %s520
        %s522 = sand.u32 %s267, 1
        %s523 = smul.addr %s522, 256
        %s524 = scalar_lea.vmem [#allocation18], %s523
        %s525 = smul.u32 64, %s40
        %s526 = smul.u32 4, %s41
        %s527 = smul.u32 64, %s41
        %s528 = smul.u32 64, %s40
        %s529 = smul.u32 64, %s40
        %s530 = smul.u32 64, %s40
        %p532 = scmp.eq.s32.totalorder %s41, 0
        // Predicated region
        $region85: #{tpu_custom_call.1} parent=51 // pred_check
          %p533 = pneg %p532
        $region86: #{tpu_custom_call.1} parent=51 // pred_check_branch
          %535 = sbr.rel (%p533) target = $region88
        $region87: #{tpu_custom_call.1} parent=51 // pred_region
          %536 = vst [vmem:[#allocation2] sm:$0xff] 0.0
          %537 = vst [vmem:[#allocation2 + $0x8] sm:$0xff] 0.0
          %538 = vst [vmem:[#allocation2 + $0x10] sm:$0xff] 0.0
          %539 = vst [vmem:[#allocation2 + $0x18] sm:$0xff] 0.0
          %540 = vst [vmem:[#allocation2 + $0x20] sm:$0xff] 0.0
          %541 = vst [vmem:[#allocation2 + $0x28] sm:$0xff] 0.0
          %542 = vst [vmem:[#allocation2 + $0x30] sm:$0xff] 0.0
          %543 = vst [vmem:[#allocation2 + $0x38] sm:$0xff] 0.0
          %544 = vst [vmem:[#allocation2 + $0x40] sm:$0xff] 0.0
          %545 = vst [vmem:[#allocation2 + $0x48] sm:$0xff] 0.0
          %546 = vst [vmem:[#allocation2 + $0x50] sm:$0xff] 0.0
          %547 = vst [vmem:[#allocation2 + $0x58] sm:$0xff] 0.0
          %548 = vst [vmem:[#allocation2 + $0x60] sm:$0xff] 0.0
          %549 = vst [vmem:[#allocation2 + $0x68] sm:$0xff] 0.0
          %550 = vst [vmem:[#allocation2 + $0x70] sm:$0xff] 0.0
          %551 = vst [vmem:[#allocation2 + $0x78] sm:$0xff] 0.0
          %552 = vst [vmem:[#allocation2 + $0x80] sm:$0xff] 0.0
          %553 = vst [vmem:[#allocation2 + $0x88] sm:$0xff] 0.0
          %554 = vst [vmem:[#allocation2 + $0x90] sm:$0xff] 0.0
          %555 = vst [vmem:[#allocation2 + $0x98] sm:$0xff] 0.0
          %556 = vst [vmem:[#allocation2 + $0xa0] sm:$0xff] 0.0
          %557 = vst [vmem:[#allocation2 + $0xa8] sm:$0xff] 0.0
          %558 = vst [vmem:[#allocation2 + $0xb0] sm:$0xff] 0.0
          %559 = vst [vmem:[#allocation2 + $0xb8] sm:$0xff] 0.0
          %560 = vst [vmem:[#allocation2 + $0xc0] sm:$0xff] 0.0
          %561 = vst [vmem:[#allocation2 + $0xc8] sm:$0xff] 0.0
          %562 = vst [vmem:[#allocation2 + $0xd0] sm:$0xff] 0.0
          %563 = vst [vmem:[#allocation2 + $0xd8] sm:$0xff] 0.0
          %564 = vst [vmem:[#allocation2 + $0xe0] sm:$0xff] 0.0
          %565 = vst [vmem:[#allocation2 + $0xe8] sm:$0xff] 0.0
          %566 = vst [vmem:[#allocation2 + $0xf0] sm:$0xff] 0.0
          %567 = vst [vmem:[#allocation2 + $0xf8] sm:$0xff] 0.0
          %568 = vst [vmem:[#allocation2 + $0x100] sm:$0xff] 0.0
          %569 = vst [vmem:[#allocation2 + $0x108] sm:$0xff] 0.0
          %570 = vst [vmem:[#allocation2 + $0x110] sm:$0xff] 0.0
          %571 = vst [vmem:[#allocation2 + $0x118] sm:$0xff] 0.0
          %572 = vst [vmem:[#allocation2 + $0x120] sm:$0xff] 0.0
          %573 = vst [vmem:[#allocation2 + $0x128] sm:$0xff] 0.0
          %574 = vst [vmem:[#allocation2 + $0x130] sm:$0xff] 0.0
          %575 = vst [vmem:[#allocation2 + $0x138] sm:$0xff] 0.0
          %576 = vst [vmem:[#allocation2 + $0x140] sm:$0xff] 0.0
          %577 = vst [vmem:[#allocation2 + $0x148] sm:$0xff] 0.0
          %578 = vst [vmem:[#allocation2 + $0x150] sm:$0xff] 0.0
          %579 = vst [vmem:[#allocation2 + $0x158] sm:$0xff] 0.0
          %580 = vst [vmem:[#allocation2 + $0x160] sm:$0xff] 0.0
          %581 = vst [vmem:[#allocation2 + $0x168] sm:$0xff] 0.0
          %582 = vst [vmem:[#allocation2 + $0x170] sm:$0xff] 0.0
          %583 = vst [vmem:[#allocation2 + $0x178] sm:$0xff] 0.0
          %584 = vst [vmem:[#allocation2 + $0x180] sm:$0xff] 0.0
          %585 = vst [vmem:[#allocation2 + $0x188] sm:$0xff] 0.0
          %586 = vst [vmem:[#allocation2 + $0x190] sm:$0xff] 0.0
          %587 = vst [vmem:[#allocation2 + $0x198] sm:$0xff] 0.0
          %588 = vst [vmem:[#allocation2 + $0x1a0] sm:$0xff] 0.0
          %589 = vst [vmem:[#allocation2 + $0x1a8] sm:$0xff] 0.0
          %590 = vst [vmem:[#allocation2 + $0x1b0] sm:$0xff] 0.0
          %591 = vst [vmem:[#allocation2 + $0x1b8] sm:$0xff] 0.0
          %592 = vst [vmem:[#allocation2 + $0x1c0] sm:$0xff] 0.0
          %593 = vst [vmem:[#allocation2 + $0x1c8] sm:$0xff] 0.0
          %594 = vst [vmem:[#allocation2 + $0x1d0] sm:$0xff] 0.0
          %595 = vst [vmem:[#allocation2 + $0x1d8] sm:$0xff] 0.0
          %596 = vst [vmem:[#allocation2 + $0x1e0] sm:$0xff] 0.0
          %597 = vst [vmem:[#allocation2 + $0x1e8] sm:$0xff] 0.0
          %598 = vst [vmem:[#allocation2 + $0x1f0] sm:$0xff] 0.0
          %599 = vst [vmem:[#allocation2 + $0x1f8] sm:$0xff] 0.0
        $region88: #{tpu_custom_call.1} parent=51 // pred_fallthru
          _
        %v600 = vld [vmem:[#allocation2] sm:$0xff]
        %v601 = vld [vmem:[#allocation2 + $0x8] sm:$0xff]
        %v602 = vld [vmem:[#allocation2 + $0x10] sm:$0xff]
        %v603 = vld [vmem:[#allocation2 + $0x18] sm:$0xff]
        %v604 = vld [vmem:[#allocation2 + $0x20] sm:$0xff]
        %v605 = vld [vmem:[#allocation2 + $0x28] sm:$0xff]
        %v606 = vld [vmem:[#allocation2 + $0x30] sm:$0xff]
        %v607 = vld [vmem:[#allocation2 + $0x38] sm:$0xff]
        %v608 = vld [vmem:[#allocation2 + $0x40] sm:$0xff]
        %v609 = vld [vmem:[#allocation2 + $0x48] sm:$0xff]
        %v610 = vld [vmem:[#allocation2 + $0x50] sm:$0xff]
        %v611 = vld [vmem:[#allocation2 + $0x58] sm:$0xff]
        %v612 = vld [vmem:[#allocation2 + $0x60] sm:$0xff]
        %v613 = vld [vmem:[#allocation2 + $0x68] sm:$0xff]
        %v614 = vld [vmem:[#allocation2 + $0x70] sm:$0xff]
        %v615 = vld [vmem:[#allocation2 + $0x78] sm:$0xff]
        %v616 = vld [vmem:[#allocation2 + $0x80] sm:$0xff]
        %v617 = vld [vmem:[#allocation2 + $0x88] sm:$0xff]
        %v618 = vld [vmem:[#allocation2 + $0x90] sm:$0xff]
        %v619 = vld [vmem:[#allocation2 + $0x98] sm:$0xff]
        %v620 = vld [vmem:[#allocation2 + $0xa0] sm:$0xff]
        %v621 = vld [vmem:[#allocation2 + $0xa8] sm:$0xff]
        %v622 = vld [vmem:[#allocation2 + $0xb0] sm:$0xff]
        %v623 = vld [vmem:[#allocation2 + $0xb8] sm:$0xff]
        %v624 = vld [vmem:[#allocation2 + $0xc0] sm:$0xff]
        %v625 = vld [vmem:[#allocation2 + $0xc8] sm:$0xff]
        %v626 = vld [vmem:[#allocation2 + $0xd0] sm:$0xff]
        %v627 = vld [vmem:[#allocation2 + $0xd8] sm:$0xff]
        %v628 = vld [vmem:[#allocation2 + $0xe0] sm:$0xff]
        %v629 = vld [vmem:[#allocation2 + $0xe8] sm:$0xff]
        %v630 = vld [vmem:[#allocation2 + $0xf0] sm:$0xff]
        %v631 = vld [vmem:[#allocation2 + $0xf8] sm:$0xff]
        %v632 = vld [vmem:[#allocation2 + $0x100] sm:$0xff]
        %v633 = vld [vmem:[#allocation2 + $0x108] sm:$0xff]
        %v634 = vld [vmem:[#allocation2 + $0x110] sm:$0xff]
        %v635 = vld [vmem:[#allocation2 + $0x118] sm:$0xff]
        %v636 = vld [vmem:[#allocation2 + $0x120] sm:$0xff]
        %v637 = vld [vmem:[#allocation2 + $0x128] sm:$0xff]
        %v638 = vld [vmem:[#allocation2 + $0x130] sm:$0xff]
        %v639 = vld [vmem:[#allocation2 + $0x138] sm:$0xff]
        %v640 = vld [vmem:[#allocation2 + $0x140] sm:$0xff]
        %v641 = vld [vmem:[#allocation2 + $0x148] sm:$0xff]
        %v642 = vld [vmem:[#allocation2 + $0x150] sm:$0xff]
        %v643 = vld [vmem:[#allocation2 + $0x158] sm:$0xff]
        %v644 = vld [vmem:[#allocation2 + $0x160] sm:$0xff]
        %v645 = vld [vmem:[#allocation2 + $0x168] sm:$0xff]
        %v646 = vld [vmem:[#allocation2 + $0x170] sm:$0xff]
        %v647 = vld [vmem:[#allocation2 + $0x178] sm:$0xff]
        %v648 = vld [vmem:[#allocation2 + $0x180] sm:$0xff]
        %v649 = vld [vmem:[#allocation2 + $0x188] sm:$0xff]
        %v650 = vld [vmem:[#allocation2 + $0x190] sm:$0xff]
        %v651 = vld [vmem:[#allocation2 + $0x198] sm:$0xff]
        %v652 = vld [vmem:[#allocation2 + $0x1a0] sm:$0xff]
        %v653 = vld [vmem:[#allocation2 + $0x1a8] sm:$0xff]
        %v654 = vld [vmem:[#allocation2 + $0x1b0] sm:$0xff]
        %v655 = vld [vmem:[#allocation2 + $0x1b8] sm:$0xff]
        %v656 = vld [vmem:[#allocation2 + $0x1c0] sm:$0xff]
        %v657 = vld [vmem:[#allocation2 + $0x1c8] sm:$0xff]
        %v658 = vld [vmem:[#allocation2 + $0x1d0] sm:$0xff]
        %v659 = vld [vmem:[#allocation2 + $0x1d8] sm:$0xff]
        %v660 = vld [vmem:[#allocation2 + $0x1e0] sm:$0xff]
        %v661 = vld [vmem:[#allocation2 + $0x1e8] sm:$0xff]
        %v662 = vld [vmem:[#allocation2 + $0x1f0] sm:$0xff]
        %v663 = vld [vmem:[#allocation2 + $0x1f8] sm:$0xff]
        %v664 = vld [vmem:[%s437] sm:$0xff]
        %v665 = vld [vmem:[%s437 + $0x8] sm:$0xff]
        %v666 = vld [vmem:[%s437 + $0x10] sm:$0xff]
        %v667 = vld [vmem:[%s437 + $0x18] sm:$0xff]
        %v668 = vld [vmem:[%s437 + $0x20] sm:$0xff]
        %v669 = vld [vmem:[%s437 + $0x28] sm:$0xff]
        %v670 = vld [vmem:[%s437 + $0x30] sm:$0xff]
        %v671 = vld [vmem:[%s437 + $0x38] sm:$0xff]
        %v672 = vld [vmem:[%s437 + $0x40] sm:$0xff]
        %v673 = vld [vmem:[%s437 + $0x48] sm:$0xff]
        %v674 = vld [vmem:[%s437 + $0x50] sm:$0xff]
        %v675 = vld [vmem:[%s437 + $0x58] sm:$0xff]
        %v676 = vld [vmem:[%s437 + $0x60] sm:$0xff]
        %v677 = vld [vmem:[%s437 + $0x68] sm:$0xff]
        %v678 = vld [vmem:[%s437 + $0x70] sm:$0xff]
        %v679 = vld [vmem:[%s437 + $0x78] sm:$0xff]
        %v680 = vld [vmem:[%s437 + $0x80] sm:$0xff]
        %v681 = vld [vmem:[%s437 + $0x88] sm:$0xff]
        %v682 = vld [vmem:[%s437 + $0x90] sm:$0xff]
        %v683 = vld [vmem:[%s437 + $0x98] sm:$0xff]
        %v684 = vld [vmem:[%s437 + $0xa0] sm:$0xff]
        %v685 = vld [vmem:[%s437 + $0xa8] sm:$0xff]
        %v686 = vld [vmem:[%s437 + $0xb0] sm:$0xff]
        %v687 = vld [vmem:[%s437 + $0xb8] sm:$0xff]
        %v688 = vld [vmem:[%s437 + $0xc0] sm:$0xff]
        %v689 = vld [vmem:[%s437 + $0xc8] sm:$0xff]
        %v690 = vld [vmem:[%s437 + $0xd0] sm:$0xff]
        %v691 = vld [vmem:[%s437 + $0xd8] sm:$0xff]
        %v692 = vld [vmem:[%s437 + $0xe0] sm:$0xff]
        %v693 = vld [vmem:[%s437 + $0xe8] sm:$0xff]
        %v694 = vld [vmem:[%s437 + $0xf0] sm:$0xff]
        %v695 = vld [vmem:[%s437 + $0xf8] sm:$0xff]
        %v696 = vld [vmem:[%s437 + $0x100] sm:$0xff]
        %v697 = vld [vmem:[%s437 + $0x108] sm:$0xff]
        %v698 = vld [vmem:[%s437 + $0x110] sm:$0xff]
        %v699 = vld [vmem:[%s437 + $0x118] sm:$0xff]
        %v700 = vld [vmem:[%s437 + $0x120] sm:$0xff]
        %v701 = vld [vmem:[%s437 + $0x128] sm:$0xff]
        %v702 = vld [vmem:[%s437 + $0x130] sm:$0xff]
        %v703 = vld [vmem:[%s437 + $0x138] sm:$0xff]
        %v704 = vld [vmem:[%s437 + $0x140] sm:$0xff]
        %v705 = vld [vmem:[%s437 + $0x148] sm:$0xff]
        %v706 = vld [vmem:[%s437 + $0x150] sm:$0xff]
        %v707 = vld [vmem:[%s437 + $0x158] sm:$0xff]
        %v708 = vld [vmem:[%s437 + $0x160] sm:$0xff]
        %v709 = vld [vmem:[%s437 + $0x168] sm:$0xff]
        %v710 = vld [vmem:[%s437 + $0x170] sm:$0xff]
        %v711 = vld [vmem:[%s437 + $0x178] sm:$0xff]
        %v712 = vld [vmem:[%s437 + $0x180] sm:$0xff]
        %v713 = vld [vmem:[%s437 + $0x188] sm:$0xff]
        %v714 = vld [vmem:[%s437 + $0x190] sm:$0xff]
        %v715 = vld [vmem:[%s437 + $0x198] sm:$0xff]
        %v716 = vld [vmem:[%s437 + $0x1a0] sm:$0xff]
        %v717 = vld [vmem:[%s437 + $0x1a8] sm:$0xff]
        %v718 = vld [vmem:[%s437 + $0x1b0] sm:$0xff]
        %v719 = vld [vmem:[%s437 + $0x1b8] sm:$0xff]
        %v720 = vld [vmem:[%s437 + $0x1c0] sm:$0xff]
        %v721 = vld [vmem:[%s437 + $0x1c8] sm:$0xff]
        %v722 = vld [vmem:[%s437 + $0x1d0] sm:$0xff]
        %v723 = vld [vmem:[%s437 + $0x1d8] sm:$0xff]
        %v724 = vld [vmem:[%s437 + $0x1e0] sm:$0xff]
        %v725 = vld [vmem:[%s437 + $0x1e8] sm:$0xff]
        %v726 = vld [vmem:[%s437 + $0x1f0] sm:$0xff]
        %v727 = vld [vmem:[%s437 + $0x1f8] sm:$0xff]
        %v728 = vld [vmem:[%s437 + $0x200] sm:$0xff]
        %v729 = vld [vmem:[%s437 + $0x208] sm:$0xff]
        %v730 = vld [vmem:[%s437 + $0x210] sm:$0xff]
        %v731 = vld [vmem:[%s437 + $0x218] sm:$0xff]
        %v732 = vld [vmem:[%s437 + $0x220] sm:$0xff]
        %v733 = vld [vmem:[%s437 + $0x228] sm:$0xff]
        %v734 = vld [vmem:[%s437 + $0x230] sm:$0xff]
        %v735 = vld [vmem:[%s437 + $0x238] sm:$0xff]
        %v736 = vld [vmem:[%s437 + $0x240] sm:$0xff]
        %v737 = vld [vmem:[%s437 + $0x248] sm:$0xff]
        %v738 = vld [vmem:[%s437 + $0x250] sm:$0xff]
        %v739 = vld [vmem:[%s437 + $0x258] sm:$0xff]
        %v740 = vld [vmem:[%s437 + $0x260] sm:$0xff]
        %v741 = vld [vmem:[%s437 + $0x268] sm:$0xff]
        %v742 = vld [vmem:[%s437 + $0x270] sm:$0xff]
        %v743 = vld [vmem:[%s437 + $0x278] sm:$0xff]
        %v744 = vld [vmem:[%s437 + $0x280] sm:$0xff]
        %v745 = vld [vmem:[%s437 + $0x288] sm:$0xff]
        %v746 = vld [vmem:[%s437 + $0x290] sm:$0xff]
        %v747 = vld [vmem:[%s437 + $0x298] sm:$0xff]
        %v748 = vld [vmem:[%s437 + $0x2a0] sm:$0xff]
        %v749 = vld [vmem:[%s437 + $0x2a8] sm:$0xff]
        %v750 = vld [vmem:[%s437 + $0x2b0] sm:$0xff]
        %v751 = vld [vmem:[%s437 + $0x2b8] sm:$0xff]
        %v752 = vld [vmem:[%s437 + $0x2c0] sm:$0xff]
        %v753 = vld [vmem:[%s437 + $0x2c8] sm:$0xff]
        %v754 = vld [vmem:[%s437 + $0x2d0] sm:$0xff]
        %v755 = vld [vmem:[%s437 + $0x2d8] sm:$0xff]
        %v756 = vld [vmem:[%s437 + $0x2e0] sm:$0xff]
        %v757 = vld [vmem:[%s437 + $0x2e8] sm:$0xff]
        %v758 = vld [vmem:[%s437 + $0x2f0] sm:$0xff]
        %v759 = vld [vmem:[%s437 + $0x2f8] sm:$0xff]
        %v760 = vld [vmem:[%s437 + $0x300] sm:$0xff]
        %v761 = vld [vmem:[%s437 + $0x308] sm:$0xff]
        %v762 = vld [vmem:[%s437 + $0x310] sm:$0xff]
        %v763 = vld [vmem:[%s437 + $0x318] sm:$0xff]
        %v764 = vld [vmem:[%s437 + $0x320] sm:$0xff]
        %v765 = vld [vmem:[%s437 + $0x328] sm:$0xff]
        %v766 = vld [vmem:[%s437 + $0x330] sm:$0xff]
        %v767 = vld [vmem:[%s437 + $0x338] sm:$0xff]
        %v768 = vld [vmem:[%s437 + $0x340] sm:$0xff]
        %v769 = vld [vmem:[%s437 + $0x348] sm:$0xff]
        %v770 = vld [vmem:[%s437 + $0x350] sm:$0xff]
        %v771 = vld [vmem:[%s437 + $0x358] sm:$0xff]
        %v772 = vld [vmem:[%s437 + $0x360] sm:$0xff]
        %v773 = vld [vmem:[%s437 + $0x368] sm:$0xff]
        %v774 = vld [vmem:[%s437 + $0x370] sm:$0xff]
        %v775 = vld [vmem:[%s437 + $0x378] sm:$0xff]
        %v776 = vld [vmem:[%s437 + $0x380] sm:$0xff]
        %v777 = vld [vmem:[%s437 + $0x388] sm:$0xff]
        %v778 = vld [vmem:[%s437 + $0x390] sm:$0xff]
        %v779 = vld [vmem:[%s437 + $0x398] sm:$0xff]
        %v780 = vld [vmem:[%s437 + $0x3a0] sm:$0xff]
        %v781 = vld [vmem:[%s437 + $0x3a8] sm:$0xff]
        %v782 = vld [vmem:[%s437 + $0x3b0] sm:$0xff]
        %v783 = vld [vmem:[%s437 + $0x3b8] sm:$0xff]
        %v784 = vld [vmem:[%s437 + $0x3c0] sm:$0xff]
        %v785 = vld [vmem:[%s437 + $0x3c8] sm:$0xff]
        %v786 = vld [vmem:[%s437 + $0x3d0] sm:$0xff]
        %v787 = vld [vmem:[%s437 + $0x3d8] sm:$0xff]
        %v788 = vld [vmem:[%s437 + $0x3e0] sm:$0xff]
        %v789 = vld [vmem:[%s437 + $0x3e8] sm:$0xff]
        %v790 = vld [vmem:[%s437 + $0x3f0] sm:$0xff]
        %v791 = vld [vmem:[%s437 + $0x3f8] sm:$0xff]
        %v792 = vld [vmem:[%s446] sm:$0xf]
        %v793 = vld [vmem:[%s446 + $0x4] sm:$0xf]
        %v794 = vld [vmem:[%s446 + $0x8] sm:$0xf]
        %v795 = vld [vmem:[%s446 + $0xc] sm:$0xf]
        %v796 = vld [vmem:[%s446 + $0x10] sm:$0xf]
        %v797 = vld [vmem:[%s446 + $0x14] sm:$0xf]
        %v798 = vld [vmem:[%s446 + $0x18] sm:$0xf]
        %v799 = vld [vmem:[%s446 + $0x1c] sm:$0xf]
        %v800 = vld [vmem:[%s446 + $0x20] sm:$0xf]
        %v801 = vld [vmem:[%s446 + $0x24] sm:$0xf]
        %v802 = vld [vmem:[%s446 + $0x28] sm:$0xf]
        %v803 = vld [vmem:[%s446 + $0x2c] sm:$0xf]
        %v804 = vld [vmem:[%s446 + $0x30] sm:$0xf]
        %v805 = vld [vmem:[%s446 + $0x34] sm:$0xf]
        %v806 = vld [vmem:[%s446 + $0x38] sm:$0xf]
        %v807 = vld [vmem:[%s446 + $0x3c] sm:$0xf]
        %v808 = vld [vmem:[%s446 + $0x40] sm:$0xf]
        %v809 = vld [vmem:[%s446 + $0x44] sm:$0xf]
        %v810 = vld [vmem:[%s446 + $0x48] sm:$0xf]
        %v811 = vld [vmem:[%s446 + $0x4c] sm:$0xf]
        %v812 = vld [vmem:[%s446 + $0x50] sm:$0xf]
        %v813 = vld [vmem:[%s446 + $0x54] sm:$0xf]
        %v814 = vld [vmem:[%s446 + $0x58] sm:$0xf]
        %v815 = vld [vmem:[%s446 + $0x5c] sm:$0xf]
        %v816 = vld [vmem:[%s446 + $0x60] sm:$0xf]
        %v817 = vld [vmem:[%s446 + $0x64] sm:$0xf]
        %v818 = vld [vmem:[%s446 + $0x68] sm:$0xf]
        %v819 = vld [vmem:[%s446 + $0x6c] sm:$0xf]
        %v820 = vld [vmem:[%s446 + $0x70] sm:$0xf]
        %v821 = vld [vmem:[%s446 + $0x74] sm:$0xf]
        %v822 = vld [vmem:[%s446 + $0x78] sm:$0xf]
        %v823 = vld [vmem:[%s446 + $0x7c] sm:$0xf]
        %v824 = vld [vmem:[%s446 + $0x80] sm:$0xf]
        %v825 = vld [vmem:[%s446 + $0x84] sm:$0xf]
        %v826 = vld [vmem:[%s446 + $0x88] sm:$0xf]
        %v827 = vld [vmem:[%s446 + $0x8c] sm:$0xf]
        %v828 = vld [vmem:[%s446 + $0x90] sm:$0xf]
        %v829 = vld [vmem:[%s446 + $0x94] sm:$0xf]
        %v830 = vld [vmem:[%s446 + $0x98] sm:$0xf]
        %v831 = vld [vmem:[%s446 + $0x9c] sm:$0xf]
        %v832 = vld [vmem:[%s446 + $0xa0] sm:$0xf]
        %v833 = vld [vmem:[%s446 + $0xa4] sm:$0xf]
        %v834 = vld [vmem:[%s446 + $0xa8] sm:$0xf]
        %v835 = vld [vmem:[%s446 + $0xac] sm:$0xf]
        %v836 = vld [vmem:[%s446 + $0xb0] sm:$0xf]
        %v837 = vld [vmem:[%s446 + $0xb4] sm:$0xf]
        %v838 = vld [vmem:[%s446 + $0xb8] sm:$0xf]
        %v839 = vld [vmem:[%s446 + $0xbc] sm:$0xf]
        %v840 = vld [vmem:[%s446 + $0xc0] sm:$0xf]
        %v841 = vld [vmem:[%s446 + $0xc4] sm:$0xf]
        %v842 = vld [vmem:[%s446 + $0xc8] sm:$0xf]
        %v843 = vld [vmem:[%s446 + $0xcc] sm:$0xf]
        %v844 = vld [vmem:[%s446 + $0xd0] sm:$0xf]
        %v845 = vld [vmem:[%s446 + $0xd4] sm:$0xf]
        %v846 = vld [vmem:[%s446 + $0xd8] sm:$0xf]
        %v847 = vld [vmem:[%s446 + $0xdc] sm:$0xf]
        %v848 = vld [vmem:[%s446 + $0xe0] sm:$0xf]
        %v849 = vld [vmem:[%s446 + $0xe4] sm:$0xf]
        %v850 = vld [vmem:[%s446 + $0xe8] sm:$0xf]
        %v851 = vld [vmem:[%s446 + $0xec] sm:$0xf]
        %v852 = vld [vmem:[%s446 + $0xf0] sm:$0xf]
        %v853 = vld [vmem:[%s446 + $0xf4] sm:$0xf]
        %v854 = vld [vmem:[%s446 + $0xf8] sm:$0xf]
        %v855 = vld [vmem:[%s446 + $0xfc] sm:$0xf]
        %v984 = vunpack.c.l.b16 %v664
        %v985 = vunpack.c.h.b16 %v664
        %v986 = vunpack.c.l.b16 %v665
        %v987 = vunpack.c.h.b16 %v665
        %v988 = vunpack.c.l.b16 %v666
        %v989 = vunpack.c.h.b16 %v666
        %v990 = vunpack.c.l.b16 %v667
        %v991 = vunpack.c.h.b16 %v667
        %v992 = vunpack.c.l.b16 %v668
        %v993 = vunpack.c.h.b16 %v668
        %v994 = vunpack.c.l.b16 %v669
        %v995 = vunpack.c.h.b16 %v669
        %v996 = vunpack.c.l.b16 %v670
        %v997 = vunpack.c.h.b16 %v670
        %v998 = vunpack.c.l.b16 %v671
        %v999 = vunpack.c.h.b16 %v671
        %v1000 = vunpack.c.l.b16 %v672
        %v1001 = vunpack.c.h.b16 %v672
        %v1002 = vunpack.c.l.b16 %v673
        %v1003 = vunpack.c.h.b16 %v673
        %v1004 = vunpack.c.l.b16 %v674
        %v1005 = vunpack.c.h.b16 %v674
        %v1006 = vunpack.c.l.b16 %v675
        %v1007 = vunpack.c.h.b16 %v675
        %v1008 = vunpack.c.l.b16 %v676
        %v1009 = vunpack.c.h.b16 %v676
        %v1010 = vunpack.c.l.b16 %v677
        %v1011 = vunpack.c.h.b16 %v677
        %v1012 = vunpack.c.l.b16 %v678
        %v1013 = vunpack.c.h.b16 %v678
        %v1014 = vunpack.c.l.b16 %v679
        %v1015 = vunpack.c.h.b16 %v679
        %v1016 = vunpack.c.l.b16 %v680
        %v1017 = vunpack.c.h.b16 %v680
        %v1018 = vunpack.c.l.b16 %v681
        %v1019 = vunpack.c.h.b16 %v681
        %v1020 = vunpack.c.l.b16 %v682
        %v1021 = vunpack.c.h.b16 %v682
        %v1022 = vunpack.c.l.b16 %v683
        %v1023 = vunpack.c.h.b16 %v683
        %v1024 = vunpack.c.l.b16 %v684
        %v1025 = vunpack.c.h.b16 %v684
        %v1026 = vunpack.c.l.b16 %v685
        %v1027 = vunpack.c.h.b16 %v685
        %v1028 = vunpack.c.l.b16 %v686
        %v1029 = vunpack.c.h.b16 %v686
        %v1030 = vunpack.c.l.b16 %v687
        %v1031 = vunpack.c.h.b16 %v687
        %v1032 = vunpack.c.l.b16 %v688
        %v1033 = vunpack.c.h.b16 %v688
        %v1034 = vunpack.c.l.b16 %v689
        %v1035 = vunpack.c.h.b16 %v689
        %v1036 = vunpack.c.l.b16 %v690
        %v1037 = vunpack.c.h.b16 %v690
        %v1038 = vunpack.c.l.b16 %v691
        %v1039 = vunpack.c.h.b16 %v691
        %v1040 = vunpack.c.l.b16 %v692
        %v1041 = vunpack.c.h.b16 %v692
        %v1042 = vunpack.c.l.b16 %v693
        %v1043 = vunpack.c.h.b16 %v693
        %v1044 = vunpack.c.l.b16 %v694
        %v1045 = vunpack.c.h.b16 %v694
        %v1046 = vunpack.c.l.b16 %v695
        %v1047 = vunpack.c.h.b16 %v695
        %v1048 = vunpack.c.l.b16 %v696
        %v1049 = vunpack.c.h.b16 %v696
        %v1050 = vunpack.c.l.b16 %v697
        %v1051 = vunpack.c.h.b16 %v697
        %v1052 = vunpack.c.l.b16 %v698
        %v1053 = vunpack.c.h.b16 %v698
        %v1054 = vunpack.c.l.b16 %v699
        %v1055 = vunpack.c.h.b16 %v699
        %v1056 = vunpack.c.l.b16 %v700
        %v1057 = vunpack.c.h.b16 %v700
        %v1058 = vunpack.c.l.b16 %v701
        %v1059 = vunpack.c.h.b16 %v701
        %v1060 = vunpack.c.l.b16 %v702
        %v1061 = vunpack.c.h.b16 %v702
        %v1062 = vunpack.c.l.b16 %v703
        %v1063 = vunpack.c.h.b16 %v703
        %v1064 = vunpack.c.l.b16 %v704
        %v1065 = vunpack.c.h.b16 %v704
        %v1066 = vunpack.c.l.b16 %v705
        %v1067 = vunpack.c.h.b16 %v705
        %v1068 = vunpack.c.l.b16 %v706
        %v1069 = vunpack.c.h.b16 %v706
        %v1070 = vunpack.c.l.b16 %v707
        %v1071 = vunpack.c.h.b16 %v707
        %v1072 = vunpack.c.l.b16 %v708
        %v1073 = vunpack.c.h.b16 %v708
        %v1074 = vunpack.c.l.b16 %v709
        %v1075 = vunpack.c.h.b16 %v709
        %v1076 = vunpack.c.l.b16 %v710
        %v1077 = vunpack.c.h.b16 %v710
        %v1078 = vunpack.c.l.b16 %v711
        %v1079 = vunpack.c.h.b16 %v711
        %v1080 = vunpack.c.l.b16 %v712
        %v1081 = vunpack.c.h.b16 %v712
        %v1082 = vunpack.c.l.b16 %v713
        %v1083 = vunpack.c.h.b16 %v713
        %v1084 = vunpack.c.l.b16 %v714
        %v1085 = vunpack.c.h.b16 %v714
        %v1086 = vunpack.c.l.b16 %v715
        %v1087 = vunpack.c.h.b16 %v715
        %v1088 = vunpack.c.l.b16 %v716
        %v1089 = vunpack.c.h.b16 %v716
        %v1090 = vunpack.c.l.b16 %v717
        %v1091 = vunpack.c.h.b16 %v717
        %v1092 = vunpack.c.l.b16 %v718
        %v1093 = vunpack.c.h.b16 %v718
        %v1094 = vunpack.c.l.b16 %v719
        %v1095 = vunpack.c.h.b16 %v719
        %v1096 = vunpack.c.l.b16 %v720
        %v1097 = vunpack.c.h.b16 %v720
        %v1098 = vunpack.c.l.b16 %v721
        %v1099 = vunpack.c.h.b16 %v721
        %v1100 = vunpack.c.l.b16 %v722
        %v1101 = vunpack.c.h.b16 %v722
        %v1102 = vunpack.c.l.b16 %v723
        %v1103 = vunpack.c.h.b16 %v723
        %v1104 = vunpack.c.l.b16 %v724
        %v1105 = vunpack.c.h.b16 %v724
        %v1106 = vunpack.c.l.b16 %v725
        %v1107 = vunpack.c.h.b16 %v725
        %v1108 = vunpack.c.l.b16 %v726
        %v1109 = vunpack.c.h.b16 %v726
        %v1110 = vunpack.c.l.b16 %v727
        %v1111 = vunpack.c.h.b16 %v727
        %v1112 = vunpack.c.l.b16 %v728
        %v1113 = vunpack.c.h.b16 %v728
        %v1114 = vunpack.c.l.b16 %v729
        %v1115 = vunpack.c.h.b16 %v729
        %v1116 = vunpack.c.l.b16 %v730
        %v1117 = vunpack.c.h.b16 %v730
        %v1118 = vunpack.c.l.b16 %v731
        %v1119 = vunpack.c.h.b16 %v731
        %v1120 = vunpack.c.l.b16 %v732
        %v1121 = vunpack.c.h.b16 %v732
        %v1122 = vunpack.c.l.b16 %v733
        %v1123 = vunpack.c.h.b16 %v733
        %v1124 = vunpack.c.l.b16 %v734
        %v1125 = vunpack.c.h.b16 %v734
        %v1126 = vunpack.c.l.b16 %v735
        %v1127 = vunpack.c.h.b16 %v735
        %v1128 = vunpack.c.l.b16 %v736
        %v1129 = vunpack.c.h.b16 %v736
        %v1130 = vunpack.c.l.b16 %v737
        %v1131 = vunpack.c.h.b16 %v737
        %v1132 = vunpack.c.l.b16 %v738
        %v1133 = vunpack.c.h.b16 %v738
        %v1134 = vunpack.c.l.b16 %v739
        %v1135 = vunpack.c.h.b16 %v739
        %v1136 = vunpack.c.l.b16 %v740
        %v1137 = vunpack.c.h.b16 %v740
        %v1138 = vunpack.c.l.b16 %v741
        %v1139 = vunpack.c.h.b16 %v741
        %v1140 = vunpack.c.l.b16 %v742
        %v1141 = vunpack.c.h.b16 %v742
        %v1142 = vunpack.c.l.b16 %v743
        %v1143 = vunpack.c.h.b16 %v743
        %v1144 = vunpack.c.l.b16 %v744
        %v1145 = vunpack.c.h.b16 %v744
        %v1146 = vunpack.c.l.b16 %v745
        %v1147 = vunpack.c.h.b16 %v745
        %v1148 = vunpack.c.l.b16 %v746
        %v1149 = vunpack.c.h.b16 %v746
        %v1150 = vunpack.c.l.b16 %v747
        %v1151 = vunpack.c.h.b16 %v747
        %v1152 = vunpack.c.l.b16 %v748
        %v1153 = vunpack.c.h.b16 %v748
        %v1154 = vunpack.c.l.b16 %v749
        %v1155 = vunpack.c.h.b16 %v749
        %v1156 = vunpack.c.l.b16 %v750
        %v1157 = vunpack.c.h.b16 %v750
        %v1158 = vunpack.c.l.b16 %v751
        %v1159 = vunpack.c.h.b16 %v751
        %v1160 = vunpack.c.l.b16 %v752
        %v1161 = vunpack.c.h.b16 %v752
        %v1162 = vunpack.c.l.b16 %v753
        %v1163 = vunpack.c.h.b16 %v753
        %v1164 = vunpack.c.l.b16 %v754
        %v1165 = vunpack.c.h.b16 %v754
        %v1166 = vunpack.c.l.b16 %v755
        %v1167 = vunpack.c.h.b16 %v755
        %v1168 = vunpack.c.l.b16 %v756
        %v1169 = vunpack.c.h.b16 %v756
        %v1170 = vunpack.c.l.b16 %v757
        %v1171 = vunpack.c.h.b16 %v757
        %v1172 = vunpack.c.l.b16 %v758
        %v1173 = vunpack.c.h.b16 %v758
        %v1174 = vunpack.c.l.b16 %v759
        %v1175 = vunpack.c.h.b16 %v759
        %v1176 = vunpack.c.l.b16 %v760
        %v1177 = vunpack.c.h.b16 %v760
        %v1178 = vunpack.c.l.b16 %v761
        %v1179 = vunpack.c.h.b16 %v761
        %v1180 = vunpack.c.l.b16 %v762
        %v1181 = vunpack.c.h.b16 %v762
        %v1182 = vunpack.c.l.b16 %v763
        %v1183 = vunpack.c.h.b16 %v763
        %v1184 = vunpack.c.l.b16 %v764
        %v1185 = vunpack.c.h.b16 %v764
        %v1186 = vunpack.c.l.b16 %v765
        %v1187 = vunpack.c.h.b16 %v765
        %v1188 = vunpack.c.l.b16 %v766
        %v1189 = vunpack.c.h.b16 %v766
        %v1190 = vunpack.c.l.b16 %v767
        %v1191 = vunpack.c.h.b16 %v767
        %v1192 = vunpack.c.l.b16 %v768
        %v1193 = vunpack.c.h.b16 %v768
        %v1194 = vunpack.c.l.b16 %v769
        %v1195 = vunpack.c.h.b16 %v769
        %v1196 = vunpack.c.l.b16 %v770
        %v1197 = vunpack.c.h.b16 %v770
        %v1198 = vunpack.c.l.b16 %v771
        %v1199 = vunpack.c.h.b16 %v771
        %v1200 = vunpack.c.l.b16 %v772
        %v1201 = vunpack.c.h.b16 %v772
        %v1202 = vunpack.c.l.b16 %v773
        %v1203 = vunpack.c.h.b16 %v773
        %v1204 = vunpack.c.l.b16 %v774
        %v1205 = vunpack.c.h.b16 %v774
        %v1206 = vunpack.c.l.b16 %v775
        %v1207 = vunpack.c.h.b16 %v775
        %v1208 = vunpack.c.l.b16 %v776
        %v1209 = vunpack.c.h.b16 %v776
        %v1210 = vunpack.c.l.b16 %v777
        %v1211 = vunpack.c.h.b16 %v777
        %v1212 = vunpack.c.l.b16 %v778
        %v1213 = vunpack.c.h.b16 %v778
        %v1214 = vunpack.c.l.b16 %v779
        %v1215 = vunpack.c.h.b16 %v779
        %v1216 = vunpack.c.l.b16 %v780
        %v1217 = vunpack.c.h.b16 %v780
        %v1218 = vunpack.c.l.b16 %v781
        %v1219 = vunpack.c.h.b16 %v781
        %v1220 = vunpack.c.l.b16 %v782
        %v1221 = vunpack.c.h.b16 %v782
        %v1222 = vunpack.c.l.b16 %v783
        %v1223 = vunpack.c.h.b16 %v783
        %v1224 = vunpack.c.l.b16 %v784
        %v1225 = vunpack.c.h.b16 %v784
        %v1226 = vunpack.c.l.b16 %v785
        %v1227 = vunpack.c.h.b16 %v785
        %v1228 = vunpack.c.l.b16 %v786
        %v1229 = vunpack.c.h.b16 %v786
        %v1230 = vunpack.c.l.b16 %v787
        %v1231 = vunpack.c.h.b16 %v787
        %v1232 = vunpack.c.l.b16 %v788
        %v1233 = vunpack.c.h.b16 %v788
        %v1234 = vunpack.c.l.b16 %v789
        %v1235 = vunpack.c.h.b16 %v789
        %v1236 = vunpack.c.l.b16 %v790
        %v1237 = vunpack.c.h.b16 %v790
        %v1238 = vunpack.c.l.b16 %v791
        %v1239 = vunpack.c.h.b16 %v791
        %v1240 = vpack.c.b16 %v988, %v984
        %v1241 = vpack.c.b16 %v989, %v985
        %v1242 = vpack.c.b16 %v990, %v986
        %v1243 = vpack.c.b16 %v991, %v987
        %v1244 = vpack.c.b16 %v996, %v992
        %v1245 = vpack.c.b16 %v997, %v993
        %v1246 = vpack.c.b16 %v998, %v994
        %v1247 = vpack.c.b16 %v999, %v995
        %v1248 = vpack.c.b16 %v1004, %v1000
        %v1249 = vpack.c.b16 %v1005, %v1001
        %v1250 = vpack.c.b16 %v1006, %v1002
        %v1251 = vpack.c.b16 %v1007, %v1003
        %v1252 = vpack.c.b16 %v1012, %v1008
        %v1253 = vpack.c.b16 %v1013, %v1009
        %v1254 = vpack.c.b16 %v1014, %v1010
        %v1255 = vpack.c.b16 %v1015, %v1011
        %v1256 = vpack.c.b16 %v1020, %v1016
        %v1257 = vpack.c.b16 %v1021, %v1017
        %v1258 = vpack.c.b16 %v1022, %v1018
        %v1259 = vpack.c.b16 %v1023, %v1019
        %v1260 = vpack.c.b16 %v1028, %v1024
        %v1261 = vpack.c.b16 %v1029, %v1025
        %v1262 = vpack.c.b16 %v1030, %v1026
        %v1263 = vpack.c.b16 %v1031, %v1027
        %v1264 = vpack.c.b16 %v1036, %v1032
        %v1265 = vpack.c.b16 %v1037, %v1033
        %v1266 = vpack.c.b16 %v1038, %v1034
        %v1267 = vpack.c.b16 %v1039, %v1035
        %v1268 = vpack.c.b16 %v1044, %v1040
        %v1269 = vpack.c.b16 %v1045, %v1041
        %v1270 = vpack.c.b16 %v1046, %v1042
        %v1271 = vpack.c.b16 %v1047, %v1043
        %v1272 = vpack.c.b16 %v1052, %v1048
        %v1273 = vpack.c.b16 %v1053, %v1049
        %v1274 = vpack.c.b16 %v1054, %v1050
        %v1275 = vpack.c.b16 %v1055, %v1051
        %v1276 = vpack.c.b16 %v1060, %v1056
        %v1277 = vpack.c.b16 %v1061, %v1057
        %v1278 = vpack.c.b16 %v1062, %v1058
        %v1279 = vpack.c.b16 %v1063, %v1059
        %v1280 = vpack.c.b16 %v1068, %v1064
        %v1281 = vpack.c.b16 %v1069, %v1065
        %v1282 = vpack.c.b16 %v1070, %v1066
        %v1283 = vpack.c.b16 %v1071, %v1067
        %v1284 = vpack.c.b16 %v1076, %v1072
        %v1285 = vpack.c.b16 %v1077, %v1073
        %v1286 = vpack.c.b16 %v1078, %v1074
        %v1287 = vpack.c.b16 %v1079, %v1075
        %v1288 = vpack.c.b16 %v1084, %v1080
        %v1289 = vpack.c.b16 %v1085, %v1081
        %v1290 = vpack.c.b16 %v1086, %v1082
        %v1291 = vpack.c.b16 %v1087, %v1083
        %v1292 = vpack.c.b16 %v1092, %v1088
        %v1293 = vpack.c.b16 %v1093, %v1089
        %v1294 = vpack.c.b16 %v1094, %v1090
        %v1295 = vpack.c.b16 %v1095, %v1091
        %v1296 = vpack.c.b16 %v1100, %v1096
        %v1297 = vpack.c.b16 %v1101, %v1097
        %v1298 = vpack.c.b16 %v1102, %v1098
        %v1299 = vpack.c.b16 %v1103, %v1099
        %v1300 = vpack.c.b16 %v1108, %v1104
        %v1301 = vpack.c.b16 %v1109, %v1105
        %v1302 = vpack.c.b16 %v1110, %v1106
        %v1303 = vpack.c.b16 %v1111, %v1107
        %v1304 = vpack.c.b16 %v1116, %v1112
        %v1305 = vpack.c.b16 %v1117, %v1113
        %v1306 = vpack.c.b16 %v1118, %v1114
        %v1307 = vpack.c.b16 %v1119, %v1115
        %v1308 = vpack.c.b16 %v1124, %v1120
        %v1309 = vpack.c.b16 %v1125, %v1121
        %v1310 = vpack.c.b16 %v1126, %v1122
        %v1311 = vpack.c.b16 %v1127, %v1123
        %v1312 = vpack.c.b16 %v1132, %v1128
        %v1313 = vpack.c.b16 %v1133, %v1129
        %v1314 = vpack.c.b16 %v1134, %v1130
        %v1315 = vpack.c.b16 %v1135, %v1131
        %v1316 = vpack.c.b16 %v1140, %v1136
        %v1317 = vpack.c.b16 %v1141, %v1137
        %v1318 = vpack.c.b16 %v1142, %v1138
        %v1319 = vpack.c.b16 %v1143, %v1139
        %v1320 = vpack.c.b16 %v1148, %v1144
        %v1321 = vpack.c.b16 %v1149, %v1145
        %v1322 = vpack.c.b16 %v1150, %v1146
        %v1323 = vpack.c.b16 %v1151, %v1147
        %v1324 = vpack.c.b16 %v1156, %v1152
        %v1325 = vpack.c.b16 %v1157, %v1153
        %v1326 = vpack.c.b16 %v1158, %v1154
        %v1327 = vpack.c.b16 %v1159, %v1155
        %v1328 = vpack.c.b16 %v1164, %v1160
        %v1329 = vpack.c.b16 %v1165, %v1161
        %v1330 = vpack.c.b16 %v1166, %v1162
        %v1331 = vpack.c.b16 %v1167, %v1163
        %v1332 = vpack.c.b16 %v1172, %v1168
        %v1333 = vpack.c.b16 %v1173, %v1169
        %v1334 = vpack.c.b16 %v1174, %v1170
        %v1335 = vpack.c.b16 %v1175, %v1171
        %v1336 = vpack.c.b16 %v1180, %v1176
        %v1337 = vpack.c.b16 %v1181, %v1177
        %v1338 = vpack.c.b16 %v1182, %v1178
        %v1339 = vpack.c.b16 %v1183, %v1179
        %v1340 = vpack.c.b16 %v1188, %v1184
        %v1341 = vpack.c.b16 %v1189, %v1185
        %v1342 = vpack.c.b16 %v1190, %v1186
        %v1343 = vpack.c.b16 %v1191, %v1187
        %v1344 = vpack.c.b16 %v1196, %v1192
        %v1345 = vpack.c.b16 %v1197, %v1193
        %v1346 = vpack.c.b16 %v1198, %v1194
        %v1347 = vpack.c.b16 %v1199, %v1195
        %v1348 = vpack.c.b16 %v1204, %v1200
        %v1349 = vpack.c.b16 %v1205, %v1201
        %v1350 = vpack.c.b16 %v1206, %v1202
        %v1351 = vpack.c.b16 %v1207, %v1203
        %v1352 = vpack.c.b16 %v1212, %v1208
        %v1353 = vpack.c.b16 %v1213, %v1209
        %v1354 = vpack.c.b16 %v1214, %v1210
        %v1355 = vpack.c.b16 %v1215, %v1211
        %v1356 = vpack.c.b16 %v1220, %v1216
        %v1357 = vpack.c.b16 %v1221, %v1217
        %v1358 = vpack.c.b16 %v1222, %v1218
        %v1359 = vpack.c.b16 %v1223, %v1219
        %v1360 = vpack.c.b16 %v1228, %v1224
        %v1361 = vpack.c.b16 %v1229, %v1225
        %v1362 = vpack.c.b16 %v1230, %v1226
        %v1363 = vpack.c.b16 %v1231, %v1227
        %v1364 = vpack.c.b16 %v1236, %v1232
        %v1365 = vpack.c.b16 %v1237, %v1233
        %v1366 = vpack.c.b16 %v1238, %v1234
        %v1367 = vpack.c.b16 %v1239, %v1235
        %v1560 = vunpack.c.l.b16 %v792
        %v1561 = vunpack.c.l.b16 %v793
        %v1562 = vunpack.c.l.b16 %v794
        %v1563 = vunpack.c.l.b16 %v795
        %v1564 = vunpack.c.l.b16 %v796
        %v1565 = vunpack.c.l.b16 %v797
        %v1566 = vunpack.c.l.b16 %v798
        %v1567 = vunpack.c.l.b16 %v799
        %v1568 = vunpack.c.l.b16 %v800
        %v1569 = vunpack.c.l.b16 %v801
        %v1570 = vunpack.c.l.b16 %v802
        %v1571 = vunpack.c.l.b16 %v803
        %v1572 = vunpack.c.l.b16 %v804
        %v1573 = vunpack.c.l.b16 %v805
        %v1574 = vunpack.c.l.b16 %v806
        %v1575 = vunpack.c.l.b16 %v807
        %v1576 = vunpack.c.l.b16 %v808
        %v1577 = vunpack.c.l.b16 %v809
        %v1578 = vunpack.c.l.b16 %v810
        %v1579 = vunpack.c.l.b16 %v811
        %v1580 = vunpack.c.l.b16 %v812
        %v1581 = vunpack.c.l.b16 %v813
        %v1582 = vunpack.c.l.b16 %v814
        %v1583 = vunpack.c.l.b16 %v815
        %v1584 = vunpack.c.l.b16 %v816
        %v1585 = vunpack.c.l.b16 %v817
        %v1586 = vunpack.c.l.b16 %v818
        %v1587 = vunpack.c.l.b16 %v819
        %v1588 = vunpack.c.l.b16 %v820
        %v1589 = vunpack.c.l.b16 %v821
        %v1590 = vunpack.c.l.b16 %v822
        %v1591 = vunpack.c.l.b16 %v823
        %v1592 = vunpack.c.l.b16 %v824
        %v1593 = vunpack.c.l.b16 %v825
        %v1594 = vunpack.c.l.b16 %v826
        %v1595 = vunpack.c.l.b16 %v827
        %v1596 = vunpack.c.l.b16 %v828
        %v1597 = vunpack.c.l.b16 %v829
        %v1598 = vunpack.c.l.b16 %v830
        %v1599 = vunpack.c.l.b16 %v831
        %v1600 = vunpack.c.l.b16 %v832
        %v1601 = vunpack.c.l.b16 %v833
        %v1602 = vunpack.c.l.b16 %v834
        %v1603 = vunpack.c.l.b16 %v835
        %v1604 = vunpack.c.l.b16 %v836
        %v1605 = vunpack.c.l.b16 %v837
        %v1606 = vunpack.c.l.b16 %v838
        %v1607 = vunpack.c.l.b16 %v839
        %v1608 = vunpack.c.l.b16 %v840
        %v1609 = vunpack.c.l.b16 %v841
        %v1610 = vunpack.c.l.b16 %v842
        %v1611 = vunpack.c.l.b16 %v843
        %v1612 = vunpack.c.l.b16 %v844
        %v1613 = vunpack.c.l.b16 %v845
        %v1614 = vunpack.c.l.b16 %v846
        %v1615 = vunpack.c.l.b16 %v847
        %v1616 = vunpack.c.l.b16 %v848
        %v1617 = vunpack.c.l.b16 %v849
        %v1618 = vunpack.c.l.b16 %v850
        %v1619 = vunpack.c.l.b16 %v851
        %v1620 = vunpack.c.l.b16 %v852
        %v1621 = vunpack.c.l.b16 %v853
        %v1622 = vunpack.c.l.b16 %v854
        %v1623 = vunpack.c.l.b16 %v855
        %v1624 = vpack.c.b16 %v1561, %v1560
        %v1625 = vpack.c.b16 %v1563, %v1562
        %v1626 = vpack.c.b16 %v1565, %v1564
        %v1627 = vpack.c.b16 %v1567, %v1566
        %v1628 = vpack.c.b16 %v1569, %v1568
        %v1629 = vpack.c.b16 %v1571, %v1570
        %v1630 = vpack.c.b16 %v1573, %v1572
        %v1631 = vpack.c.b16 %v1575, %v1574
        %v1632 = vpack.c.b16 %v1577, %v1576
        %v1633 = vpack.c.b16 %v1579, %v1578
        %v1634 = vpack.c.b16 %v1581, %v1580
        %v1635 = vpack.c.b16 %v1583, %v1582
        %v1636 = vpack.c.b16 %v1585, %v1584
        %v1637 = vpack.c.b16 %v1587, %v1586
        %v1638 = vpack.c.b16 %v1589, %v1588
        %v1639 = vpack.c.b16 %v1591, %v1590
        %v1640 = vpack.c.b16 %v1593, %v1592
        %v1641 = vpack.c.b16 %v1595, %v1594
        %v1642 = vpack.c.b16 %v1597, %v1596
        %v1643 = vpack.c.b16 %v1599, %v1598
        %v1644 = vpack.c.b16 %v1601, %v1600
        %v1645 = vpack.c.b16 %v1603, %v1602
        %v1646 = vpack.c.b16 %v1605, %v1604
        %v1647 = vpack.c.b16 %v1607, %v1606
        %v1648 = vpack.c.b16 %v1609, %v1608
        %v1649 = vpack.c.b16 %v1611, %v1610
        %v1650 = vpack.c.b16 %v1613, %v1612
        %v1651 = vpack.c.b16 %v1615, %v1614
        %v1652 = vpack.c.b16 %v1617, %v1616
        %v1653 = vpack.c.b16 %v1619, %v1618
        %v1654 = vpack.c.b16 %v1621, %v1620
        %v1655 = vpack.c.b16 %v1623, %v1622
        %1688 = vmatprep.subr.bf16.mxu0 0
        %1689 = vmatpush1.bf16.msra.mxu0 %v1624
        %1690 = vmatprep.subr.bf16.mxu0 0
        %1691 = vmatpush1.bf16.msra.mxu0 %v1625
        %1692 = vmatprep.subr.bf16.mxu0 0
        %1693 = vmatpush1.bf16.msra.mxu0 %v1626
        %1694 = vmatprep.subr.bf16.mxu0 0
        %1695 = vmatpush1.bf16.msra.mxu0 %v1627
        %1696 = vmatprep.subr.bf16.mxu0 0
        %1697 = vmatpush1.bf16.msra.mxu0 %v1628
        %1698 = vmatprep.subr.bf16.mxu0 0
        %1699 = vmatpush1.bf16.msra.mxu0 %v1629
        %1700 = vmatprep.subr.bf16.mxu0 0
        %1701 = vmatpush1.bf16.msra.mxu0 %v1630
        %1702 = vmatprep.subr.bf16.mxu0 0
        %1703 = vmatpush1.bf16.msra.mxu0 %v1631
        %1704 = vmatprep.subr.bf16.mxu0 0
        %1705 = vmatpush1.bf16.msra.mxu0 %v1632
        %1706 = vmatprep.subr.bf16.mxu0 0
        %1707 = vmatpush1.bf16.msra.mxu0 %v1633
        %1708 = vmatprep.subr.bf16.mxu0 0
        %1709 = vmatpush1.bf16.msra.mxu0 %v1634
        %1710 = vmatprep.subr.bf16.mxu0 0
        %1711 = vmatpush1.bf16.msra.mxu0 %v1635
        %1712 = vmatprep.subr.bf16.mxu0 0
        %1713 = vmatpush1.bf16.msra.mxu0 %v1636
        %1714 = vmatprep.subr.bf16.mxu0 0
        %1715 = vmatpush1.bf16.msra.mxu0 %v1637
        %1716 = vmatprep.subr.bf16.mxu0 0
        %1717 = vmatpush1.bf16.msra.mxu0 %v1638
        %1718 = vmatprep.subr.bf16.mxu0 0
        %1719 = vmatpush1.bf16.msra.mxu0 %v1639
        %1720 = vmatprep.mubr.bf16.mxu0 %v1241
        %1721 = vmatmul.mubr.bf16.gmra.mrb[0].mxu0 %v1240
        %v1722 = vpop.f32.mrb[0].mxu0
        %v1723 = vadd.f32 0.0, %v1722
        %v1724 = vpop.f32.mrb[0].mxu0
        %v1725 = vpop.f32.mrb[0].mxu0
        %v1726 = vadd.f32 0.0, %v1725
        %v1727 = vpop.f32.mrb[0].mxu0
        %1728 = vmatprep.mubr.bf16.mxu0 %v1245
        %1729 = vmatmul.mubr.bf16.gmra.mrb[0].mxu0 %v1244
        %v1730 = vpop.f32.mrb[0].mxu0
        %v1731 = vadd.f32 0.0, %v1730
        %v1732 = vpop.f32.mrb[0].mxu0
        %v1733 = vpop.f32.mrb[0].mxu0
        %v1734 = vadd.f32 0.0, %v1733
        %v1735 = vpop.f32.mrb[0].mxu0
        %1736 = vmatprep.mubr.bf16.mxu0 %v1249
        %1737 = vmatmul.mubr.bf16.gmra.mrb[0].mxu0 %v1248
        %v1738 = vpop.f32.mrb[0].mxu0
        %v1739 = vadd.f32 0.0, %v1738
        %v1740 = vpop.f32.mrb[0].mxu0
        %v1741 = vpop.f32.mrb[0].mxu0
        %v1742 = vadd.f32 0.0, %v1741
        %v1743 = vpop.f32.mrb[0].mxu0
        %1744 = vmatprep.mubr.bf16.mxu0 %v1253
        %1745 = vmatmul.mubr.bf16.gmra.mrb[0].mxu0 %v1252
        %v1746 = vpop.f32.mrb[0].mxu0
        %v1747 = vadd.f32 0.0, %v1746
        %v1748 = vpop.f32.mrb[0].mxu0
        %v1749 = vpop.f32.mrb[0].mxu0
        %v1750 = vadd.f32 0.0, %v1749
        %v1751 = vpop.f32.mrb[0].mxu0
        %1752 = vmatprep.mubr.bf16.mxu0 %v1257
        %1753 = vmatmul.mubr.bf16.gmra.mrb[0].mxu0 %v1256
        %v1754 = vpop.f32.mrb[0].mxu0
        %v1755 = vadd.f32 0.0, %v1754
        %v1756 = vpop.f32.mrb[0].mxu0
        %v1757 = vpop.f32.mrb[0].mxu0
        %v1758 = vadd.f32 0.0, %v1757
        %v1759 = vpop.f32.mrb[0].mxu0
        %1760 = vmatprep.mubr.bf16.mxu0 %v1261
        %1761 = vmatmul.mubr.bf16.gmra.mrb[0].mxu0 %v1260
        %v1762 = vpop.f32.mrb[0].mxu0
        %v1763 = vadd.f32 0.0, %v1762
        %v1764 = vpop.f32.mrb[0].mxu0
        %v1765 = vpop.f32.mrb[0].mxu0
        %v1766 = vadd.f32 0.0, %v1765
        %v1767 = vpop.f32.mrb[0].mxu0
        %1768 = vmatprep.mubr.bf16.mxu0 %v1265
        %1769 = vmatmul.mubr.bf16.gmra.mrb[0].mxu0 %v1264
        %v1770 = vpop.f32.mrb[0].mxu0
        %v1771 = vadd.f32 0.0, %v1770
        %v1772 = vpop.f32.mrb[0].mxu0
        %v1773 = vpop.f32.mrb[0].mxu0
        %v1774 = vadd.f32 0.0, %v1773
        %v1775 = vpop.f32.mrb[0].mxu0
        %1776 = vmatprep.mubr.bf16.mxu0 %v1269
        %1777 = vmatmul.mubr.bf16.gmra.mrb[0].mxu0 %v1268
        %v1778 = vpop.f32.mrb[0].mxu0
        %v1779 = vadd.f32 0.0, %v1778
        %v1780 = vpop.f32.mrb[0].mxu0
        %v1781 = vpop.f32.mrb[0].mxu0
        %v1782 = vadd.f32 0.0, %v1781
        %v1783 = vpop.f32.mrb[0].mxu0
        %1784 = vmatprep.mubr.bf16.mxu0 %v1273
        %1785 = vmatmul.mubr.bf16.gmra.mrb[0].mxu0 %v1272
        %v1786 = vpop.f32.mrb[0].mxu0
        %v1787 = vadd.f32 0.0, %v1786
        %v1788 = vpop.f32.mrb[0].mxu0
        %v1789 = vpop.f32.mrb[0].mxu0
        %v1790 = vadd.f32 0.0, %v1789
        %v1791 = vpop.f32.mrb[0].mxu0
        %1792 = vmatprep.mubr.bf16.mxu0 %v1277
        %1793 = vmatmul.mubr.bf16.gmra.mrb[0].mxu0 %v1276
        %v1794 = vpop.f32.mrb[0].mxu0
        %v1795 = vadd.f32 0.0, %v1794
        %v1796 = vpop.f32.mrb[0].mxu0
        %v1797 = vpop.f32.mrb[0].mxu0
        %v1798 = vadd.f32 0.0, %v1797
        %v1799 = vpop.f32.mrb[0].mxu0
        %1800 = vmatprep.mubr.bf16.mxu0 %v1281
        %1801 = vmatmul.mubr.bf16.gmra.mrb[0].mxu0 %v1280
        %v1802 = vpop.f32.mrb[0].mxu0
        %v1803 = vadd.f32 0.0, %v1802
        %v1804 = vpop.f32.mrb[0].mxu0
        %v1805 = vpop.f32.mrb[0].mxu0
        %v1806 = vadd.f32 0.0, %v1805
        %v1807 = vpop.f32.mrb[0].mxu0
        %1808 = vmatprep.mubr.bf16.mxu0 %v1285
        %1809 = vmatmul.mubr.bf16.gmra.mrb[0].mxu0 %v1284
        %v1810 = vpop.f32.mrb[0].mxu0
        %v1811 = vadd.f32 0.0, %v1810
        %v1812 = vpop.f32.mrb[0].mxu0
        %v1813 = vpop.f32.mrb[0].mxu0
        %v1814 = vadd.f32 0.0, %v1813
        %v1815 = vpop.f32.mrb[0].mxu0
        %1816 = vmatprep.mubr.bf16.mxu0 %v1289
        %1817 = vmatmul.mubr.bf16.gmra.mrb[0].mxu0 %v1288
        %v1818 = vpop.f32.mrb[0].mxu0
        %v1819 = vadd.f32 0.0, %v1818
        %v1820 = vpop.f32.mrb[0].mxu0
        %v1821 = vpop.f32.mrb[0].mxu0
        %v1822 = vadd.f32 0.0, %v1821
        %v1823 = vpop.f32.mrb[0].mxu0
        %1824 = vmatprep.mubr.bf16.mxu0 %v1293
        %1825 = vmatmul.mubr.bf16.gmra.mrb[0].mxu0 %v1292
        %v1826 = vpop.f32.mrb[0].mxu0
        %v1827 = vadd.f32 0.0, %v1826
        %v1828 = vpop.f32.mrb[0].mxu0
        %v1829 = vpop.f32.mrb[0].mxu0
        %v1830 = vadd.f32 0.0, %v1829
        %v1831 = vpop.f32.mrb[0].mxu0
        %1832 = vmatprep.mubr.bf16.mxu0 %v1297
        %1833 = vmatmul.mubr.bf16.gmra.mrb[0].mxu0 %v1296
        %v1834 = vpop.f32.mrb[0].mxu0
        %v1835 = vadd.f32 0.0, %v1834
        %v1836 = vpop.f32.mrb[0].mxu0
        %v1837 = vpop.f32.mrb[0].mxu0
        %v1838 = vadd.f32 0.0, %v1837
        %v1839 = vpop.f32.mrb[0].mxu0
        %1840 = vmatprep.mubr.bf16.mxu0 %v1301
        %1841 = vmatmul.mubr.bf16.gmra.mrb[0].mxu0 %v1300
        %v1842 = vpop.f32.mrb[0].mxu0
        %v1843 = vadd.f32 0.0, %v1842
        %v1844 = vpop.f32.mrb[0].mxu0
        %v1845 = vpop.f32.mrb[0].mxu0
        %v1846 = vadd.f32 0.0, %v1845
        %v1847 = vpop.f32.mrb[0].mxu0
        %1848 = vmatprep.mubr.bf16.mxu0 %v1305
        %1849 = vmatmul.mubr.bf16.gmra.mrb[0].mxu0 %v1304
        %v1850 = vpop.f32.mrb[0].mxu0
        %v1851 = vadd.f32 0.0, %v1850
        %v1852 = vpop.f32.mrb[0].mxu0
        %v1853 = vpop.f32.mrb[0].mxu0
        %v1854 = vadd.f32 0.0, %v1853
        %v1855 = vpop.f32.mrb[0].mxu0
        %1856 = vmatprep.mubr.bf16.mxu0 %v1309
        %1857 = vmatmul.mubr.bf16.gmra.mrb[0].mxu0 %v1308
        %v1858 = vpop.f32.mrb[0].mxu0
        %v1859 = vadd.f32 0.0, %v1858
        %v1860 = vpop.f32.mrb[0].mxu0
        %v1861 = vpop.f32.mrb[0].mxu0
        %v1862 = vadd.f32 0.0, %v1861
        %v1863 = vpop.f32.mrb[0].mxu0
        %1864 = vmatprep.mubr.bf16.mxu0 %v1313
        %1865 = vmatmul.mubr.bf16.gmra.mrb[0].mxu0 %v1312
        %v1866 = vpop.f32.mrb[0].mxu0
        %v1867 = vadd.f32 0.0, %v1866
        %v1868 = vpop.f32.mrb[0].mxu0
        %v1869 = vpop.f32.mrb[0].mxu0
        %v1870 = vadd.f32 0.0, %v1869
        %v1871 = vpop.f32.mrb[0].mxu0
        %1872 = vmatprep.mubr.bf16.mxu0 %v1317
        %1873 = vmatmul.mubr.bf16.gmra.mrb[0].mxu0 %v1316
        %v1874 = vpop.f32.mrb[0].mxu0
        %v1875 = vadd.f32 0.0, %v1874
        %v1876 = vpop.f32.mrb[0].mxu0
        %v1877 = vpop.f32.mrb[0].mxu0
        %v1878 = vadd.f32 0.0, %v1877
        %v1879 = vpop.f32.mrb[0].mxu0
        %1880 = vmatprep.mubr.bf16.mxu0 %v1321
        %1881 = vmatmul.mubr.bf16.gmra.mrb[0].mxu0 %v1320
        %v1882 = vpop.f32.mrb[0].mxu0
        %v1883 = vadd.f32 0.0, %v1882
        %v1884 = vpop.f32.mrb[0].mxu0
        %v1885 = vpop.f32.mrb[0].mxu0
        %v1886 = vadd.f32 0.0, %v1885
        %v1887 = vpop.f32.mrb[0].mxu0
        %1888 = vmatprep.mubr.bf16.mxu0 %v1325
        %1889 = vmatmul.mubr.bf16.gmra.mrb[0].mxu0 %v1324
        %v1890 = vpop.f32.mrb[0].mxu0
        %v1891 = vadd.f32 0.0, %v1890
        %v1892 = vpop.f32.mrb[0].mxu0
        %v1893 = vpop.f32.mrb[0].mxu0
        %v1894 = vadd.f32 0.0, %v1893
        %v1895 = vpop.f32.mrb[0].mxu0
        %1896 = vmatprep.mubr.bf16.mxu0 %v1329
        %1897 = vmatmul.mubr.bf16.gmra.mrb[0].mxu0 %v1328
        %v1898 = vpop.f32.mrb[0].mxu0
        %v1899 = vadd.f32 0.0, %v1898
        %v1900 = vpop.f32.mrb[0].mxu0
        %v1901 = vpop.f32.mrb[0].mxu0
        %v1902 = vadd.f32 0.0, %v1901
        %v1903 = vpop.f32.mrb[0].mxu0
        %1904 = vmatprep.mubr.bf16.mxu0 %v1333
        %1905 = vmatmul.mubr.bf16.gmra.mrb[0].mxu0 %v1332
        %v1906 = vpop.f32.mrb[0].mxu0
        %v1907 = vadd.f32 0.0, %v1906
        %v1908 = vpop.f32.mrb[0].mxu0
        %v1909 = vpop.f32.mrb[0].mxu0
        %v1910 = vadd.f32 0.0, %v1909
        %v1911 = vpop.f32.mrb[0].mxu0
        %1912 = vmatprep.mubr.bf16.mxu0 %v1337
        %1913 = vmatmul.mubr.bf16.gmra.mrb[0].mxu0 %v1336
        %v1914 = vpop.f32.mrb[0].mxu0
        %v1915 = vadd.f32 0.0, %v1914
        %v1916 = vpop.f32.mrb[0].mxu0
        %v1917 = vpop.f32.mrb[0].mxu0
        %v1918 = vadd.f32 0.0, %v1917
        %v1919 = vpop.f32.mrb[0].mxu0
        %1920 = vmatprep.mubr.bf16.mxu0 %v1341
        %1921 = vmatmul.mubr.bf16.gmra.mrb[0].mxu0 %v1340
        %v1922 = vpop.f32.mrb[0].mxu0
        %v1923 = vadd.f32 0.0, %v1922
        %v1924 = vpop.f32.mrb[0].mxu0
        %v1925 = vpop.f32.mrb[0].mxu0
        %v1926 = vadd.f32 0.0, %v1925
        %v1927 = vpop.f32.mrb[0].mxu0
        %1928 = vmatprep.mubr.bf16.mxu0 %v1345
        %1929 = vmatmul.mubr.bf16.gmra.mrb[0].mxu0 %v1344
        %v1930 = vpop.f32.mrb[0].mxu0
        %v1931 = vadd.f32 0.0, %v1930
        %v1932 = vpop.f32.mrb[0].mxu0
        %v1933 = vpop.f32.mrb[0].mxu0
        %v1934 = vadd.f32 0.0, %v1933
        %v1935 = vpop.f32.mrb[0].mxu0
        %1936 = vmatprep.mubr.bf16.mxu0 %v1349
        %1937 = vmatmul.mubr.bf16.gmra.mrb[0].mxu0 %v1348
        %v1938 = vpop.f32.mrb[0].mxu0
        %v1939 = vadd.f32 0.0, %v1938
        %v1940 = vpop.f32.mrb[0].mxu0
        %v1941 = vpop.f32.mrb[0].mxu0
        %v1942 = vadd.f32 0.0, %v1941
        %v1943 = vpop.f32.mrb[0].mxu0
        %1944 = vmatprep.mubr.bf16.mxu0 %v1353
        %1945 = vmatmul.mubr.bf16.gmra.mrb[0].mxu0 %v1352
        %v1946 = vpop.f32.mrb[0].mxu0
        %v1947 = vadd.f32 0.0, %v1946
        %v1948 = vpop.f32.mrb[0].mxu0
        %v1949 = vpop.f32.mrb[0].mxu0
        %v1950 = vadd.f32 0.0, %v1949
        %v1951 = vpop.f32.mrb[0].mxu0
        %1952 = vmatprep.mubr.bf16.mxu0 %v1357
        %1953 = vmatmul.mubr.bf16.gmra.mrb[0].mxu0 %v1356
        %v1954 = vpop.f32.mrb[0].mxu0
        %v1955 = vadd.f32 0.0, %v1954
        %v1956 = vpop.f32.mrb[0].mxu0
        %v1957 = vpop.f32.mrb[0].mxu0
        %v1958 = vadd.f32 0.0, %v1957
        %v1959 = vpop.f32.mrb[0].mxu0
        %1960 = vmatprep.mubr.bf16.mxu0 %v1361
        %1961 = vmatmul.mubr.bf16.gmra.mrb[0].mxu0 %v1360
        %v1962 = vpop.f32.mrb[0].mxu0
        %v1963 = vadd.f32 0.0, %v1962
        %v1964 = vpop.f32.mrb[0].mxu0
        %v1965 = vpop.f32.mrb[0].mxu0
        %v1966 = vadd.f32 0.0, %v1965
        %v1967 = vpop.f32.mrb[0].mxu0
        %1968 = vmatprep.mubr.bf16.mxu0 %v1365
        %1969 = vmatmul.mubr.bf16.gmra.mrb[0].mxu0 %v1364
        %v1970 = vpop.f32.mrb[0].mxu0
        %v1971 = vadd.f32 0.0, %v1970
        %v1972 = vpop.f32.mrb[0].mxu0
        %v1973 = vpop.f32.mrb[0].mxu0
        %v1974 = vadd.f32 0.0, %v1973
        %v1975 = vpop.f32.mrb[0].mxu0
        %1976 = vdwg.mxu0
        %1977 = vmatprep.subr.bf16.mxu0 0
        %1978 = vmatpush1.bf16.msra.mxu0 %v1640
        %1979 = vmatprep.subr.bf16.mxu0 0
        %1980 = vmatpush1.bf16.msra.mxu0 %v1641
        %1981 = vmatprep.subr.bf16.mxu0 0
        %1982 = vmatpush1.bf16.msra.mxu0 %v1642
        %1983 = vmatprep.subr.bf16.mxu0 0
        %1984 = vmatpush1.bf16.msra.mxu0 %v1643
        %1985 = vmatprep.subr.bf16.mxu0 0
        %1986 = vmatpush1.bf16.msra.mxu0 %v1644
        %1987 = vmatprep.subr.bf16.mxu0 0
        %1988 = vmatpush1.bf16.msra.mxu0 %v1645
        %1989 = vmatprep.subr.bf16.mxu0 0
        %1990 = vmatpush1.bf16.msra.mxu0 %v1646
        %1991 = vmatprep.subr.bf16.mxu0 0
        %1992 = vmatpush1.bf16.msra.mxu0 %v1647
        %1993 = vmatprep.subr.bf16.mxu0 0
        %1994 = vmatpush1.bf16.msra.mxu0 %v1648
        %1995 = vmatprep.subr.bf16.mxu0 0
        %1996 = vmatpush1.bf16.msra.mxu0 %v1649
        %1997 = vmatprep.subr.bf16.mxu0 0
        %1998 = vmatpush1.bf16.msra.mxu0 %v1650
        %1999 = vmatprep.subr.bf16.mxu0 0
        %2000 = vmatpush1.bf16.msra.mxu0 %v1651
        %2001 = vmatprep.subr.bf16.mxu0 0
        %2002 = vmatpush1.bf16.msra.mxu0 %v1652
        %2003 = vmatprep.subr.bf16.mxu0 0
        %2004 = vmatpush1.bf16.msra.mxu0 %v1653
        %2005 = vmatprep.subr.bf16.mxu0 0
        %2006 = vmatpush1.bf16.msra.mxu0 %v1654
        %2007 = vmatprep.subr.bf16.mxu0 0
        %2008 = vmatpush1.bf16.msra.mxu0 %v1655
        %2009 = vmatprep.mubr.bf16.mxu0 %v1243
        %2010 = vmatmul.mubr.bf16.gmra.mrb[0].mxu0 %v1242
        %v2011 = vpop.f32.mrb[0].mxu0
        %v2012 = vadd.f32 %v1723, %v2011
        %v2013 = vpop.f32.mrb[0].mxu0
        %v2014 = vpop.f32.mrb[0].mxu0
        %v2015 = vadd.f32 %v1726, %v2014
        %v2016 = vpop.f32.mrb[0].mxu0
        %2017 = vmatprep.mubr.bf16.mxu0 %v1247
        %2018 = vmatmul.mubr.bf16.gmra.mrb[0].mxu0 %v1246
        %v2019 = vpop.f32.mrb[0].mxu0
        %v2020 = vadd.f32 %v1731, %v2019
        %v2021 = vpop.f32.mrb[0].mxu0
        %v2022 = vpop.f32.mrb[0].mxu0
        %v2023 = vadd.f32 %v1734, %v2022
        %v2024 = vpop.f32.mrb[0].mxu0
        %2025 = vmatprep.mubr.bf16.mxu0 %v1251
        %2026 = vmatmul.mubr.bf16.gmra.mrb[0].mxu0 %v1250
        %v2027 = vpop.f32.mrb[0].mxu0
        %v2028 = vadd.f32 %v1739, %v2027
        %v2029 = vpop.f32.mrb[0].mxu0
        %v2030 = vpop.f32.mrb[0].mxu0
        %v2031 = vadd.f32 %v1742, %v2030
        %v2032 = vpop.f32.mrb[0].mxu0
        %2033 = vmatprep.mubr.bf16.mxu0 %v1255
        %2034 = vmatmul.mubr.bf16.gmra.mrb[0].mxu0 %v1254
        %v2035 = vpop.f32.mrb[0].mxu0
        %v2036 = vadd.f32 %v1747, %v2035
        %v2037 = vpop.f32.mrb[0].mxu0
        %v2038 = vpop.f32.mrb[0].mxu0
        %v2039 = vadd.f32 %v1750, %v2038
        %v2040 = vpop.f32.mrb[0].mxu0
        %2041 = vmatprep.mubr.bf16.mxu0 %v1259
        %2042 = vmatmul.mubr.bf16.gmra.mrb[0].mxu0 %v1258
        %v2043 = vpop.f32.mrb[0].mxu0
        %v2044 = vadd.f32 %v1755, %v2043
        %v2045 = vpop.f32.mrb[0].mxu0
        %v2046 = vpop.f32.mrb[0].mxu0
        %v2047 = vadd.f32 %v1758, %v2046
        %v2048 = vpop.f32.mrb[0].mxu0
        %2049 = vmatprep.mubr.bf16.mxu0 %v1263
        %2050 = vmatmul.mubr.bf16.gmra.mrb[0].mxu0 %v1262
        %v2051 = vpop.f32.mrb[0].mxu0
        %v2052 = vadd.f32 %v1763, %v2051
        %v2053 = vpop.f32.mrb[0].mxu0
        %v2054 = vpop.f32.mrb[0].mxu0
        %v2055 = vadd.f32 %v1766, %v2054
        %v2056 = vpop.f32.mrb[0].mxu0
        %2057 = vmatprep.mubr.bf16.mxu0 %v1267
        %2058 = vmatmul.mubr.bf16.gmra.mrb[0].mxu0 %v1266
        %v2059 = vpop.f32.mrb[0].mxu0
        %v2060 = vadd.f32 %v1771, %v2059
        %v2061 = vpop.f32.mrb[0].mxu0
        %v2062 = vpop.f32.mrb[0].mxu0
        %v2063 = vadd.f32 %v1774, %v2062
        %v2064 = vpop.f32.mrb[0].mxu0
        %2065 = vmatprep.mubr.bf16.mxu0 %v1271
        %2066 = vmatmul.mubr.bf16.gmra.mrb[0].mxu0 %v1270
        %v2067 = vpop.f32.mrb[0].mxu0
        %v2068 = vadd.f32 %v1779, %v2067
        %v2069 = vpop.f32.mrb[0].mxu0
        %v2070 = vpop.f32.mrb[0].mxu0
        %v2071 = vadd.f32 %v1782, %v2070
        %v2072 = vpop.f32.mrb[0].mxu0
        %2073 = vmatprep.mubr.bf16.mxu0 %v1275
        %2074 = vmatmul.mubr.bf16.gmra.mrb[0].mxu0 %v1274
        %v2075 = vpop.f32.mrb[0].mxu0
        %v2076 = vadd.f32 %v1787, %v2075
        %v2077 = vpop.f32.mrb[0].mxu0
        %v2078 = vpop.f32.mrb[0].mxu0
        %v2079 = vadd.f32 %v1790, %v2078
        %v2080 = vpop.f32.mrb[0].mxu0
        %2081 = vmatprep.mubr.bf16.mxu0 %v1279
        %2082 = vmatmul.mubr.bf16.gmra.mrb[0].mxu0 %v1278
        %v2083 = vpop.f32.mrb[0].mxu0
        %v2084 = vadd.f32 %v1795, %v2083
        %v2085 = vpop.f32.mrb[0].mxu0
        %v2086 = vpop.f32.mrb[0].mxu0
        %v2087 = vadd.f32 %v1798, %v2086
        %v2088 = vpop.f32.mrb[0].mxu0
        %2089 = vmatprep.mubr.bf16.mxu0 %v1283
        %2090 = vmatmul.mubr.bf16.gmra.mrb[0].mxu0 %v1282
        %v2091 = vpop.f32.mrb[0].mxu0
        %v2092 = vadd.f32 %v1803, %v2091
        %v2093 = vpop.f32.mrb[0].mxu0
        %v2094 = vpop.f32.mrb[0].mxu0
        %v2095 = vadd.f32 %v1806, %v2094
        %v2096 = vpop.f32.mrb[0].mxu0
        %2097 = vmatprep.mubr.bf16.mxu0 %v1287
        %2098 = vmatmul.mubr.bf16.gmra.mrb[0].mxu0 %v1286
        %v2099 = vpop.f32.mrb[0].mxu0
        %v2100 = vadd.f32 %v1811, %v2099
        %v2101 = vpop.f32.mrb[0].mxu0
        %v2102 = vpop.f32.mrb[0].mxu0
        %v2103 = vadd.f32 %v1814, %v2102
        %v2104 = vpop.f32.mrb[0].mxu0
        %2105 = vmatprep.mubr.bf16.mxu0 %v1291
        %2106 = vmatmul.mubr.bf16.gmra.mrb[0].mxu0 %v1290
        %v2107 = vpop.f32.mrb[0].mxu0
        %v2108 = vadd.f32 %v1819, %v2107
        %v2109 = vpop.f32.mrb[0].mxu0
        %v2110 = vpop.f32.mrb[0].mxu0
        %v2111 = vadd.f32 %v1822, %v2110
        %v2112 = vpop.f32.mrb[0].mxu0
        %2113 = vmatprep.mubr.bf16.mxu0 %v1295
        %2114 = vmatmul.mubr.bf16.gmra.mrb[0].mxu0 %v1294
        %v2115 = vpop.f32.mrb[0].mxu0
        %v2116 = vadd.f32 %v1827, %v2115
        %v2117 = vpop.f32.mrb[0].mxu0
        %v2118 = vpop.f32.mrb[0].mxu0
        %v2119 = vadd.f32 %v1830, %v2118
        %v2120 = vpop.f32.mrb[0].mxu0
        %2121 = vmatprep.mubr.bf16.mxu0 %v1299
        %2122 = vmatmul.mubr.bf16.gmra.mrb[0].mxu0 %v1298
        %v2123 = vpop.f32.mrb[0].mxu0
        %v2124 = vadd.f32 %v1835, %v2123
        %v2125 = vpop.f32.mrb[0].mxu0
        %v2126 = vpop.f32.mrb[0].mxu0
        %v2127 = vadd.f32 %v1838, %v2126
        %v2128 = vpop.f32.mrb[0].mxu0
        %2129 = vmatprep.mubr.bf16.mxu0 %v1303
        %2130 = vmatmul.mubr.bf16.gmra.mrb[0].mxu0 %v1302
        %v2131 = vpop.f32.mrb[0].mxu0
        %v2132 = vadd.f32 %v1843, %v2131
        %v2133 = vpop.f32.mrb[0].mxu0
        %v2134 = vpop.f32.mrb[0].mxu0
        %v2135 = vadd.f32 %v1846, %v2134
        %v2136 = vpop.f32.mrb[0].mxu0
        %2137 = vmatprep.mubr.bf16.mxu0 %v1307
        %2138 = vmatmul.mubr.bf16.gmra.mrb[0].mxu0 %v1306
        %v2139 = vpop.f32.mrb[0].mxu0
        %v2140 = vadd.f32 %v1851, %v2139
        %v2141 = vpop.f32.mrb[0].mxu0
        %v2142 = vpop.f32.mrb[0].mxu0
        %v2143 = vadd.f32 %v1854, %v2142
        %v2144 = vpop.f32.mrb[0].mxu0
        %2145 = vmatprep.mubr.bf16.mxu0 %v1311
        %2146 = vmatmul.mubr.bf16.gmra.mrb[0].mxu0 %v1310
        %v2147 = vpop.f32.mrb[0].mxu0
        %v2148 = vadd.f32 %v1859, %v2147
        %v2149 = vpop.f32.mrb[0].mxu0
        %v2150 = vpop.f32.mrb[0].mxu0
        %v2151 = vadd.f32 %v1862, %v2150
        %v2152 = vpop.f32.mrb[0].mxu0
        %2153 = vmatprep.mubr.bf16.mxu0 %v1315
        %2154 = vmatmul.mubr.bf16.gmra.mrb[0].mxu0 %v1314
        %v2155 = vpop.f32.mrb[0].mxu0
        %v2156 = vadd.f32 %v1867, %v2155
        %v2157 = vpop.f32.mrb[0].mxu0
        %v2158 = vpop.f32.mrb[0].mxu0
        %v2159 = vadd.f32 %v1870, %v2158
        %v2160 = vpop.f32.mrb[0].mxu0
        %2161 = vmatprep.mubr.bf16.mxu0 %v1319
        %2162 = vmatmul.mubr.bf16.gmra.mrb[0].mxu0 %v1318
        %v2163 = vpop.f32.mrb[0].mxu0
        %v2164 = vadd.f32 %v1875, %v2163
        %v2165 = vpop.f32.mrb[0].mxu0
        %v2166 = vpop.f32.mrb[0].mxu0
        %v2167 = vadd.f32 %v1878, %v2166
        %v2168 = vpop.f32.mrb[0].mxu0
        %2169 = vmatprep.mubr.bf16.mxu0 %v1323
        %2170 = vmatmul.mubr.bf16.gmra.mrb[0].mxu0 %v1322
        %v2171 = vpop.f32.mrb[0].mxu0
        %v2172 = vadd.f32 %v1883, %v2171
        %v2173 = vpop.f32.mrb[0].mxu0
        %v2174 = vpop.f32.mrb[0].mxu0
        %v2175 = vadd.f32 %v1886, %v2174
        %v2176 = vpop.f32.mrb[0].mxu0
        %2177 = vmatprep.mubr.bf16.mxu0 %v1327
        %2178 = vmatmul.mubr.bf16.gmra.mrb[0].mxu0 %v1326
        %v2179 = vpop.f32.mrb[0].mxu0
        %v2180 = vadd.f32 %v1891, %v2179
        %v2181 = vpop.f32.mrb[0].mxu0
        %v2182 = vpop.f32.mrb[0].mxu0
        %v2183 = vadd.f32 %v1894, %v2182
        %v2184 = vpop.f32.mrb[0].mxu0
        %2185 = vmatprep.mubr.bf16.mxu0 %v1331
        %2186 = vmatmul.mubr.bf16.gmra.mrb[0].mxu0 %v1330
        %v2187 = vpop.f32.mrb[0].mxu0
        %v2188 = vadd.f32 %v1899, %v2187
        %v2189 = vpop.f32.mrb[0].mxu0
        %v2190 = vpop.f32.mrb[0].mxu0
        %v2191 = vadd.f32 %v1902, %v2190
        %v2192 = vpop.f32.mrb[0].mxu0
        %2193 = vmatprep.mubr.bf16.mxu0 %v1335
        %2194 = vmatmul.mubr.bf16.gmra.mrb[0].mxu0 %v1334
        %v2195 = vpop.f32.mrb[0].mxu0
        %v2196 = vadd.f32 %v1907, %v2195
        %v2197 = vpop.f32.mrb[0].mxu0
        %v2198 = vpop.f32.mrb[0].mxu0
        %v2199 = vadd.f32 %v1910, %v2198
        %v2200 = vpop.f32.mrb[0].mxu0
        %2201 = vmatprep.mubr.bf16.mxu0 %v1339
        %2202 = vmatmul.mubr.bf16.gmra.mrb[0].mxu0 %v1338
        %v2203 = vpop.f32.mrb[0].mxu0
        %v2204 = vadd.f32 %v1915, %v2203
        %v2205 = vpop.f32.mrb[0].mxu0
        %v2206 = vpop.f32.mrb[0].mxu0
        %v2207 = vadd.f32 %v1918, %v2206
        %v2208 = vpop.f32.mrb[0].mxu0
        %2209 = vmatprep.mubr.bf16.mxu0 %v1343
        %2210 = vmatmul.mubr.bf16.gmra.mrb[0].mxu0 %v1342
        %v2211 = vpop.f32.mrb[0].mxu0
        %v2212 = vadd.f32 %v1923, %v2211
        %v2213 = vpop.f32.mrb[0].mxu0
        %v2214 = vpop.f32.mrb[0].mxu0
        %v2215 = vadd.f32 %v1926, %v2214
        %v2216 = vpop.f32.mrb[0].mxu0
        %2217 = vmatprep.mubr.bf16.mxu0 %v1347
        %2218 = vmatmul.mubr.bf16.gmra.mrb[0].mxu0 %v1346
        %v2219 = vpop.f32.mrb[0].mxu0
        %v2220 = vadd.f32 %v1931, %v2219
        %v2221 = vpop.f32.mrb[0].mxu0
        %v2222 = vpop.f32.mrb[0].mxu0
        %v2223 = vadd.f32 %v1934, %v2222
        %v2224 = vpop.f32.mrb[0].mxu0
        %2225 = vmatprep.mubr.bf16.mxu0 %v1351
        %2226 = vmatmul.mubr.bf16.gmra.mrb[0].mxu0 %v1350
        %v2227 = vpop.f32.mrb[0].mxu0
        %v2228 = vadd.f32 %v1939, %v2227
        %v2229 = vpop.f32.mrb[0].mxu0
        %v2230 = vpop.f32.mrb[0].mxu0
        %v2231 = vadd.f32 %v1942, %v2230
        %v2232 = vpop.f32.mrb[0].mxu0
        %2233 = vmatprep.mubr.bf16.mxu0 %v1355
        %2234 = vmatmul.mubr.bf16.gmra.mrb[0].mxu0 %v1354
        %v2235 = vpop.f32.mrb[0].mxu0
        %v2236 = vadd.f32 %v1947, %v2235
        %v2237 = vpop.f32.mrb[0].mxu0
        %v2238 = vpop.f32.mrb[0].mxu0
        %v2239 = vadd.f32 %v1950, %v2238
        %v2240 = vpop.f32.mrb[0].mxu0
        %2241 = vmatprep.mubr.bf16.mxu0 %v1359
        %2242 = vmatmul.mubr.bf16.gmra.mrb[0].mxu0 %v1358
        %v2243 = vpop.f32.mrb[0].mxu0
        %v2244 = vadd.f32 %v1955, %v2243
        %v2245 = vpop.f32.mrb[0].mxu0
        %v2246 = vpop.f32.mrb[0].mxu0
        %v2247 = vadd.f32 %v1958, %v2246
        %v2248 = vpop.f32.mrb[0].mxu0
        %2249 = vmatprep.mubr.bf16.mxu0 %v1363
        %2250 = vmatmul.mubr.bf16.gmra.mrb[0].mxu0 %v1362
        %v2251 = vpop.f32.mrb[0].mxu0
        %v2252 = vadd.f32 %v1963, %v2251
        %v2253 = vpop.f32.mrb[0].mxu0
        %v2254 = vpop.f32.mrb[0].mxu0
        %v2255 = vadd.f32 %v1966, %v2254
        %v2256 = vpop.f32.mrb[0].mxu0
        %2257 = vmatprep.mubr.bf16.mxu0 %v1367
        %2258 = vmatmul.mubr.bf16.gmra.mrb[0].mxu0 %v1366
        %v2259 = vpop.f32.mrb[0].mxu0
        %v2260 = vadd.f32 %v1971, %v2259
        %v2261 = vpop.f32.mrb[0].mxu0
        %v2262 = vpop.f32.mrb[0].mxu0
        %v2263 = vadd.f32 %v1974, %v2262
        %v2264 = vpop.f32.mrb[0].mxu0
        %2265 = vdwg.mxu0
        %v2266 = vadd.f32 %v600, %v2012
        %v2267 = vadd.f32 %v601, %v2015
        %v2268 = vadd.f32 %v602, %v2020
        %v2269 = vadd.f32 %v603, %v2023
        %v2270 = vadd.f32 %v604, %v2028
        %v2271 = vadd.f32 %v605, %v2031
        %v2272 = vadd.f32 %v606, %v2036
        %v2273 = vadd.f32 %v607, %v2039
        %v2274 = vadd.f32 %v608, %v2044
        %v2275 = vadd.f32 %v609, %v2047
        %v2276 = vadd.f32 %v610, %v2052
        %v2277 = vadd.f32 %v611, %v2055
        %v2278 = vadd.f32 %v612, %v2060
        %v2279 = vadd.f32 %v613, %v2063
        %v2280 = vadd.f32 %v614, %v2068
        %v2281 = vadd.f32 %v615, %v2071
        %v2282 = vadd.f32 %v616, %v2076
        %v2283 = vadd.f32 %v617, %v2079
        %v2284 = vadd.f32 %v618, %v2084
        %v2285 = vadd.f32 %v619, %v2087
        %v2286 = vadd.f32 %v620, %v2092
        %v2287 = vadd.f32 %v621, %v2095
        %v2288 = vadd.f32 %v622, %v2100
        %v2289 = vadd.f32 %v623, %v2103
        %v2290 = vadd.f32 %v624, %v2108
        %v2291 = vadd.f32 %v625, %v2111
        %v2292 = vadd.f32 %v626, %v2116
        %v2293 = vadd.f32 %v627, %v2119
        %v2294 = vadd.f32 %v628, %v2124
        %v2295 = vadd.f32 %v629, %v2127
        %v2296 = vadd.f32 %v630, %v2132
        %v2297 = vadd.f32 %v631, %v2135
        %v2298 = vadd.f32 %v632, %v2140
        %v2299 = vadd.f32 %v633, %v2143
        %v2300 = vadd.f32 %v634, %v2148
        %v2301 = vadd.f32 %v635, %v2151
        %v2302 = vadd.f32 %v636, %v2156
        %v2303 = vadd.f32 %v637, %v2159
        %v2304 = vadd.f32 %v638, %v2164
        %v2305 = vadd.f32 %v639, %v2167
        %v2306 = vadd.f32 %v640, %v2172
        %v2307 = vadd.f32 %v641, %v2175
        %v2308 = vadd.f32 %v642, %v2180
        %v2309 = vadd.f32 %v643, %v2183
        %v2310 = vadd.f32 %v644, %v2188
        %v2311 = vadd.f32 %v645, %v2191
        %v2312 = vadd.f32 %v646, %v2196
        %v2313 = vadd.f32 %v647, %v2199
        %v2314 = vadd.f32 %v648, %v2204
        %v2315 = vadd.f32 %v649, %v2207
        %v2316 = vadd.f32 %v650, %v2212
        %v2317 = vadd.f32 %v651, %v2215
        %v2318 = vadd.f32 %v652, %v2220
        %v2319 = vadd.f32 %v653, %v2223
        %v2320 = vadd.f32 %v654, %v2228
        %v2321 = vadd.f32 %v655, %v2231
        %v2322 = vadd.f32 %v656, %v2236
        %v2323 = vadd.f32 %v657, %v2239
        %v2324 = vadd.f32 %v658, %v2244
        %v2325 = vadd.f32 %v659, %v2247
        %v2326 = vadd.f32 %v660, %v2252
        %v2327 = vadd.f32 %v661, %v2255
        %v2328 = vadd.f32 %v662, %v2260
        %v2329 = vadd.f32 %v663, %v2263
        %2330 = vst [vmem:[#allocation2] sm:$0xff] %v2266
        %2331 = vst [vmem:[#allocation2 + $0x8] sm:$0xff] %v2267
        %2332 = vst [vmem:[#allocation2 + $0x10] sm:$0xff] %v2268
        %2333 = vst [vmem:[#allocation2 + $0x18] sm:$0xff] %v2269
        %2334 = vst [vmem:[#allocation2 + $0x20] sm:$0xff] %v2270
        %2335 = vst [vmem:[#allocation2 + $0x28] sm:$0xff] %v2271
        %2336 = vst [vmem:[#allocation2 + $0x30] sm:$0xff] %v2272
        %2337 = vst [vmem:[#allocation2 + $0x38] sm:$0xff] %v2273
        %2338 = vst [vmem:[#allocation2 + $0x40] sm:$0xff] %v2274
        %2339 = vst [vmem:[#allocation2 + $0x48] sm:$0xff] %v2275
        %2340 = vst [vmem:[#allocation2 + $0x50] sm:$0xff] %v2276
        %2341 = vst [vmem:[#allocation2 + $0x58] sm:$0xff] %v2277
        %2342 = vst [vmem:[#allocation2 + $0x60] sm:$0xff] %v2278
        %2343 = vst [vmem:[#allocation2 + $0x68] sm:$0xff] %v2279
        %2344 = vst [vmem:[#allocation2 + $0x70] sm:$0xff] %v2280
        %2345 = vst [vmem:[#allocation2 + $0x78] sm:$0xff] %v2281
        %2346 = vst [vmem:[#allocation2 + $0x80] sm:$0xff] %v2282
        %2347 = vst [vmem:[#allocation2 + $0x88] sm:$0xff] %v2283
        %2348 = vst [vmem:[#allocation2 + $0x90] sm:$0xff] %v2284
        %2349 = vst [vmem:[#allocation2 + $0x98] sm:$0xff] %v2285
        %2350 = vst [vmem:[#allocation2 + $0xa0] sm:$0xff] %v2286
        %2351 = vst [vmem:[#allocation2 + $0xa8] sm:$0xff] %v2287
        %2352 = vst [vmem:[#allocation2 + $0xb0] sm:$0xff] %v2288
        %2353 = vst [vmem:[#allocation2 + $0xb8] sm:$0xff] %v2289
        %2354 = vst [vmem:[#allocation2 + $0xc0] sm:$0xff] %v2290
        %2355 = vst [vmem:[#allocation2 + $0xc8] sm:$0xff] %v2291
        %2356 = vst [vmem:[#allocation2 + $0xd0] sm:$0xff] %v2292
        %2357 = vst [vmem:[#allocation2 + $0xd8] sm:$0xff] %v2293
        %2358 = vst [vmem:[#allocation2 + $0xe0] sm:$0xff] %v2294
        %2359 = vst [vmem:[#allocation2 + $0xe8] sm:$0xff] %v2295
        %2360 = vst [vmem:[#allocation2 + $0xf0] sm:$0xff] %v2296
        %2361 = vst [vmem:[#allocation2 + $0xf8] sm:$0xff] %v2297
        %2362 = vst [vmem:[#allocation2 + $0x100] sm:$0xff] %v2298
        %2363 = vst [vmem:[#allocation2 + $0x108] sm:$0xff] %v2299
        %2364 = vst [vmem:[#allocation2 + $0x110] sm:$0xff] %v2300
        %2365 = vst [vmem:[#allocation2 + $0x118] sm:$0xff] %v2301
        %2366 = vst [vmem:[#allocation2 + $0x120] sm:$0xff] %v2302
        %2367 = vst [vmem:[#allocation2 + $0x128] sm:$0xff] %v2303
        %2368 = vst [vmem:[#allocation2 + $0x130] sm:$0xff] %v2304
        %2369 = vst [vmem:[#allocation2 + $0x138] sm:$0xff] %v2305
        %2370 = vst [vmem:[#allocation2 + $0x140] sm:$0xff] %v2306
        %2371 = vst [vmem:[#allocation2 + $0x148] sm:$0xff] %v2307
        %2372 = vst [vmem:[#allocation2 + $0x150] sm:$0xff] %v2308
        %2373 = vst [vmem:[#allocation2 + $0x158] sm:$0xff] %v2309
        %2374 = vst [vmem:[#allocation2 + $0x160] sm:$0xff] %v2310
        %2375 = vst [vmem:[#allocation2 + $0x168] sm:$0xff] %v2311
        %2376 = vst [vmem:[#allocation2 + $0x170] sm:$0xff] %v2312
        %2377 = vst [vmem:[#allocation2 + $0x178] sm:$0xff] %v2313
        %2378 = vst [vmem:[#allocation2 + $0x180] sm:$0xff] %v2314
        %2379 = vst [vmem:[#allocation2 + $0x188] sm:$0xff] %v2315
        %2380 = vst [vmem:[#allocation2 + $0x190] sm:$0xff] %v2316
        %2381 = vst [vmem:[#allocation2 + $0x198] sm:$0xff] %v2317
        %2382 = vst [vmem:[#allocation2 + $0x1a0] sm:$0xff] %v2318
        %2383 = vst [vmem:[#allocation2 + $0x1a8] sm:$0xff] %v2319
        %2384 = vst [vmem:[#allocation2 + $0x1b0] sm:$0xff] %v2320
        %2385 = vst [vmem:[#allocation2 + $0x1b8] sm:$0xff] %v2321
        %2386 = vst [vmem:[#allocation2 + $0x1c0] sm:$0xff] %v2322
        %2387 = vst [vmem:[#allocation2 + $0x1c8] sm:$0xff] %v2323
        %2388 = vst [vmem:[#allocation2 + $0x1d0] sm:$0xff] %v2324
        %2389 = vst [vmem:[#allocation2 + $0x1d8] sm:$0xff] %v2325
        %2390 = vst [vmem:[#allocation2 + $0x1e0] sm:$0xff] %v2326
        %2391 = vst [vmem:[#allocation2 + $0x1e8] sm:$0xff] %v2327
        %2392 = vst [vmem:[#allocation2 + $0x1f0] sm:$0xff] %v2328
        %2393 = vst [vmem:[#allocation2 + $0x1f8] sm:$0xff] %v2329
        %p2394 = scmp.eq.s32.totalorder %s41, 1
        // Predicated region
        $region89: #{tpu_custom_call.1} parent=51 // pred_check
          %p2395 = pneg %p2394
        $region90: #{tpu_custom_call.1} parent=51 // pred_check_branch
          %2397 = sbr.rel (%p2395) target = $region92
        $region91: #{tpu_custom_call.1} parent=51 // pred_region
          %v2398 = vld [vmem:[#allocation2] sm:$0xff]
          %v2399 = vld [vmem:[#allocation2 + $0x8] sm:$0xff]
          %v2400 = vld [vmem:[#allocation2 + $0x10] sm:$0xff]
          %v2401 = vld [vmem:[#allocation2 + $0x18] sm:$0xff]
          %v2402 = vld [vmem:[#allocation2 + $0x20] sm:$0xff]
          %v2403 = vld [vmem:[#allocation2 + $0x28] sm:$0xff]
          %v2404 = vld [vmem:[#allocation2 + $0x30] sm:$0xff]
          %v2405 = vld [vmem:[#allocation2 + $0x38] sm:$0xff]
          %v2406 = vld [vmem:[#allocation2 + $0x40] sm:$0xff]
          %v2407 = vld [vmem:[#allocation2 + $0x48] sm:$0xff]
          %v2408 = vld [vmem:[#allocation2 + $0x50] sm:$0xff]
          %v2409 = vld [vmem:[#allocation2 + $0x58] sm:$0xff]
          %v2410 = vld [vmem:[#allocation2 + $0x60] sm:$0xff]
          %v2411 = vld [vmem:[#allocation2 + $0x68] sm:$0xff]
          %v2412 = vld [vmem:[#allocation2 + $0x70] sm:$0xff]
          %v2413 = vld [vmem:[#allocation2 + $0x78] sm:$0xff]
          %v2414 = vld [vmem:[#allocation2 + $0x80] sm:$0xff]
          %v2415 = vld [vmem:[#allocation2 + $0x88] sm:$0xff]
          %v2416 = vld [vmem:[#allocation2 + $0x90] sm:$0xff]
          %v2417 = vld [vmem:[#allocation2 + $0x98] sm:$0xff]
          %v2418 = vld [vmem:[#allocation2 + $0xa0] sm:$0xff]
          %v2419 = vld [vmem:[#allocation2 + $0xa8] sm:$0xff]
          %v2420 = vld [vmem:[#allocation2 + $0xb0] sm:$0xff]
          %v2421 = vld [vmem:[#allocation2 + $0xb8] sm:$0xff]
          %v2422 = vld [vmem:[#allocation2 + $0xc0] sm:$0xff]
          %v2423 = vld [vmem:[#allocation2 + $0xc8] sm:$0xff]
          %v2424 = vld [vmem:[#allocation2 + $0xd0] sm:$0xff]
          %v2425 = vld [vmem:[#allocation2 + $0xd8] sm:$0xff]
          %v2426 = vld [vmem:[#allocation2 + $0xe0] sm:$0xff]
          %v2427 = vld [vmem:[#allocation2 + $0xe8] sm:$0xff]
          %v2428 = vld [vmem:[#allocation2 + $0xf0] sm:$0xff]
          %v2429 = vld [vmem:[#allocation2 + $0xf8] sm:$0xff]
          %v2430 = vld [vmem:[#allocation2 + $0x100] sm:$0xff]
          %v2431 = vld [vmem:[#allocation2 + $0x108] sm:$0xff]
          %v2432 = vld [vmem:[#allocation2 + $0x110] sm:$0xff]
          %v2433 = vld [vmem:[#allocation2 + $0x118] sm:$0xff]
          %v2434 = vld [vmem:[#allocation2 + $0x120] sm:$0xff]
          %v2435 = vld [vmem:[#allocation2 + $0x128] sm:$0xff]
          %v2436 = vld [vmem:[#allocation2 + $0x130] sm:$0xff]
          %v2437 = vld [vmem:[#allocation2 + $0x138] sm:$0xff]
          %v2438 = vld [vmem:[#allocation2 + $0x140] sm:$0xff]
          %v2439 = vld [vmem:[#allocation2 + $0x148] sm:$0xff]
          %v2440 = vld [vmem:[#allocation2 + $0x150] sm:$0xff]
          %v2441 = vld [vmem:[#allocation2 + $0x158] sm:$0xff]
          %v2442 = vld [vmem:[#allocation2 + $0x160] sm:$0xff]
          %v2443 = vld [vmem:[#allocation2 + $0x168] sm:$0xff]
          %v2444 = vld [vmem:[#allocation2 + $0x170] sm:$0xff]
          %v2445 = vld [vmem:[#allocation2 + $0x178] sm:$0xff]
          %v2446 = vld [vmem:[#allocation2 + $0x180] sm:$0xff]
          %v2447 = vld [vmem:[#allocation2 + $0x188] sm:$0xff]
          %v2448 = vld [vmem:[#allocation2 + $0x190] sm:$0xff]
          %v2449 = vld [vmem:[#allocation2 + $0x198] sm:$0xff]
          %v2450 = vld [vmem:[#allocation2 + $0x1a0] sm:$0xff]
          %v2451 = vld [vmem:[#allocation2 + $0x1a8] sm:$0xff]
          %v2452 = vld [vmem:[#allocation2 + $0x1b0] sm:$0xff]
          %v2453 = vld [vmem:[#allocation2 + $0x1b8] sm:$0xff]
          %v2454 = vld [vmem:[#allocation2 + $0x1c0] sm:$0xff]
          %v2455 = vld [vmem:[#allocation2 + $0x1c8] sm:$0xff]
          %v2456 = vld [vmem:[#allocation2 + $0x1d0] sm:$0xff]
          %v2457 = vld [vmem:[#allocation2 + $0x1d8] sm:$0xff]
          %v2458 = vld [vmem:[#allocation2 + $0x1e0] sm:$0xff]
          %v2459 = vld [vmem:[#allocation2 + $0x1e8] sm:$0xff]
          %v2460 = vld [vmem:[#allocation2 + $0x1f0] sm:$0xff]
          %v2461 = vld [vmem:[#allocation2 + $0x1f8] sm:$0xff]
          %v2462 = vpack.c.bf16 %v2399, %v2398
          %v2463 = vpack.c.bf16 %v2401, %v2400
          %v2464 = vpack.c.bf16 %v2403, %v2402
          %v2465 = vpack.c.bf16 %v2405, %v2404
          %v2466 = vpack.c.bf16 %v2407, %v2406
          %v2467 = vpack.c.bf16 %v2409, %v2408
          %v2468 = vpack.c.bf16 %v2411, %v2410
          %v2469 = vpack.c.bf16 %v2413, %v2412
          %v2470 = vpack.c.bf16 %v2415, %v2414
          %v2471 = vpack.c.bf16 %v2417, %v2416
          %v2472 = vpack.c.bf16 %v2419, %v2418
          %v2473 = vpack.c.bf16 %v2421, %v2420
          %v2474 = vpack.c.bf16 %v2423, %v2422
          %v2475 = vpack.c.bf16 %v2425, %v2424
          %v2476 = vpack.c.bf16 %v2427, %v2426
          %v2477 = vpack.c.bf16 %v2429, %v2428
          %v2478 = vpack.c.bf16 %v2431, %v2430
          %v2479 = vpack.c.bf16 %v2433, %v2432
          %v2480 = vpack.c.bf16 %v2435, %v2434
          %v2481 = vpack.c.bf16 %v2437, %v2436
          %v2482 = vpack.c.bf16 %v2439, %v2438
          %v2483 = vpack.c.bf16 %v2441, %v2440
          %v2484 = vpack.c.bf16 %v2443, %v2442
          %v2485 = vpack.c.bf16 %v2445, %v2444
          %v2486 = vpack.c.bf16 %v2447, %v2446
          %v2487 = vpack.c.bf16 %v2449, %v2448
          %v2488 = vpack.c.bf16 %v2451, %v2450
          %v2489 = vpack.c.bf16 %v2453, %v2452
          %v2490 = vpack.c.bf16 %v2455, %v2454
          %v2491 = vpack.c.bf16 %v2457, %v2456
          %v2492 = vpack.c.bf16 %v2459, %v2458
          %v2493 = vpack.c.bf16 %v2461, %v2460
          %v2494 = vld [vmem:[#allocation9] sm:$0xf]
          %v2495 = vld [vmem:[#allocation9 + $0x4] sm:$0xf]
          %v2496 = vld [vmem:[#allocation9 + $0x8] sm:$0xf]
          %v2497 = vld [vmem:[#allocation9 + $0xc] sm:$0xf]
          %v2498 = vld [vmem:[#allocation9 + $0x10] sm:$0xf]
          %v2499 = vld [vmem:[#allocation9 + $0x14] sm:$0xf]
          %v2500 = vld [vmem:[#allocation9 + $0x18] sm:$0xf]
          %v2501 = vld [vmem:[#allocation9 + $0x1c] sm:$0xf]
          %v2502 = vld [vmem:[#allocation9 + $0x20] sm:$0xf]
          %v2503 = vld [vmem:[#allocation9 + $0x24] sm:$0xf]
          %v2504 = vld [vmem:[#allocation9 + $0x28] sm:$0xf]
          %v2505 = vld [vmem:[#allocation9 + $0x2c] sm:$0xf]
          %v2506 = vld [vmem:[#allocation9 + $0x30] sm:$0xf]
          %v2507 = vld [vmem:[#allocation9 + $0x34] sm:$0xf]
          %v2508 = vld [vmem:[#allocation9 + $0x38] sm:$0xf]
          %v2509 = vld [vmem:[#allocation9 + $0x3c] sm:$0xf]
          %v2510 = vld [vmem:[%s455] sm:$0xf]
          %v2511 = vld [vmem:[%s455 + $0x4] sm:$0xf]
          %v2512 = vld [vmem:[%s455 + $0x8] sm:$0xf]
          %v2513 = vld [vmem:[%s455 + $0xc] sm:$0xf]
          %v2514 = vld [vmem:[%s455 + $0x10] sm:$0xf]
          %v2515 = vld [vmem:[%s455 + $0x14] sm:$0xf]
          %v2516 = vld [vmem:[%s455 + $0x18] sm:$0xf]
          %v2517 = vld [vmem:[%s455 + $0x1c] sm:$0xf]
          %v2518 = vld [vmem:[%s455 + $0x20] sm:$0xf]
          %v2519 = vld [vmem:[%s455 + $0x24] sm:$0xf]
          %v2520 = vld [vmem:[%s455 + $0x28] sm:$0xf]
          %v2521 = vld [vmem:[%s455 + $0x2c] sm:$0xf]
          %v2522 = vld [vmem:[%s455 + $0x30] sm:$0xf]
          %v2523 = vld [vmem:[%s455 + $0x34] sm:$0xf]
          %v2524 = vld [vmem:[%s455 + $0x38] sm:$0xf]
          %v2525 = vld [vmem:[%s455 + $0x3c] sm:$0xf]
          %v2526 = vld [vmem:[%s455 + $0x40] sm:$0xf]
          %v2527 = vld [vmem:[%s455 + $0x44] sm:$0xf]
          %v2528 = vld [vmem:[%s455 + $0x48] sm:$0xf]
          %v2529 = vld [vmem:[%s455 + $0x4c] sm:$0xf]
          %v2530 = vld [vmem:[%s455 + $0x50] sm:$0xf]
          %v2531 = vld [vmem:[%s455 + $0x54] sm:$0xf]
          %v2532 = vld [vmem:[%s455 + $0x58] sm:$0xf]
          %v2533 = vld [vmem:[%s455 + $0x5c] sm:$0xf]
          %v2534 = vld [vmem:[%s455 + $0x60] sm:$0xf]
          %v2535 = vld [vmem:[%s455 + $0x64] sm:$0xf]
          %v2536 = vld [vmem:[%s455 + $0x68] sm:$0xf]
          %v2537 = vld [vmem:[%s455 + $0x6c] sm:$0xf]
          %v2538 = vld [vmem:[%s455 + $0x70] sm:$0xf]
          %v2539 = vld [vmem:[%s455 + $0x74] sm:$0xf]
          %v2540 = vld [vmem:[%s455 + $0x78] sm:$0xf]
          %v2541 = vld [vmem:[%s455 + $0x7c] sm:$0xf]
          %v2542 = vld [vmem:[%s455 + $0x80] sm:$0xf]
          %v2543 = vld [vmem:[%s455 + $0x84] sm:$0xf]
          %v2544 = vld [vmem:[%s455 + $0x88] sm:$0xf]
          %v2545 = vld [vmem:[%s455 + $0x8c] sm:$0xf]
          %v2546 = vld [vmem:[%s455 + $0x90] sm:$0xf]
          %v2547 = vld [vmem:[%s455 + $0x94] sm:$0xf]
          %v2548 = vld [vmem:[%s455 + $0x98] sm:$0xf]
          %v2549 = vld [vmem:[%s455 + $0x9c] sm:$0xf]
          %v2550 = vld [vmem:[%s455 + $0xa0] sm:$0xf]
          %v2551 = vld [vmem:[%s455 + $0xa4] sm:$0xf]
          %v2552 = vld [vmem:[%s455 + $0xa8] sm:$0xf]
          %v2553 = vld [vmem:[%s455 + $0xac] sm:$0xf]
          %v2554 = vld [vmem:[%s455 + $0xb0] sm:$0xf]
          %v2555 = vld [vmem:[%s455 + $0xb4] sm:$0xf]
          %v2556 = vld [vmem:[%s455 + $0xb8] sm:$0xf]
          %v2557 = vld [vmem:[%s455 + $0xbc] sm:$0xf]
          %v2558 = vld [vmem:[%s455 + $0xc0] sm:$0xf]
          %v2559 = vld [vmem:[%s455 + $0xc4] sm:$0xf]
          %v2560 = vld [vmem:[%s455 + $0xc8] sm:$0xf]
          %v2561 = vld [vmem:[%s455 + $0xcc] sm:$0xf]
          %v2562 = vld [vmem:[%s455 + $0xd0] sm:$0xf]
          %v2563 = vld [vmem:[%s455 + $0xd4] sm:$0xf]
          %v2564 = vld [vmem:[%s455 + $0xd8] sm:$0xf]
          %v2565 = vld [vmem:[%s455 + $0xdc] sm:$0xf]
          %v2566 = vld [vmem:[%s455 + $0xe0] sm:$0xf]
          %v2567 = vld [vmem:[%s455 + $0xe4] sm:$0xf]
          %v2568 = vld [vmem:[%s455 + $0xe8] sm:$0xf]
          %v2569 = vld [vmem:[%s455 + $0xec] sm:$0xf]
          %v2570 = vld [vmem:[%s455 + $0xf0] sm:$0xf]
          %v2571 = vld [vmem:[%s455 + $0xf4] sm:$0xf]
          %v2572 = vld [vmem:[%s455 + $0xf8] sm:$0xf]
          %v2573 = vld [vmem:[%s455 + $0xfc] sm:$0xf]
          %v2574 = vld [vmem:[#allocation11] sm:$0xf]
          %v2575 = vld [vmem:[#allocation11 + $0x4] sm:$0xf]
          %v2576 = vld [vmem:[#allocation11 + $0x8] sm:$0xf]
          %v2577 = vld [vmem:[#allocation11 + $0xc] sm:$0xf]
          %v2578 = vld [vmem:[#allocation11 + $0x10] sm:$0xf]
          %v2579 = vld [vmem:[#allocation11 + $0x14] sm:$0xf]
          %v2580 = vld [vmem:[#allocation11 + $0x18] sm:$0xf]
          %v2581 = vld [vmem:[#allocation11 + $0x1c] sm:$0xf]
          %v2582 = vld [vmem:[#allocation11 + $0x20] sm:$0xf]
          %v2583 = vld [vmem:[#allocation11 + $0x24] sm:$0xf]
          %v2584 = vld [vmem:[#allocation11 + $0x28] sm:$0xf]
          %v2585 = vld [vmem:[#allocation11 + $0x2c] sm:$0xf]
          %v2586 = vld [vmem:[#allocation11 + $0x30] sm:$0xf]
          %v2587 = vld [vmem:[#allocation11 + $0x34] sm:$0xf]
          %v2588 = vld [vmem:[#allocation11 + $0x38] sm:$0xf]
          %v2589 = vld [vmem:[#allocation11 + $0x3c] sm:$0xf]
          %v2654 = vunpack.c.l.b16 %v2510
          %v2655 = vunpack.c.l.b16 %v2511
          %v2656 = vunpack.c.l.b16 %v2512
          %v2657 = vunpack.c.l.b16 %v2513
          %v2658 = vunpack.c.l.b16 %v2514
          %v2659 = vunpack.c.l.b16 %v2515
          %v2660 = vunpack.c.l.b16 %v2516
          %v2661 = vunpack.c.l.b16 %v2517
          %v2662 = vunpack.c.l.b16 %v2518
          %v2663 = vunpack.c.l.b16 %v2519
          %v2664 = vunpack.c.l.b16 %v2520
          %v2665 = vunpack.c.l.b16 %v2521
          %v2666 = vunpack.c.l.b16 %v2522
          %v2667 = vunpack.c.l.b16 %v2523
          %v2668 = vunpack.c.l.b16 %v2524
          %v2669 = vunpack.c.l.b16 %v2525
          %v2670 = vunpack.c.l.b16 %v2526
          %v2671 = vunpack.c.l.b16 %v2527
          %v2672 = vunpack.c.l.b16 %v2528
          %v2673 = vunpack.c.l.b16 %v2529
          %v2674 = vunpack.c.l.b16 %v2530
          %v2675 = vunpack.c.l.b16 %v2531
          %v2676 = vunpack.c.l.b16 %v2532
          %v2677 = vunpack.c.l.b16 %v2533
          %v2678 = vunpack.c.l.b16 %v2534
          %v2679 = vunpack.c.l.b16 %v2535
          %v2680 = vunpack.c.l.b16 %v2536
          %v2681 = vunpack.c.l.b16 %v2537
          %v2682 = vunpack.c.l.b16 %v2538
          %v2683 = vunpack.c.l.b16 %v2539
          %v2684 = vunpack.c.l.b16 %v2540
          %v2685 = vunpack.c.l.b16 %v2541
          %v2686 = vunpack.c.l.b16 %v2542
          %v2687 = vunpack.c.l.b16 %v2543
          %v2688 = vunpack.c.l.b16 %v2544
          %v2689 = vunpack.c.l.b16 %v2545
          %v2690 = vunpack.c.l.b16 %v2546
          %v2691 = vunpack.c.l.b16 %v2547
          %v2692 = vunpack.c.l.b16 %v2548
          %v2693 = vunpack.c.l.b16 %v2549
          %v2694 = vunpack.c.l.b16 %v2550
          %v2695 = vunpack.c.l.b16 %v2551
          %v2696 = vunpack.c.l.b16 %v2552
          %v2697 = vunpack.c.l.b16 %v2553
          %v2698 = vunpack.c.l.b16 %v2554
          %v2699 = vunpack.c.l.b16 %v2555
          %v2700 = vunpack.c.l.b16 %v2556
          %v2701 = vunpack.c.l.b16 %v2557
          %v2702 = vunpack.c.l.b16 %v2558
          %v2703 = vunpack.c.l.b16 %v2559
          %v2704 = vunpack.c.l.b16 %v2560
          %v2705 = vunpack.c.l.b16 %v2561
          %v2706 = vunpack.c.l.b16 %v2562
          %v2707 = vunpack.c.l.b16 %v2563
          %v2708 = vunpack.c.l.b16 %v2564
          %v2709 = vunpack.c.l.b16 %v2565
          %v2710 = vunpack.c.l.b16 %v2566
          %v2711 = vunpack.c.l.b16 %v2567
          %v2712 = vunpack.c.l.b16 %v2568
          %v2713 = vunpack.c.l.b16 %v2569
          %v2714 = vunpack.c.l.b16 %v2570
          %v2715 = vunpack.c.l.b16 %v2571
          %v2716 = vunpack.c.l.b16 %v2572
          %v2717 = vunpack.c.l.b16 %v2573
          %v2718 = vpack.c.b16 %v2655, %v2654
          %v2719 = vpack.c.b16 %v2657, %v2656
          %v2720 = vpack.c.b16 %v2659, %v2658
          %v2721 = vpack.c.b16 %v2661, %v2660
          %v2722 = vpack.c.b16 %v2663, %v2662
          %v2723 = vpack.c.b16 %v2665, %v2664
          %v2724 = vpack.c.b16 %v2667, %v2666
          %v2725 = vpack.c.b16 %v2669, %v2668
          %v2726 = vpack.c.b16 %v2671, %v2670
          %v2727 = vpack.c.b16 %v2673, %v2672
          %v2728 = vpack.c.b16 %v2675, %v2674
          %v2729 = vpack.c.b16 %v2677, %v2676
          %v2730 = vpack.c.b16 %v2679, %v2678
          %v2731 = vpack.c.b16 %v2681, %v2680
          %v2732 = vpack.c.b16 %v2683, %v2682
          %v2733 = vpack.c.b16 %v2685, %v2684
          %v2734 = vpack.c.b16 %v2687, %v2686
          %v2735 = vpack.c.b16 %v2689, %v2688
          %v2736 = vpack.c.b16 %v2691, %v2690
          %v2737 = vpack.c.b16 %v2693, %v2692
          %v2738 = vpack.c.b16 %v2695, %v2694
          %v2739 = vpack.c.b16 %v2697, %v2696
          %v2740 = vpack.c.b16 %v2699, %v2698
          %v2741 = vpack.c.b16 %v2701, %v2700
          %v2742 = vpack.c.b16 %v2703, %v2702
          %v2743 = vpack.c.b16 %v2705, %v2704
          %v2744 = vpack.c.b16 %v2707, %v2706
          %v2745 = vpack.c.b16 %v2709, %v2708
          %v2746 = vpack.c.b16 %v2711, %v2710
          %v2747 = vpack.c.b16 %v2713, %v2712
          %v2748 = vpack.c.b16 %v2715, %v2714
          %v2749 = vpack.c.b16 %v2717, %v2716
          %v2798 = vunpack.c.l.b16 %v2574
          %v2799 = vunpack.c.l.b16 %v2575
          %v2800 = vunpack.c.l.b16 %v2576
          %v2801 = vunpack.c.l.b16 %v2577
          %v2802 = vunpack.c.l.b16 %v2578
          %v2803 = vunpack.c.l.b16 %v2579
          %v2804 = vunpack.c.l.b16 %v2580
          %v2805 = vunpack.c.l.b16 %v2581
          %v2806 = vunpack.c.l.b16 %v2582
          %v2807 = vunpack.c.l.b16 %v2583
          %v2808 = vunpack.c.l.b16 %v2584
          %v2809 = vunpack.c.l.b16 %v2585
          %v2810 = vunpack.c.l.b16 %v2586
          %v2811 = vunpack.c.l.b16 %v2587
          %v2812 = vunpack.c.l.b16 %v2588
          %v2813 = vunpack.c.l.b16 %v2589
          %v2814 = vpack.c.b16 %v2799, %v2798
          %v2815 = vpack.c.b16 %v2801, %v2800
          %v2816 = vpack.c.b16 %v2803, %v2802
          %v2817 = vpack.c.b16 %v2805, %v2804
          %v2818 = vpack.c.b16 %v2807, %v2806
          %v2819 = vpack.c.b16 %v2809, %v2808
          %v2820 = vpack.c.b16 %v2811, %v2810
          %v2821 = vpack.c.b16 %v2813, %v2812
          %2830 = vmatprep.subr.bf16.mxu0 0
          %2831 = vmatpush1.bf16.msra.mxu0 %v2814
          %2832 = vmatprep.subr.bf16.mxu0 0
          %2833 = vmatpush1.bf16.msra.mxu0 %v2815
          %2834 = vmatprep.subr.bf16.mxu0 0
          %2835 = vmatpush1.bf16.msra.mxu0 %v2816
          %2836 = vmatprep.subr.bf16.mxu0 0
          %2837 = vmatpush1.bf16.msra.mxu0 %v2817
          %2838 = vmatprep.subr.bf16.mxu0 0
          %2839 = vmatpush1.bf16.msra.mxu0 %v2818
          %2840 = vmatprep.subr.bf16.mxu0 0
          %2841 = vmatpush1.bf16.msra.mxu0 %v2819
          %2842 = vmatprep.subr.bf16.mxu0 0
          %2843 = vmatpush1.bf16.msra.mxu0 %v2820
          %2844 = vmatprep.subr.bf16.mxu0 0
          %2845 = vmatpush1.bf16.msra.mxu0 %v2821
          %2846 = vmatprep.subr.bf16.mxu0 0
          %2847 = vmatpush1.bf16.msra.mxu0 0
          %2848 = vmatprep.subr.bf16.mxu0 0
          %2849 = vmatpush1.bf16.msra.mxu0 0
          %2850 = vmatprep.subr.bf16.mxu0 0
          %2851 = vmatpush1.bf16.msra.mxu0 0
          %2852 = vmatprep.subr.bf16.mxu0 0
          %2853 = vmatpush1.bf16.msra.mxu0 0
          %2854 = vmatprep.subr.bf16.mxu0 0
          %2855 = vmatpush1.bf16.msra.mxu0 0
          %2856 = vmatprep.subr.bf16.mxu0 0
          %2857 = vmatpush1.bf16.msra.mxu0 0
          %2858 = vmatprep.subr.bf16.mxu0 0
          %2859 = vmatpush1.bf16.msra.mxu0 0
          %2860 = vmatprep.subr.bf16.mxu0 0
          %2861 = vmatpush1.bf16.msra.mxu0 0
          %2862 = vmatprep.mubr.bf16.mxu0 0
          %2863 = vmatmul.mubr.bf16.gmra.mrb[0].mxu0 %v2718
          %v2864 = vpop.f32.mrb[0].mxu0
          %v2865 = vadd.f32 0.0, %v2864
          %v2866 = vpop.f32.mrb[0].mxu0
          %v2867 = vpop.f32.mrb[0].mxu0
          %v2868 = vadd.f32 0.0, %v2867
          %v2869 = vpop.f32.mrb[0].mxu0
          %2870 = vmatprep.mubr.bf16.mxu0 0
          %2871 = vmatmul.mubr.bf16.gmra.mrb[0].mxu0 %v2719
          %v2872 = vpop.f32.mrb[0].mxu0
          %v2873 = vadd.f32 0.0, %v2872
          %v2874 = vpop.f32.mrb[0].mxu0
          %v2875 = vpop.f32.mrb[0].mxu0
          %v2876 = vadd.f32 0.0, %v2875
          %v2877 = vpop.f32.mrb[0].mxu0
          %2878 = vmatprep.mubr.bf16.mxu0 0
          %2879 = vmatmul.mubr.bf16.gmra.mrb[0].mxu0 %v2720
          %v2880 = vpop.f32.mrb[0].mxu0
          %v2881 = vadd.f32 0.0, %v2880
          %v2882 = vpop.f32.mrb[0].mxu0
          %v2883 = vpop.f32.mrb[0].mxu0
          %v2884 = vadd.f32 0.0, %v2883
          %v2885 = vpop.f32.mrb[0].mxu0
          %2886 = vmatprep.mubr.bf16.mxu0 0
          %2887 = vmatmul.mubr.bf16.gmra.mrb[0].mxu0 %v2721
          %v2888 = vpop.f32.mrb[0].mxu0
          %v2889 = vadd.f32 0.0, %v2888
          %v2890 = vpop.f32.mrb[0].mxu0
          %v2891 = vpop.f32.mrb[0].mxu0
          %v2892 = vadd.f32 0.0, %v2891
          %v2893 = vpop.f32.mrb[0].mxu0
          %2894 = vmatprep.mubr.bf16.mxu0 0
          %2895 = vmatmul.mubr.bf16.gmra.mrb[0].mxu0 %v2722
          %v2896 = vpop.f32.mrb[0].mxu0
          %v2897 = vadd.f32 0.0, %v2896
          %v2898 = vpop.f32.mrb[0].mxu0
          %v2899 = vpop.f32.mrb[0].mxu0
          %v2900 = vadd.f32 0.0, %v2899
          %v2901 = vpop.f32.mrb[0].mxu0
          %2902 = vmatprep.mubr.bf16.mxu0 0
          %2903 = vmatmul.mubr.bf16.gmra.mrb[0].mxu0 %v2723
          %v2904 = vpop.f32.mrb[0].mxu0
          %v2905 = vadd.f32 0.0, %v2904
          %v2906 = vpop.f32.mrb[0].mxu0
          %v2907 = vpop.f32.mrb[0].mxu0
          %v2908 = vadd.f32 0.0, %v2907
          %v2909 = vpop.f32.mrb[0].mxu0
          %2910 = vmatprep.mubr.bf16.mxu0 0
          %2911 = vmatmul.mubr.bf16.gmra.mrb[0].mxu0 %v2724
          %v2912 = vpop.f32.mrb[0].mxu0
          %v2913 = vadd.f32 0.0, %v2912
          %v2914 = vpop.f32.mrb[0].mxu0
          %v2915 = vpop.f32.mrb[0].mxu0
          %v2916 = vadd.f32 0.0, %v2915
          %v2917 = vpop.f32.mrb[0].mxu0
          %2918 = vmatprep.mubr.bf16.mxu0 0
          %2919 = vmatmul.mubr.bf16.gmra.mrb[0].mxu0 %v2725
          %v2920 = vpop.f32.mrb[0].mxu0
          %v2921 = vadd.f32 0.0, %v2920
          %v2922 = vpop.f32.mrb[0].mxu0
          %v2923 = vpop.f32.mrb[0].mxu0
          %v2924 = vadd.f32 0.0, %v2923
          %v2925 = vpop.f32.mrb[0].mxu0
          %2926 = vmatprep.mubr.bf16.mxu0 0
          %2927 = vmatmul.mubr.bf16.gmra.mrb[0].mxu0 %v2726
          %v2928 = vpop.f32.mrb[0].mxu0
          %v2929 = vadd.f32 0.0, %v2928
          %v2930 = vpop.f32.mrb[0].mxu0
          %v2931 = vpop.f32.mrb[0].mxu0
          %v2932 = vadd.f32 0.0, %v2931
          %v2933 = vpop.f32.mrb[0].mxu0
          %2934 = vmatprep.mubr.bf16.mxu0 0
          %2935 = vmatmul.mubr.bf16.gmra.mrb[0].mxu0 %v2727
          %v2936 = vpop.f32.mrb[0].mxu0
          %v2937 = vadd.f32 0.0, %v2936
          %v2938 = vpop.f32.mrb[0].mxu0
          %v2939 = vpop.f32.mrb[0].mxu0
          %v2940 = vadd.f32 0.0, %v2939
          %v2941 = vpop.f32.mrb[0].mxu0
          %2942 = vmatprep.mubr.bf16.mxu0 0
          %2943 = vmatmul.mubr.bf16.gmra.mrb[0].mxu0 %v2728
          %v2944 = vpop.f32.mrb[0].mxu0
          %v2945 = vadd.f32 0.0, %v2944
          %v2946 = vpop.f32.mrb[0].mxu0
          %v2947 = vpop.f32.mrb[0].mxu0
          %v2948 = vadd.f32 0.0, %v2947
          %v2949 = vpop.f32.mrb[0].mxu0
          %2950 = vmatprep.mubr.bf16.mxu0 0
          %2951 = vmatmul.mubr.bf16.gmra.mrb[0].mxu0 %v2729
          %v2952 = vpop.f32.mrb[0].mxu0
          %v2953 = vadd.f32 0.0, %v2952
          %v2954 = vpop.f32.mrb[0].mxu0
          %v2955 = vpop.f32.mrb[0].mxu0
          %v2956 = vadd.f32 0.0, %v2955
          %v2957 = vpop.f32.mrb[0].mxu0
          %2958 = vmatprep.mubr.bf16.mxu0 0
          %2959 = vmatmul.mubr.bf16.gmra.mrb[0].mxu0 %v2730
          %v2960 = vpop.f32.mrb[0].mxu0
          %v2961 = vadd.f32 0.0, %v2960
          %v2962 = vpop.f32.mrb[0].mxu0
          %v2963 = vpop.f32.mrb[0].mxu0
          %v2964 = vadd.f32 0.0, %v2963
          %v2965 = vpop.f32.mrb[0].mxu0
          %2966 = vmatprep.mubr.bf16.mxu0 0
          %2967 = vmatmul.mubr.bf16.gmra.mrb[0].mxu0 %v2731
          %v2968 = vpop.f32.mrb[0].mxu0
          %v2969 = vadd.f32 0.0, %v2968
          %v2970 = vpop.f32.mrb[0].mxu0
          %v2971 = vpop.f32.mrb[0].mxu0
          %v2972 = vadd.f32 0.0, %v2971
          %v2973 = vpop.f32.mrb[0].mxu0
          %2974 = vmatprep.mubr.bf16.mxu0 0
          %2975 = vmatmul.mubr.bf16.gmra.mrb[0].mxu0 %v2732
          %v2976 = vpop.f32.mrb[0].mxu0
          %v2977 = vadd.f32 0.0, %v2976
          %v2978 = vpop.f32.mrb[0].mxu0
          %v2979 = vpop.f32.mrb[0].mxu0
          %v2980 = vadd.f32 0.0, %v2979
          %v2981 = vpop.f32.mrb[0].mxu0
          %2982 = vmatprep.mubr.bf16.mxu0 0
          %2983 = vmatmul.mubr.bf16.gmra.mrb[0].mxu0 %v2733
          %v2984 = vpop.f32.mrb[0].mxu0
          %v2985 = vadd.f32 0.0, %v2984
          %v2986 = vpop.f32.mrb[0].mxu0
          %v2987 = vpop.f32.mrb[0].mxu0
          %v2988 = vadd.f32 0.0, %v2987
          %v2989 = vpop.f32.mrb[0].mxu0
          %2990 = vmatprep.mubr.bf16.mxu0 0
          %2991 = vmatmul.mubr.bf16.gmra.mrb[0].mxu0 %v2734
          %v2992 = vpop.f32.mrb[0].mxu0
          %v2993 = vadd.f32 0.0, %v2992
          %v2994 = vpop.f32.mrb[0].mxu0
          %v2995 = vpop.f32.mrb[0].mxu0
          %v2996 = vadd.f32 0.0, %v2995
          %v2997 = vpop.f32.mrb[0].mxu0
          %2998 = vmatprep.mubr.bf16.mxu0 0
          %2999 = vmatmul.mubr.bf16.gmra.mrb[0].mxu0 %v2735
          %v3000 = vpop.f32.mrb[0].mxu0
          %v3001 = vadd.f32 0.0, %v3000
          %v3002 = vpop.f32.mrb[0].mxu0
          %v3003 = vpop.f32.mrb[0].mxu0
          %v3004 = vadd.f32 0.0, %v3003
          %v3005 = vpop.f32.mrb[0].mxu0
          %3006 = vmatprep.mubr.bf16.mxu0 0
          %3007 = vmatmul.mubr.bf16.gmra.mrb[0].mxu0 %v2736
          %v3008 = vpop.f32.mrb[0].mxu0
          %v3009 = vadd.f32 0.0, %v3008
          %v3010 = vpop.f32.mrb[0].mxu0
          %v3011 = vpop.f32.mrb[0].mxu0
          %v3012 = vadd.f32 0.0, %v3011
          %v3013 = vpop.f32.mrb[0].mxu0
          %3014 = vmatprep.mubr.bf16.mxu0 0
          %3015 = vmatmul.mubr.bf16.gmra.mrb[0].mxu0 %v2737
          %v3016 = vpop.f32.mrb[0].mxu0
          %v3017 = vadd.f32 0.0, %v3016
          %v3018 = vpop.f32.mrb[0].mxu0
          %v3019 = vpop.f32.mrb[0].mxu0
          %v3020 = vadd.f32 0.0, %v3019
          %v3021 = vpop.f32.mrb[0].mxu0
          %3022 = vmatprep.mubr.bf16.mxu0 0
          %3023 = vmatmul.mubr.bf16.gmra.mrb[0].mxu0 %v2738
          %v3024 = vpop.f32.mrb[0].mxu0
          %v3025 = vadd.f32 0.0, %v3024
          %v3026 = vpop.f32.mrb[0].mxu0
          %v3027 = vpop.f32.mrb[0].mxu0
          %v3028 = vadd.f32 0.0, %v3027
          %v3029 = vpop.f32.mrb[0].mxu0
          %3030 = vmatprep.mubr.bf16.mxu0 0
          %3031 = vmatmul.mubr.bf16.gmra.mrb[0].mxu0 %v2739
          %v3032 = vpop.f32.mrb[0].mxu0
          %v3033 = vadd.f32 0.0, %v3032
          %v3034 = vpop.f32.mrb[0].mxu0
          %v3035 = vpop.f32.mrb[0].mxu0
          %v3036 = vadd.f32 0.0, %v3035
          %v3037 = vpop.f32.mrb[0].mxu0
          %3038 = vmatprep.mubr.bf16.mxu0 0
          %3039 = vmatmul.mubr.bf16.gmra.mrb[0].mxu0 %v2740
          %v3040 = vpop.f32.mrb[0].mxu0
          %v3041 = vadd.f32 0.0, %v3040
          %v3042 = vpop.f32.mrb[0].mxu0
          %v3043 = vpop.f32.mrb[0].mxu0
          %v3044 = vadd.f32 0.0, %v3043
          %v3045 = vpop.f32.mrb[0].mxu0
          %3046 = vmatprep.mubr.bf16.mxu0 0
          %3047 = vmatmul.mubr.bf16.gmra.mrb[0].mxu0 %v2741
          %v3048 = vpop.f32.mrb[0].mxu0
          %v3049 = vadd.f32 0.0, %v3048
          %v3050 = vpop.f32.mrb[0].mxu0
          %v3051 = vpop.f32.mrb[0].mxu0
          %v3052 = vadd.f32 0.0, %v3051
          %v3053 = vpop.f32.mrb[0].mxu0
          %3054 = vmatprep.mubr.bf16.mxu0 0
          %3055 = vmatmul.mubr.bf16.gmra.mrb[0].mxu0 %v2742
          %v3056 = vpop.f32.mrb[0].mxu0
          %v3057 = vadd.f32 0.0, %v3056
          %v3058 = vpop.f32.mrb[0].mxu0
          %v3059 = vpop.f32.mrb[0].mxu0
          %v3060 = vadd.f32 0.0, %v3059
          %v3061 = vpop.f32.mrb[0].mxu0
          %3062 = vmatprep.mubr.bf16.mxu0 0
          %3063 = vmatmul.mubr.bf16.gmra.mrb[0].mxu0 %v2743
          %v3064 = vpop.f32.mrb[0].mxu0
          %v3065 = vadd.f32 0.0, %v3064
          %v3066 = vpop.f32.mrb[0].mxu0
          %v3067 = vpop.f32.mrb[0].mxu0
          %v3068 = vadd.f32 0.0, %v3067
          %v3069 = vpop.f32.mrb[0].mxu0
          %3070 = vmatprep.mubr.bf16.mxu0 0
          %3071 = vmatmul.mubr.bf16.gmra.mrb[0].mxu0 %v2744
          %v3072 = vpop.f32.mrb[0].mxu0
          %v3073 = vadd.f32 0.0, %v3072
          %v3074 = vpop.f32.mrb[0].mxu0
          %v3075 = vpop.f32.mrb[0].mxu0
          %v3076 = vadd.f32 0.0, %v3075
          %v3077 = vpop.f32.mrb[0].mxu0
          %3078 = vmatprep.mubr.bf16.mxu0 0
          %3079 = vmatmul.mubr.bf16.gmra.mrb[0].mxu0 %v2745
          %v3080 = vpop.f32.mrb[0].mxu0
          %v3081 = vadd.f32 0.0, %v3080
          %v3082 = vpop.f32.mrb[0].mxu0
          %v3083 = vpop.f32.mrb[0].mxu0
          %v3084 = vadd.f32 0.0, %v3083
          %v3085 = vpop.f32.mrb[0].mxu0
          %3086 = vmatprep.mubr.bf16.mxu0 0
          %3087 = vmatmul.mubr.bf16.gmra.mrb[0].mxu0 %v2746
          %v3088 = vpop.f32.mrb[0].mxu0
          %v3089 = vadd.f32 0.0, %v3088
          %v3090 = vpop.f32.mrb[0].mxu0
          %v3091 = vpop.f32.mrb[0].mxu0
          %v3092 = vadd.f32 0.0, %v3091
          %v3093 = vpop.f32.mrb[0].mxu0
          %3094 = vmatprep.mubr.bf16.mxu0 0
          %3095 = vmatmul.mubr.bf16.gmra.mrb[0].mxu0 %v2747
          %v3096 = vpop.f32.mrb[0].mxu0
          %v3097 = vadd.f32 0.0, %v3096
          %v3098 = vpop.f32.mrb[0].mxu0
          %v3099 = vpop.f32.mrb[0].mxu0
          %v3100 = vadd.f32 0.0, %v3099
          %v3101 = vpop.f32.mrb[0].mxu0
          %3102 = vmatprep.mubr.bf16.mxu0 0
          %3103 = vmatmul.mubr.bf16.gmra.mrb[0].mxu0 %v2748
          %v3104 = vpop.f32.mrb[0].mxu0
          %v3105 = vadd.f32 0.0, %v3104
          %v3106 = vpop.f32.mrb[0].mxu0
          %v3107 = vpop.f32.mrb[0].mxu0
          %v3108 = vadd.f32 0.0, %v3107
          %v3109 = vpop.f32.mrb[0].mxu0
          %3110 = vmatprep.mubr.bf16.mxu0 0
          %3111 = vmatmul.mubr.bf16.gmra.mrb[0].mxu0 %v2749
          %v3112 = vpop.f32.mrb[0].mxu0
          %v3113 = vadd.f32 0.0, %v3112
          %v3114 = vpop.f32.mrb[0].mxu0
          %v3115 = vpop.f32.mrb[0].mxu0
          %v3116 = vadd.f32 0.0, %v3115
          %v3117 = vpop.f32.mrb[0].mxu0
          %3118 = vdwg.mxu0
          %v3135 = vunpack.c.l.b16 %v2494
          %v3136 = vunpack.c.l.b16 %v2495
          %v3137 = vunpack.c.l.b16 %v2496
          %v3138 = vunpack.c.l.b16 %v2497
          %v3139 = vunpack.c.l.b16 %v2498
          %v3140 = vunpack.c.l.b16 %v2499
          %v3141 = vunpack.c.l.b16 %v2500
          %v3142 = vunpack.c.l.b16 %v2501
          %v3143 = vunpack.c.l.b16 %v2502
          %v3144 = vunpack.c.l.b16 %v2503
          %v3145 = vunpack.c.l.b16 %v2504
          %v3146 = vunpack.c.l.b16 %v2505
          %v3147 = vunpack.c.l.b16 %v2506
          %v3148 = vunpack.c.l.b16 %v2507
          %v3149 = vunpack.c.l.b16 %v2508
          %v3150 = vunpack.c.l.b16 %v2509
          %v3151 = vpack.c.b16 %v3136, %v3135
          %v3152 = vpack.c.b16 %v3138, %v3137
          %v3153 = vpack.c.b16 %v3140, %v3139
          %v3154 = vpack.c.b16 %v3142, %v3141
          %v3155 = vpack.c.b16 %v3144, %v3143
          %v3156 = vpack.c.b16 %v3146, %v3145
          %v3157 = vpack.c.b16 %v3148, %v3147
          %v3158 = vpack.c.b16 %v3150, %v3149
          %3167 = vmatprep.subr.bf16.mxu0 0
          %3168 = vmatpush1.bf16.msra.mxu0 %v3151
          %3169 = vmatprep.subr.bf16.mxu0 0
          %3170 = vmatpush1.bf16.msra.mxu0 %v3152
          %3171 = vmatprep.subr.bf16.mxu0 0
          %3172 = vmatpush1.bf16.msra.mxu0 %v3153
          %3173 = vmatprep.subr.bf16.mxu0 0
          %3174 = vmatpush1.bf16.msra.mxu0 %v3154
          %3175 = vmatprep.subr.bf16.mxu0 0
          %3176 = vmatpush1.bf16.msra.mxu0 %v3155
          %3177 = vmatprep.subr.bf16.mxu0 0
          %3178 = vmatpush1.bf16.msra.mxu0 %v3156
          %3179 = vmatprep.subr.bf16.mxu0 0
          %3180 = vmatpush1.bf16.msra.mxu0 %v3157
          %3181 = vmatprep.subr.bf16.mxu0 0
          %3182 = vmatpush1.bf16.msra.mxu0 %v3158
          %3183 = vmatprep.subr.bf16.mxu0 0
          %3184 = vmatpush1.bf16.msra.mxu0 0
          %3185 = vmatprep.subr.bf16.mxu0 0
          %3186 = vmatpush1.bf16.msra.mxu0 0
          %3187 = vmatprep.subr.bf16.mxu0 0
          %3188 = vmatpush1.bf16.msra.mxu0 0
          %3189 = vmatprep.subr.bf16.mxu0 0
          %3190 = vmatpush1.bf16.msra.mxu0 0
          %3191 = vmatprep.subr.bf16.mxu0 0
          %3192 = vmatpush1.bf16.msra.mxu0 0
          %3193 = vmatprep.subr.bf16.mxu0 0
          %3194 = vmatpush1.bf16.msra.mxu0 0
          %3195 = vmatprep.subr.bf16.mxu0 0
          %3196 = vmatpush1.bf16.msra.mxu0 0
          %3197 = vmatprep.subr.bf16.mxu0 0
          %3198 = vmatpush1.bf16.msra.mxu0 0
          %3199 = vmatprep.mubr.bf16.mxu0 0
          %3200 = vmatmul.mubr.bf16.gmra.mrb[0].mxu0 %v2462
          %v3201 = vpop.f32.mrb[0].mxu0
          %v3202 = vadd.f32 %v2865, %v3201
          %v3203 = vpop.f32.mrb[0].mxu0
          %v3204 = vpop.f32.mrb[0].mxu0
          %v3205 = vadd.f32 %v2868, %v3204
          %v3206 = vpop.f32.mrb[0].mxu0
          %3207 = vmatprep.mubr.bf16.mxu0 0
          %3208 = vmatmul.mubr.bf16.gmra.mrb[0].mxu0 %v2463
          %v3209 = vpop.f32.mrb[0].mxu0
          %v3210 = vadd.f32 %v2873, %v3209
          %v3211 = vpop.f32.mrb[0].mxu0
          %v3212 = vpop.f32.mrb[0].mxu0
          %v3213 = vadd.f32 %v2876, %v3212
          %v3214 = vpop.f32.mrb[0].mxu0
          %3215 = vmatprep.mubr.bf16.mxu0 0
          %3216 = vmatmul.mubr.bf16.gmra.mrb[0].mxu0 %v2464
          %v3217 = vpop.f32.mrb[0].mxu0
          %v3218 = vadd.f32 %v2881, %v3217
          %v3219 = vpop.f32.mrb[0].mxu0
          %v3220 = vpop.f32.mrb[0].mxu0
          %v3221 = vadd.f32 %v2884, %v3220
          %v3222 = vpop.f32.mrb[0].mxu0
          %3223 = vmatprep.mubr.bf16.mxu0 0
          %3224 = vmatmul.mubr.bf16.gmra.mrb[0].mxu0 %v2465
          %v3225 = vpop.f32.mrb[0].mxu0
          %v3226 = vadd.f32 %v2889, %v3225
          %v3227 = vpop.f32.mrb[0].mxu0
          %v3228 = vpop.f32.mrb[0].mxu0
          %v3229 = vadd.f32 %v2892, %v3228
          %v3230 = vpop.f32.mrb[0].mxu0
          %3231 = vmatprep.mubr.bf16.mxu0 0
          %3232 = vmatmul.mubr.bf16.gmra.mrb[0].mxu0 %v2466
          %v3233 = vpop.f32.mrb[0].mxu0
          %v3234 = vadd.f32 %v2897, %v3233
          %v3235 = vpop.f32.mrb[0].mxu0
          %v3236 = vpop.f32.mrb[0].mxu0
          %v3237 = vadd.f32 %v2900, %v3236
          %v3238 = vpop.f32.mrb[0].mxu0
          %3239 = vmatprep.mubr.bf16.mxu0 0
          %3240 = vmatmul.mubr.bf16.gmra.mrb[0].mxu0 %v2467
          %v3241 = vpop.f32.mrb[0].mxu0
          %v3242 = vadd.f32 %v2905, %v3241
          %v3243 = vpop.f32.mrb[0].mxu0
          %v3244 = vpop.f32.mrb[0].mxu0
          %v3245 = vadd.f32 %v2908, %v3244
          %v3246 = vpop.f32.mrb[0].mxu0
          %3247 = vmatprep.mubr.bf16.mxu0 0
          %3248 = vmatmul.mubr.bf16.gmra.mrb[0].mxu0 %v2468
          %v3249 = vpop.f32.mrb[0].mxu0
          %v3250 = vadd.f32 %v2913, %v3249
          %v3251 = vpop.f32.mrb[0].mxu0
          %v3252 = vpop.f32.mrb[0].mxu0
          %v3253 = vadd.f32 %v2916, %v3252
          %v3254 = vpop.f32.mrb[0].mxu0
          %3255 = vmatprep.mubr.bf16.mxu0 0
          %3256 = vmatmul.mubr.bf16.gmra.mrb[0].mxu0 %v2469
          %v3257 = vpop.f32.mrb[0].mxu0
          %v3258 = vadd.f32 %v2921, %v3257
          %v3259 = vpop.f32.mrb[0].mxu0
          %v3260 = vpop.f32.mrb[0].mxu0
          %v3261 = vadd.f32 %v2924, %v3260
          %v3262 = vpop.f32.mrb[0].mxu0
          %3263 = vmatprep.mubr.bf16.mxu0 0
          %3264 = vmatmul.mubr.bf16.gmra.mrb[0].mxu0 %v2470
          %v3265 = vpop.f32.mrb[0].mxu0
          %v3266 = vadd.f32 %v2929, %v3265
          %v3267 = vpop.f32.mrb[0].mxu0
          %v3268 = vpop.f32.mrb[0].mxu0
          %v3269 = vadd.f32 %v2932, %v3268
          %v3270 = vpop.f32.mrb[0].mxu0
          %3271 = vmatprep.mubr.bf16.mxu0 0
          %3272 = vmatmul.mubr.bf16.gmra.mrb[0].mxu0 %v2471
          %v3273 = vpop.f32.mrb[0].mxu0
          %v3274 = vadd.f32 %v2937, %v3273
          %v3275 = vpop.f32.mrb[0].mxu0
          %v3276 = vpop.f32.mrb[0].mxu0
          %v3277 = vadd.f32 %v2940, %v3276
          %v3278 = vpop.f32.mrb[0].mxu0
          %3279 = vmatprep.mubr.bf16.mxu0 0
          %3280 = vmatmul.mubr.bf16.gmra.mrb[0].mxu0 %v2472
          %v3281 = vpop.f32.mrb[0].mxu0
          %v3282 = vadd.f32 %v2945, %v3281
          %v3283 = vpop.f32.mrb[0].mxu0
          %v3284 = vpop.f32.mrb[0].mxu0
          %v3285 = vadd.f32 %v2948, %v3284
          %v3286 = vpop.f32.mrb[0].mxu0
          %3287 = vmatprep.mubr.bf16.mxu0 0
          %3288 = vmatmul.mubr.bf16.gmra.mrb[0].mxu0 %v2473
          %v3289 = vpop.f32.mrb[0].mxu0
          %v3290 = vadd.f32 %v2953, %v3289
          %v3291 = vpop.f32.mrb[0].mxu0
          %v3292 = vpop.f32.mrb[0].mxu0
          %v3293 = vadd.f32 %v2956, %v3292
          %v3294 = vpop.f32.mrb[0].mxu0
          %3295 = vmatprep.mubr.bf16.mxu0 0
          %3296 = vmatmul.mubr.bf16.gmra.mrb[0].mxu0 %v2474
          %v3297 = vpop.f32.mrb[0].mxu0
          %v3298 = vadd.f32 %v2961, %v3297
          %v3299 = vpop.f32.mrb[0].mxu0
          %v3300 = vpop.f32.mrb[0].mxu0
          %v3301 = vadd.f32 %v2964, %v3300
          %v3302 = vpop.f32.mrb[0].mxu0
          %3303 = vmatprep.mubr.bf16.mxu0 0
          %3304 = vmatmul.mubr.bf16.gmra.mrb[0].mxu0 %v2475
          %v3305 = vpop.f32.mrb[0].mxu0
          %v3306 = vadd.f32 %v2969, %v3305
          %v3307 = vpop.f32.mrb[0].mxu0
          %v3308 = vpop.f32.mrb[0].mxu0
          %v3309 = vadd.f32 %v2972, %v3308
          %v3310 = vpop.f32.mrb[0].mxu0
          %3311 = vmatprep.mubr.bf16.mxu0 0
          %3312 = vmatmul.mubr.bf16.gmra.mrb[0].mxu0 %v2476
          %v3313 = vpop.f32.mrb[0].mxu0
          %v3314 = vadd.f32 %v2977, %v3313
          %v3315 = vpop.f32.mrb[0].mxu0
          %v3316 = vpop.f32.mrb[0].mxu0
          %v3317 = vadd.f32 %v2980, %v3316
          %v3318 = vpop.f32.mrb[0].mxu0
          %3319 = vmatprep.mubr.bf16.mxu0 0
          %3320 = vmatmul.mubr.bf16.gmra.mrb[0].mxu0 %v2477
          %v3321 = vpop.f32.mrb[0].mxu0
          %v3322 = vadd.f32 %v2985, %v3321
          %v3323 = vpop.f32.mrb[0].mxu0
          %v3324 = vpop.f32.mrb[0].mxu0
          %v3325 = vadd.f32 %v2988, %v3324
          %v3326 = vpop.f32.mrb[0].mxu0
          %3327 = vmatprep.mubr.bf16.mxu0 0
          %3328 = vmatmul.mubr.bf16.gmra.mrb[0].mxu0 %v2478
          %v3329 = vpop.f32.mrb[0].mxu0
          %v3330 = vadd.f32 %v2993, %v3329
          %v3331 = vpop.f32.mrb[0].mxu0
          %v3332 = vpop.f32.mrb[0].mxu0
          %v3333 = vadd.f32 %v2996, %v3332
          %v3334 = vpop.f32.mrb[0].mxu0
          %3335 = vmatprep.mubr.bf16.mxu0 0
          %3336 = vmatmul.mubr.bf16.gmra.mrb[0].mxu0 %v2479
          %v3337 = vpop.f32.mrb[0].mxu0
          %v3338 = vadd.f32 %v3001, %v3337
          %v3339 = vpop.f32.mrb[0].mxu0
          %v3340 = vpop.f32.mrb[0].mxu0
          %v3341 = vadd.f32 %v3004, %v3340
          %v3342 = vpop.f32.mrb[0].mxu0
          %3343 = vmatprep.mubr.bf16.mxu0 0
          %3344 = vmatmul.mubr.bf16.gmra.mrb[0].mxu0 %v2480
          %v3345 = vpop.f32.mrb[0].mxu0
          %v3346 = vadd.f32 %v3009, %v3345
          %v3347 = vpop.f32.mrb[0].mxu0
          %v3348 = vpop.f32.mrb[0].mxu0
          %v3349 = vadd.f32 %v3012, %v3348
          %v3350 = vpop.f32.mrb[0].mxu0
          %3351 = vmatprep.mubr.bf16.mxu0 0
          %3352 = vmatmul.mubr.bf16.gmra.mrb[0].mxu0 %v2481
          %v3353 = vpop.f32.mrb[0].mxu0
          %v3354 = vadd.f32 %v3017, %v3353
          %v3355 = vpop.f32.mrb[0].mxu0
          %v3356 = vpop.f32.mrb[0].mxu0
          %v3357 = vadd.f32 %v3020, %v3356
          %v3358 = vpop.f32.mrb[0].mxu0
          %3359 = vmatprep.mubr.bf16.mxu0 0
          %3360 = vmatmul.mubr.bf16.gmra.mrb[0].mxu0 %v2482
          %v3361 = vpop.f32.mrb[0].mxu0
          %v3362 = vadd.f32 %v3025, %v3361
          %v3363 = vpop.f32.mrb[0].mxu0
          %v3364 = vpop.f32.mrb[0].mxu0
          %v3365 = vadd.f32 %v3028, %v3364
          %v3366 = vpop.f32.mrb[0].mxu0
          %3367 = vmatprep.mubr.bf16.mxu0 0
          %3368 = vmatmul.mubr.bf16.gmra.mrb[0].mxu0 %v2483
          %v3369 = vpop.f32.mrb[0].mxu0
          %v3370 = vadd.f32 %v3033, %v3369
          %v3371 = vpop.f32.mrb[0].mxu0
          %v3372 = vpop.f32.mrb[0].mxu0
          %v3373 = vadd.f32 %v3036, %v3372
          %v3374 = vpop.f32.mrb[0].mxu0
          %3375 = vmatprep.mubr.bf16.mxu0 0
          %3376 = vmatmul.mubr.bf16.gmra.mrb[0].mxu0 %v2484
          %v3377 = vpop.f32.mrb[0].mxu0
          %v3378 = vadd.f32 %v3041, %v3377
          %v3379 = vpop.f32.mrb[0].mxu0
          %v3380 = vpop.f32.mrb[0].mxu0
          %v3381 = vadd.f32 %v3044, %v3380
          %v3382 = vpop.f32.mrb[0].mxu0
          %3383 = vmatprep.mubr.bf16.mxu0 0
          %3384 = vmatmul.mubr.bf16.gmra.mrb[0].mxu0 %v2485
          %v3385 = vpop.f32.mrb[0].mxu0
          %v3386 = vadd.f32 %v3049, %v3385
          %v3387 = vpop.f32.mrb[0].mxu0
          %v3388 = vpop.f32.mrb[0].mxu0
          %v3389 = vadd.f32 %v3052, %v3388
          %v3390 = vpop.f32.mrb[0].mxu0
          %3391 = vmatprep.mubr.bf16.mxu0 0
          %3392 = vmatmul.mubr.bf16.gmra.mrb[0].mxu0 %v2486
          %v3393 = vpop.f32.mrb[0].mxu0
          %v3394 = vadd.f32 %v3057, %v3393
          %v3395 = vpop.f32.mrb[0].mxu0
          %v3396 = vpop.f32.mrb[0].mxu0
          %v3397 = vadd.f32 %v3060, %v3396
          %v3398 = vpop.f32.mrb[0].mxu0
          %3399 = vmatprep.mubr.bf16.mxu0 0
          %3400 = vmatmul.mubr.bf16.gmra.mrb[0].mxu0 %v2487
          %v3401 = vpop.f32.mrb[0].mxu0
          %v3402 = vadd.f32 %v3065, %v3401
          %v3403 = vpop.f32.mrb[0].mxu0
          %v3404 = vpop.f32.mrb[0].mxu0
          %v3405 = vadd.f32 %v3068, %v3404
          %v3406 = vpop.f32.mrb[0].mxu0
          %3407 = vmatprep.mubr.bf16.mxu0 0
          %3408 = vmatmul.mubr.bf16.gmra.mrb[0].mxu0 %v2488
          %v3409 = vpop.f32.mrb[0].mxu0
          %v3410 = vadd.f32 %v3073, %v3409
          %v3411 = vpop.f32.mrb[0].mxu0
          %v3412 = vpop.f32.mrb[0].mxu0
          %v3413 = vadd.f32 %v3076, %v3412
          %v3414 = vpop.f32.mrb[0].mxu0
          %3415 = vmatprep.mubr.bf16.mxu0 0
          %3416 = vmatmul.mubr.bf16.gmra.mrb[0].mxu0 %v2489
          %v3417 = vpop.f32.mrb[0].mxu0
          %v3418 = vadd.f32 %v3081, %v3417
          %v3419 = vpop.f32.mrb[0].mxu0
          %v3420 = vpop.f32.mrb[0].mxu0
          %v3421 = vadd.f32 %v3084, %v3420
          %v3422 = vpop.f32.mrb[0].mxu0
          %3423 = vmatprep.mubr.bf16.mxu0 0
          %3424 = vmatmul.mubr.bf16.gmra.mrb[0].mxu0 %v2490
          %v3425 = vpop.f32.mrb[0].mxu0
          %v3426 = vadd.f32 %v3089, %v3425
          %v3427 = vpop.f32.mrb[0].mxu0
          %v3428 = vpop.f32.mrb[0].mxu0
          %v3429 = vadd.f32 %v3092, %v3428
          %v3430 = vpop.f32.mrb[0].mxu0
          %3431 = vmatprep.mubr.bf16.mxu0 0
          %3432 = vmatmul.mubr.bf16.gmra.mrb[0].mxu0 %v2491
          %v3433 = vpop.f32.mrb[0].mxu0
          %v3434 = vadd.f32 %v3097, %v3433
          %v3435 = vpop.f32.mrb[0].mxu0
          %v3436 = vpop.f32.mrb[0].mxu0
          %v3437 = vadd.f32 %v3100, %v3436
          %v3438 = vpop.f32.mrb[0].mxu0
          %3439 = vmatprep.mubr.bf16.mxu0 0
          %3440 = vmatmul.mubr.bf16.gmra.mrb[0].mxu0 %v2492
          %v3441 = vpop.f32.mrb[0].mxu0
          %v3442 = vadd.f32 %v3105, %v3441
          %v3443 = vpop.f32.mrb[0].mxu0
          %v3444 = vpop.f32.mrb[0].mxu0
          %v3445 = vadd.f32 %v3108, %v3444
          %v3446 = vpop.f32.mrb[0].mxu0
          %3447 = vmatprep.mubr.bf16.mxu0 0
          %3448 = vmatmul.mubr.bf16.gmra.mrb[0].mxu0 %v2493
          %v3449 = vpop.f32.mrb[0].mxu0
          %v3450 = vadd.f32 %v3113, %v3449
          %v3451 = vpop.f32.mrb[0].mxu0
          %v3452 = vpop.f32.mrb[0].mxu0
          %v3453 = vadd.f32 %v3116, %v3452
          %v3454 = vpop.f32.mrb[0].mxu0
          %3455 = vdwg.mxu0
          %v3456 = vld [vmem:[#allocation12] sm:$0x1]
          %v3458 = vlaneseq
          %v3459 = vshrl.u32 %v3458, 7
          %v3460 = vsub.s32 0, %v3459
          %v3461 = vrot.slane %v3456, %v3460
          %v3463 = vadd.f32 %v3202, %v3461
          %v3464 = vadd.f32 %v3205, %v3461
          %v3465 = vadd.f32 %v3210, %v3461
          %v3466 = vadd.f32 %v3213, %v3461
          %v3467 = vadd.f32 %v3218, %v3461
          %v3468 = vadd.f32 %v3221, %v3461
          %v3469 = vadd.f32 %v3226, %v3461
          %v3470 = vadd.f32 %v3229, %v3461
          %v3471 = vadd.f32 %v3234, %v3461
          %v3472 = vadd.f32 %v3237, %v3461
          %v3473 = vadd.f32 %v3242, %v3461
          %v3474 = vadd.f32 %v3245, %v3461
          %v3475 = vadd.f32 %v3250, %v3461
          %v3476 = vadd.f32 %v3253, %v3461
          %v3477 = vadd.f32 %v3258, %v3461
          %v3478 = vadd.f32 %v3261, %v3461
          %v3479 = vadd.f32 %v3266, %v3461
          %v3480 = vadd.f32 %v3269, %v3461
          %v3481 = vadd.f32 %v3274, %v3461
          %v3482 = vadd.f32 %v3277, %v3461
          %v3483 = vadd.f32 %v3282, %v3461
          %v3484 = vadd.f32 %v3285, %v3461
          %v3485 = vadd.f32 %v3290, %v3461
          %v3486 = vadd.f32 %v3293, %v3461
          %v3487 = vadd.f32 %v3298, %v3461
          %v3488 = vadd.f32 %v3301, %v3461
          %v3489 = vadd.f32 %v3306, %v3461
          %v3490 = vadd.f32 %v3309, %v3461
          %v3491 = vadd.f32 %v3314, %v3461
          %v3492 = vadd.f32 %v3317, %v3461
          %v3493 = vadd.f32 %v3322, %v3461
          %v3494 = vadd.f32 %v3325, %v3461
          %v3495 = vadd.f32 %v3330, %v3461
          %v3496 = vadd.f32 %v3333, %v3461
          %v3497 = vadd.f32 %v3338, %v3461
          %v3498 = vadd.f32 %v3341, %v3461
          %v3499 = vadd.f32 %v3346, %v3461
          %v3500 = vadd.f32 %v3349, %v3461
          %v3501 = vadd.f32 %v3354, %v3461
          %v3502 = vadd.f32 %v3357, %v3461
          %v3503 = vadd.f32 %v3362, %v3461
          %v3504 = vadd.f32 %v3365, %v3461
          %v3505 = vadd.f32 %v3370, %v3461
          %v3506 = vadd.f32 %v3373, %v3461
          %v3507 = vadd.f32 %v3378, %v3461
          %v3508 = vadd.f32 %v3381, %v3461
          %v3509 = vadd.f32 %v3386, %v3461
          %v3510 = vadd.f32 %v3389, %v3461
          %v3511 = vadd.f32 %v3394, %v3461
          %v3512 = vadd.f32 %v3397, %v3461
          %v3513 = vadd.f32 %v3402, %v3461
          %v3514 = vadd.f32 %v3405, %v3461
          %v3515 = vadd.f32 %v3410, %v3461
          %v3516 = vadd.f32 %v3413, %v3461
          %v3517 = vadd.f32 %v3418, %v3461
          %v3518 = vadd.f32 %v3421, %v3461
          %v3519 = vadd.f32 %v3426, %v3461
          %v3520 = vadd.f32 %v3429, %v3461
          %v3521 = vadd.f32 %v3434, %v3461
          %v3522 = vadd.f32 %v3437, %v3461
          %v3523 = vadd.f32 %v3442, %v3461
          %v3524 = vadd.f32 %v3445, %v3461
          %v3525 = vadd.f32 %v3450, %v3461
          %v3526 = vadd.f32 %v3453, %v3461
          %v3527 = vxor.u32 %v3463, 2147483648
          %v3528 = vxor.u32 %v3464, 2147483648
          %v3529 = vxor.u32 %v3465, 2147483648
          %v3530 = vxor.u32 %v3466, 2147483648
          %v3531 = vxor.u32 %v3467, 2147483648
          %v3532 = vxor.u32 %v3468, 2147483648
          %v3533 = vxor.u32 %v3469, 2147483648
          %v3534 = vxor.u32 %v3470, 2147483648
          %v3535 = vxor.u32 %v3471, 2147483648
          %v3536 = vxor.u32 %v3472, 2147483648
          %v3537 = vxor.u32 %v3473, 2147483648
          %v3538 = vxor.u32 %v3474, 2147483648
          %v3539 = vxor.u32 %v3475, 2147483648
          %v3540 = vxor.u32 %v3476, 2147483648
          %v3541 = vxor.u32 %v3477, 2147483648
          %v3542 = vxor.u32 %v3478, 2147483648
          %v3543 = vxor.u32 %v3479, 2147483648
          %v3544 = vxor.u32 %v3480, 2147483648
          %v3545 = vxor.u32 %v3481, 2147483648
          %v3546 = vxor.u32 %v3482, 2147483648
          %v3547 = vxor.u32 %v3483, 2147483648
          %v3548 = vxor.u32 %v3484, 2147483648
          %v3549 = vxor.u32 %v3485, 2147483648
          %v3550 = vxor.u32 %v3486, 2147483648
          %v3551 = vxor.u32 %v3487, 2147483648
          %v3552 = vxor.u32 %v3488, 2147483648
          %v3553 = vxor.u32 %v3489, 2147483648
          %v3554 = vxor.u32 %v3490, 2147483648
          %v3555 = vxor.u32 %v3491, 2147483648
          %v3556 = vxor.u32 %v3492, 2147483648
          %v3557 = vxor.u32 %v3493, 2147483648
          %v3558 = vxor.u32 %v3494, 2147483648
          %v3559 = vxor.u32 %v3495, 2147483648
          %v3560 = vxor.u32 %v3496, 2147483648
          %v3561 = vxor.u32 %v3497, 2147483648
          %v3562 = vxor.u32 %v3498, 2147483648
          %v3563 = vxor.u32 %v3499, 2147483648
          %v3564 = vxor.u32 %v3500, 2147483648
          %v3565 = vxor.u32 %v3501, 2147483648
          %v3566 = vxor.u32 %v3502, 2147483648
          %v3567 = vxor.u32 %v3503, 2147483648
          %v3568 = vxor.u32 %v3504, 2147483648
          %v3569 = vxor.u32 %v3505, 2147483648
          %v3570 = vxor.u32 %v3506, 2147483648
          %v3571 = vxor.u32 %v3507, 2147483648
          %v3572 = vxor.u32 %v3508, 2147483648
          %v3573 = vxor.u32 %v3509, 2147483648
          %v3574 = vxor.u32 %v3510, 2147483648
          %v3575 = vxor.u32 %v3511, 2147483648
          %v3576 = vxor.u32 %v3512, 2147483648
          %v3577 = vxor.u32 %v3513, 2147483648
          %v3578 = vxor.u32 %v3514, 2147483648
          %v3579 = vxor.u32 %v3515, 2147483648
          %v3580 = vxor.u32 %v3516, 2147483648
          %v3581 = vxor.u32 %v3517, 2147483648
          %v3582 = vxor.u32 %v3518, 2147483648
          %v3583 = vxor.u32 %v3519, 2147483648
          %v3584 = vxor.u32 %v3520, 2147483648
          %v3585 = vxor.u32 %v3521, 2147483648
          %v3586 = vxor.u32 %v3522, 2147483648
          %v3587 = vxor.u32 %v3523, 2147483648
          %v3588 = vxor.u32 %v3524, 2147483648
          %v3589 = vxor.u32 %v3525, 2147483648
          %v3590 = vxor.u32 %v3526, 2147483648
          %v3591 = vmul.f32 %v3527, 1.442695
          %v3592 = vpow.pop %v3591
          %v3593 = vmul.f32 %v3528, 1.442695
          %v3594 = vpow.pop %v3593
          %v3595 = vmul.f32 %v3529, 1.442695
          %v3596 = vpow.pop %v3595
          %v3597 = vmul.f32 %v3530, 1.442695
          %v3598 = vpow.pop %v3597
          %v3599 = vmul.f32 %v3531, 1.442695
          %v3600 = vpow.pop %v3599
          %v3601 = vmul.f32 %v3532, 1.442695
          %v3602 = vpow.pop %v3601
          %v3603 = vmul.f32 %v3533, 1.442695
          %v3604 = vpow.pop %v3603
          %v3605 = vmul.f32 %v3534, 1.442695
          %v3606 = vpow.pop %v3605
          %v3607 = vmul.f32 %v3535, 1.442695
          %v3608 = vpow.pop %v3607
          %v3609 = vmul.f32 %v3536, 1.442695
          %v3610 = vpow.pop %v3609
          %v3611 = vmul.f32 %v3537, 1.442695
          %v3612 = vpow.pop %v3611
          %v3613 = vmul.f32 %v3538, 1.442695
          %v3614 = vpow.pop %v3613
          %v3615 = vmul.f32 %v3539, 1.442695
          %v3616 = vpow.pop %v3615
          %v3617 = vmul.f32 %v3540, 1.442695
          %v3618 = vpow.pop %v3617
          %v3619 = vmul.f32 %v3541, 1.442695
          %v3620 = vpow.pop %v3619
          %v3621 = vmul.f32 %v3542, 1.442695
          %v3622 = vpow.pop %v3621
          %v3623 = vmul.f32 %v3543, 1.442695
          %v3624 = vpow.pop %v3623
          %v3625 = vmul.f32 %v3544, 1.442695
          %v3626 = vpow.pop %v3625
          %v3627 = vmul.f32 %v3545, 1.442695
          %v3628 = vpow.pop %v3627
          %v3629 = vmul.f32 %v3546, 1.442695
          %v3630 = vpow.pop %v3629
          %v3631 = vmul.f32 %v3547, 1.442695
          %v3632 = vpow.pop %v3631
          %v3633 = vmul.f32 %v3548, 1.442695
          %v3634 = vpow.pop %v3633
          %v3635 = vmul.f32 %v3549, 1.442695
          %v3636 = vpow.pop %v3635
          %v3637 = vmul.f32 %v3550, 1.442695
          %v3638 = vpow.pop %v3637
          %v3639 = vmul.f32 %v3551, 1.442695
          %v3640 = vpow.pop %v3639
          %v3641 = vmul.f32 %v3552, 1.442695
          %v3642 = vpow.pop %v3641
          %v3643 = vmul.f32 %v3553, 1.442695
          %v3644 = vpow.pop %v3643
          %v3645 = vmul.f32 %v3554, 1.442695
          %v3646 = vpow.pop %v3645
          %v3647 = vmul.f32 %v3555, 1.442695
          %v3648 = vpow.pop %v3647
          %v3649 = vmul.f32 %v3556, 1.442695
          %v3650 = vpow.pop %v3649
          %v3651 = vmul.f32 %v3557, 1.442695
          %v3652 = vpow.pop %v3651
          %v3653 = vmul.f32 %v3558, 1.442695
          %v3654 = vpow.pop %v3653
          %v3655 = vmul.f32 %v3559, 1.442695
          %v3656 = vpow.pop %v3655
          %v3657 = vmul.f32 %v3560, 1.442695
          %v3658 = vpow.pop %v3657
          %v3659 = vmul.f32 %v3561, 1.442695
          %v3660 = vpow.pop %v3659
          %v3661 = vmul.f32 %v3562, 1.442695
          %v3662 = vpow.pop %v3661
          %v3663 = vmul.f32 %v3563, 1.442695
          %v3664 = vpow.pop %v3663
          %v3665 = vmul.f32 %v3564, 1.442695
          %v3666 = vpow.pop %v3665
          %v3667 = vmul.f32 %v3565, 1.442695
          %v3668 = vpow.pop %v3667
          %v3669 = vmul.f32 %v3566, 1.442695
          %v3670 = vpow.pop %v3669
          %v3671 = vmul.f32 %v3567, 1.442695
          %v3672 = vpow.pop %v3671
          %v3673 = vmul.f32 %v3568, 1.442695
          %v3674 = vpow.pop %v3673
          %v3675 = vmul.f32 %v3569, 1.442695
          %v3676 = vpow.pop %v3675
          %v3677 = vmul.f32 %v3570, 1.442695
          %v3678 = vpow.pop %v3677
          %v3679 = vmul.f32 %v3571, 1.442695
          %v3680 = vpow.pop %v3679
          %v3681 = vmul.f32 %v3572, 1.442695
          %v3682 = vpow.pop %v3681
          %v3683 = vmul.f32 %v3573, 1.442695
          %v3684 = vpow.pop %v3683
          %v3685 = vmul.f32 %v3574, 1.442695
          %v3686 = vpow.pop %v3685
          %v3687 = vmul.f32 %v3575, 1.442695
          %v3688 = vpow.pop %v3687
          %v3689 = vmul.f32 %v3576, 1.442695
          %v3690 = vpow.pop %v3689
          %v3691 = vmul.f32 %v3577, 1.442695
          %v3692 = vpow.pop %v3691
          %v3693 = vmul.f32 %v3578, 1.442695
          %v3694 = vpow.pop %v3693
          %v3695 = vmul.f32 %v3579, 1.442695
          %v3696 = vpow.pop %v3695
          %v3697 = vmul.f32 %v3580, 1.442695
          %v3698 = vpow.pop %v3697
          %v3699 = vmul.f32 %v3581, 1.442695
          %v3700 = vpow.pop %v3699
          %v3701 = vmul.f32 %v3582, 1.442695
          %v3702 = vpow.pop %v3701
          %v3703 = vmul.f32 %v3583, 1.442695
          %v3704 = vpow.pop %v3703
          %v3705 = vmul.f32 %v3584, 1.442695
          %v3706 = vpow.pop %v3705
          %v3707 = vmul.f32 %v3585, 1.442695
          %v3708 = vpow.pop %v3707
          %v3709 = vmul.f32 %v3586, 1.442695
          %v3710 = vpow.pop %v3709
          %v3711 = vmul.f32 %v3587, 1.442695
          %v3712 = vpow.pop %v3711
          %v3713 = vmul.f32 %v3588, 1.442695
          %v3714 = vpow.pop %v3713
          %v3715 = vmul.f32 %v3589, 1.442695
          %v3716 = vpow.pop %v3715
          %v3717 = vmul.f32 %v3590, 1.442695
          %v3718 = vpow.pop %v3717
          %v3719 = vadd.f32 %v3592, 1.0
          %v3720 = vadd.f32 %v3594, 1.0
          %v3721 = vadd.f32 %v3596, 1.0
          %v3722 = vadd.f32 %v3598, 1.0
          %v3723 = vadd.f32 %v3600, 1.0
          %v3724 = vadd.f32 %v3602, 1.0
          %v3725 = vadd.f32 %v3604, 1.0
          %v3726 = vadd.f32 %v3606, 1.0
          %v3727 = vadd.f32 %v3608, 1.0
          %v3728 = vadd.f32 %v3610, 1.0
          %v3729 = vadd.f32 %v3612, 1.0
          %v3730 = vadd.f32 %v3614, 1.0
          %v3731 = vadd.f32 %v3616, 1.0
          %v3732 = vadd.f32 %v3618, 1.0
          %v3733 = vadd.f32 %v3620, 1.0
          %v3734 = vadd.f32 %v3622, 1.0
          %v3735 = vadd.f32 %v3624, 1.0
          %v3736 = vadd.f32 %v3626, 1.0
          %v3737 = vadd.f32 %v3628, 1.0
          %v3738 = vadd.f32 %v3630, 1.0
          %v3739 = vadd.f32 %v3632, 1.0
          %v3740 = vadd.f32 %v3634, 1.0
          %v3741 = vadd.f32 %v3636, 1.0
          %v3742 = vadd.f32 %v3638, 1.0
          %v3743 = vadd.f32 %v3640, 1.0
          %v3744 = vadd.f32 %v3642, 1.0
          %v3745 = vadd.f32 %v3644, 1.0
          %v3746 = vadd.f32 %v3646, 1.0
          %v3747 = vadd.f32 %v3648, 1.0
          %v3748 = vadd.f32 %v3650, 1.0
          %v3749 = vadd.f32 %v3652, 1.0
          %v3750 = vadd.f32 %v3654, 1.0
          %v3751 = vadd.f32 %v3656, 1.0
          %v3752 = vadd.f32 %v3658, 1.0
          %v3753 = vadd.f32 %v3660, 1.0
          %v3754 = vadd.f32 %v3662, 1.0
          %v3755 = vadd.f32 %v3664, 1.0
          %v3756 = vadd.f32 %v3666, 1.0
          %v3757 = vadd.f32 %v3668, 1.0
          %v3758 = vadd.f32 %v3670, 1.0
          %v3759 = vadd.f32 %v3672, 1.0
          %v3760 = vadd.f32 %v3674, 1.0
          %v3761 = vadd.f32 %v3676, 1.0
          %v3762 = vadd.f32 %v3678, 1.0
          %v3763 = vadd.f32 %v3680, 1.0
          %v3764 = vadd.f32 %v3682, 1.0
          %v3765 = vadd.f32 %v3684, 1.0
          %v3766 = vadd.f32 %v3686, 1.0
          %v3767 = vadd.f32 %v3688, 1.0
          %v3768 = vadd.f32 %v3690, 1.0
          %v3769 = vadd.f32 %v3692, 1.0
          %v3770 = vadd.f32 %v3694, 1.0
          %v3771 = vadd.f32 %v3696, 1.0
          %v3772 = vadd.f32 %v3698, 1.0
          %v3773 = vadd.f32 %v3700, 1.0
          %v3774 = vadd.f32 %v3702, 1.0
          %v3775 = vadd.f32 %v3704, 1.0
          %v3776 = vadd.f32 %v3706, 1.0
          %v3777 = vadd.f32 %v3708, 1.0
          %v3778 = vadd.f32 %v3710, 1.0
          %v3779 = vadd.f32 %v3712, 1.0
          %v3780 = vadd.f32 %v3714, 1.0
          %v3781 = vadd.f32 %v3716, 1.0
          %v3782 = vadd.f32 %v3718, 1.0
          %v3783 = vrcp.pop %v3719
          %v3784 = vmul.f32 1.0, %v3783
          %v3785 = vrcp.pop %v3720
          %v3786 = vmul.f32 1.0, %v3785
          %v3787 = vrcp.pop %v3721
          %v3788 = vmul.f32 1.0, %v3787
          %v3789 = vrcp.pop %v3722
          %v3790 = vmul.f32 1.0, %v3789
          %v3791 = vrcp.pop %v3723
          %v3792 = vmul.f32 1.0, %v3791
          %v3793 = vrcp.pop %v3724
          %v3794 = vmul.f32 1.0, %v3793
          %v3795 = vrcp.pop %v3725
          %v3796 = vmul.f32 1.0, %v3795
          %v3797 = vrcp.pop %v3726
          %v3798 = vmul.f32 1.0, %v3797
          %v3799 = vrcp.pop %v3727
          %v3800 = vmul.f32 1.0, %v3799
          %v3801 = vrcp.pop %v3728
          %v3802 = vmul.f32 1.0, %v3801
          %v3803 = vrcp.pop %v3729
          %v3804 = vmul.f32 1.0, %v3803
          %v3805 = vrcp.pop %v3730
          %v3806 = vmul.f32 1.0, %v3805
          %v3807 = vrcp.pop %v3731
          %v3808 = vmul.f32 1.0, %v3807
          %v3809 = vrcp.pop %v3732
          %v3810 = vmul.f32 1.0, %v3809
          %v3811 = vrcp.pop %v3733
          %v3812 = vmul.f32 1.0, %v3811
          %v3813 = vrcp.pop %v3734
          %v3814 = vmul.f32 1.0, %v3813
          %v3815 = vrcp.pop %v3735
          %v3816 = vmul.f32 1.0, %v3815
          %v3817 = vrcp.pop %v3736
          %v3818 = vmul.f32 1.0, %v3817
          %v3819 = vrcp.pop %v3737
          %v3820 = vmul.f32 1.0, %v3819
          %v3821 = vrcp.pop %v3738
          %v3822 = vmul.f32 1.0, %v3821
          %v3823 = vrcp.pop %v3739
          %v3824 = vmul.f32 1.0, %v3823
          %v3825 = vrcp.pop %v3740
          %v3826 = vmul.f32 1.0, %v3825
          %v3827 = vrcp.pop %v3741
          %v3828 = vmul.f32 1.0, %v3827
          %v3829 = vrcp.pop %v3742
          %v3830 = vmul.f32 1.0, %v3829
          %v3831 = vrcp.pop %v3743
          %v3832 = vmul.f32 1.0, %v3831
          %v3833 = vrcp.pop %v3744
          %v3834 = vmul.f32 1.0, %v3833
          %v3835 = vrcp.pop %v3745
          %v3836 = vmul.f32 1.0, %v3835
          %v3837 = vrcp.pop %v3746
          %v3838 = vmul.f32 1.0, %v3837
          %v3839 = vrcp.pop %v3747
          %v3840 = vmul.f32 1.0, %v3839
          %v3841 = vrcp.pop %v3748
          %v3842 = vmul.f32 1.0, %v3841
          %v3843 = vrcp.pop %v3749
          %v3844 = vmul.f32 1.0, %v3843
          %v3845 = vrcp.pop %v3750
          %v3846 = vmul.f32 1.0, %v3845
          %v3847 = vrcp.pop %v3751
          %v3848 = vmul.f32 1.0, %v3847
          %v3849 = vrcp.pop %v3752
          %v3850 = vmul.f32 1.0, %v3849
          %v3851 = vrcp.pop %v3753
          %v3852 = vmul.f32 1.0, %v3851
          %v3853 = vrcp.pop %v3754
          %v3854 = vmul.f32 1.0, %v3853
          %v3855 = vrcp.pop %v3755
          %v3856 = vmul.f32 1.0, %v3855
          %v3857 = vrcp.pop %v3756
          %v3858 = vmul.f32 1.0, %v3857
          %v3859 = vrcp.pop %v3757
          %v3860 = vmul.f32 1.0, %v3859
          %v3861 = vrcp.pop %v3758
          %v3862 = vmul.f32 1.0, %v3861
          %v3863 = vrcp.pop %v3759
          %v3864 = vmul.f32 1.0, %v3863
          %v3865 = vrcp.pop %v3760
          %v3866 = vmul.f32 1.0, %v3865
          %v3867 = vrcp.pop %v3761
          %v3868 = vmul.f32 1.0, %v3867
          %v3869 = vrcp.pop %v3762
          %v3870 = vmul.f32 1.0, %v3869
          %v3871 = vrcp.pop %v3763
          %v3872 = vmul.f32 1.0, %v3871
          %v3873 = vrcp.pop %v3764
          %v3874 = vmul.f32 1.0, %v3873
          %v3875 = vrcp.pop %v3765
          %v3876 = vmul.f32 1.0, %v3875
          %v3877 = vrcp.pop %v3766
          %v3878 = vmul.f32 1.0, %v3877
          %v3879 = vrcp.pop %v3767
          %v3880 = vmul.f32 1.0, %v3879
          %v3881 = vrcp.pop %v3768
          %v3882 = vmul.f32 1.0, %v3881
          %v3883 = vrcp.pop %v3769
          %v3884 = vmul.f32 1.0, %v3883
          %v3885 = vrcp.pop %v3770
          %v3886 = vmul.f32 1.0, %v3885
          %v3887 = vrcp.pop %v3771
          %v3888 = vmul.f32 1.0, %v3887
          %v3889 = vrcp.pop %v3772
          %v3890 = vmul.f32 1.0, %v3889
          %v3891 = vrcp.pop %v3773
          %v3892 = vmul.f32 1.0, %v3891
          %v3893 = vrcp.pop %v3774
          %v3894 = vmul.f32 1.0, %v3893
          %v3895 = vrcp.pop %v3775
          %v3896 = vmul.f32 1.0, %v3895
          %v3897 = vrcp.pop %v3776
          %v3898 = vmul.f32 1.0, %v3897
          %v3899 = vrcp.pop %v3777
          %v3900 = vmul.f32 1.0, %v3899
          %v3901 = vrcp.pop %v3778
          %v3902 = vmul.f32 1.0, %v3901
          %v3903 = vrcp.pop %v3779
          %v3904 = vmul.f32 1.0, %v3903
          %v3905 = vrcp.pop %v3780
          %v3906 = vmul.f32 1.0, %v3905
          %v3907 = vrcp.pop %v3781
          %v3908 = vmul.f32 1.0, %v3907
          %v3909 = vrcp.pop %v3782
          %v3910 = vmul.f32 1.0, %v3909
          %v3911 = vpack.c.bf16 %v3786, %v3784
          %v3912 = vpack.c.bf16 %v3790, %v3788
          %v3913 = vpack.c.bf16 %v3794, %v3792
          %v3914 = vpack.c.bf16 %v3798, %v3796
          %v3915 = vpack.c.bf16 %v3802, %v3800
          %v3916 = vpack.c.bf16 %v3806, %v3804
          %v3917 = vpack.c.bf16 %v3810, %v3808
          %v3918 = vpack.c.bf16 %v3814, %v3812
          %v3919 = vpack.c.bf16 %v3818, %v3816
          %v3920 = vpack.c.bf16 %v3822, %v3820
          %v3921 = vpack.c.bf16 %v3826, %v3824
          %v3922 = vpack.c.bf16 %v3830, %v3828
          %v3923 = vpack.c.bf16 %v3834, %v3832
          %v3924 = vpack.c.bf16 %v3838, %v3836
          %v3925 = vpack.c.bf16 %v3842, %v3840
          %v3926 = vpack.c.bf16 %v3846, %v3844
          %v3927 = vpack.c.bf16 %v3850, %v3848
          %v3928 = vpack.c.bf16 %v3854, %v3852
          %v3929 = vpack.c.bf16 %v3858, %v3856
          %v3930 = vpack.c.bf16 %v3862, %v3860
          %v3931 = vpack.c.bf16 %v3866, %v3864
          %v3932 = vpack.c.bf16 %v3870, %v3868
          %v3933 = vpack.c.bf16 %v3874, %v3872
          %v3934 = vpack.c.bf16 %v3878, %v3876
          %v3935 = vpack.c.bf16 %v3882, %v3880
          %v3936 = vpack.c.bf16 %v3886, %v3884
          %v3937 = vpack.c.bf16 %v3890, %v3888
          %v3938 = vpack.c.bf16 %v3894, %v3892
          %v3939 = vpack.c.bf16 %v3898, %v3896
          %v3940 = vpack.c.bf16 %v3902, %v3900
          %v3941 = vpack.c.bf16 %v3906, %v3904
          %v3942 = vpack.c.bf16 %v3910, %v3908
          %v3943 = vld [vmem:[#allocation14] sm:$0xff]
          %v3944 = vld [vmem:[#allocation14 + $0x8] sm:$0xff]
          %v3945 = vld [vmem:[#allocation14 + $0x10] sm:$0xff]
          %v3946 = vld [vmem:[#allocation14 + $0x18] sm:$0xff]
          %v3947 = vld [vmem:[#allocation14 + $0x20] sm:$0xff]
          %v3948 = vld [vmem:[#allocation14 + $0x28] sm:$0xff]
          %v3949 = vld [vmem:[#allocation14 + $0x30] sm:$0xff]
          %v3950 = vld [vmem:[#allocation14 + $0x38] sm:$0xff]
          %v3951 = vld [vmem:[#allocation14 + $0x40] sm:$0xff]
          %v3952 = vld [vmem:[#allocation14 + $0x48] sm:$0xff]
          %v3953 = vld [vmem:[#allocation14 + $0x50] sm:$0xff]
          %v3954 = vld [vmem:[#allocation14 + $0x58] sm:$0xff]
          %v3955 = vld [vmem:[#allocation14 + $0x60] sm:$0xff]
          %v3956 = vld [vmem:[#allocation14 + $0x68] sm:$0xff]
          %v3957 = vld [vmem:[#allocation14 + $0x70] sm:$0xff]
          %v3958 = vld [vmem:[#allocation14 + $0x78] sm:$0xff]
          %v3975 = vunpack.c.l.b16 %v3943
          %v3976 = vunpack.c.h.b16 %v3943
          %v3977 = vunpack.c.l.b16 %v3944
          %v3978 = vunpack.c.h.b16 %v3944
          %v3979 = vunpack.c.l.b16 %v3945
          %v3980 = vunpack.c.h.b16 %v3945
          %v3981 = vunpack.c.l.b16 %v3946
          %v3982 = vunpack.c.h.b16 %v3946
          %v3983 = vunpack.c.l.b16 %v3947
          %v3984 = vunpack.c.h.b16 %v3947
          %v3985 = vunpack.c.l.b16 %v3948
          %v3986 = vunpack.c.h.b16 %v3948
          %v3987 = vunpack.c.l.b16 %v3949
          %v3988 = vunpack.c.h.b16 %v3949
          %v3989 = vunpack.c.l.b16 %v3950
          %v3990 = vunpack.c.h.b16 %v3950
          %v3991 = vunpack.c.l.b16 %v3951
          %v3992 = vunpack.c.h.b16 %v3951
          %v3993 = vunpack.c.l.b16 %v3952
          %v3994 = vunpack.c.h.b16 %v3952
          %v3995 = vunpack.c.l.b16 %v3953
          %v3996 = vunpack.c.h.b16 %v3953
          %v3997 = vunpack.c.l.b16 %v3954
          %v3998 = vunpack.c.h.b16 %v3954
          %v3999 = vunpack.c.l.b16 %v3955
          %v4000 = vunpack.c.h.b16 %v3955
          %v4001 = vunpack.c.l.b16 %v3956
          %v4002 = vunpack.c.h.b16 %v3956
          %v4003 = vunpack.c.l.b16 %v3957
          %v4004 = vunpack.c.h.b16 %v3957
          %v4005 = vunpack.c.l.b16 %v3958
          %v4006 = vunpack.c.h.b16 %v3958
          %v4007 = vpack.c.b16 %v3977, %v3975
          %v4008 = vpack.c.b16 %v3978, %v3976
          %v4009 = vpack.c.b16 %v3981, %v3979
          %v4010 = vpack.c.b16 %v3982, %v3980
          %v4011 = vpack.c.b16 %v3985, %v3983
          %v4012 = vpack.c.b16 %v3986, %v3984
          %v4013 = vpack.c.b16 %v3989, %v3987
          %v4014 = vpack.c.b16 %v3990, %v3988
          %v4015 = vpack.c.b16 %v3993, %v3991
          %v4016 = vpack.c.b16 %v3994, %v3992
          %v4017 = vpack.c.b16 %v3997, %v3995
          %v4018 = vpack.c.b16 %v3998, %v3996
          %v4019 = vpack.c.b16 %v4001, %v3999
          %v4020 = vpack.c.b16 %v4002, %v4000
          %v4021 = vpack.c.b16 %v4005, %v4003
          %v4022 = vpack.c.b16 %v4006, %v4004
          %4039 = vmatprep.subr.bf16.mxu0 %v4008
          %4040 = vmatpush1.bf16.msra.mxu0 %v4007
          %4041 = vmatprep.subr.bf16.mxu0 %v4010
          %4042 = vmatpush1.bf16.msra.mxu0 %v4009
          %4043 = vmatprep.subr.bf16.mxu0 %v4012
          %4044 = vmatpush1.bf16.msra.mxu0 %v4011
          %4045 = vmatprep.subr.bf16.mxu0 %v4014
          %4046 = vmatpush1.bf16.msra.mxu0 %v4013
          %4047 = vmatprep.subr.bf16.mxu0 %v4016
          %4048 = vmatpush1.bf16.msra.mxu0 %v4015
          %4049 = vmatprep.subr.bf16.mxu0 %v4018
          %4050 = vmatpush1.bf16.msra.mxu0 %v4017
          %4051 = vmatprep.subr.bf16.mxu0 %v4020
          %4052 = vmatpush1.bf16.msra.mxu0 %v4019
          %4053 = vmatprep.subr.bf16.mxu0 %v4022
          %4054 = vmatpush1.bf16.msra.mxu0 %v4021
          %4055 = vmatprep.subr.bf16.mxu0 0
          %4056 = vmatpush1.bf16.msra.mxu0 0
          %4057 = vmatprep.subr.bf16.mxu0 0
          %4058 = vmatpush1.bf16.msra.mxu0 0
          %4059 = vmatprep.subr.bf16.mxu0 0
          %4060 = vmatpush1.bf16.msra.mxu0 0
          %4061 = vmatprep.subr.bf16.mxu0 0
          %4062 = vmatpush1.bf16.msra.mxu0 0
          %4063 = vmatprep.subr.bf16.mxu0 0
          %4064 = vmatpush1.bf16.msra.mxu0 0
          %4065 = vmatprep.subr.bf16.mxu0 0
          %4066 = vmatpush1.bf16.msra.mxu0 0
          %4067 = vmatprep.subr.bf16.mxu0 0
          %4068 = vmatpush1.bf16.msra.mxu0 0
          %4069 = vmatprep.subr.bf16.mxu0 0
          %4070 = vmatpush1.bf16.msra.mxu0 0
          %4071 = vmatprep.mubr.bf16.mxu0 0
          %4072 = vmatmul.mubr.bf16.gmra.mrb[0].mxu0 %v3911
          %v4073 = vpop.f32.mrb[0].mxu0
          %v4074 = vadd.f32 0.0, %v4073
          %v4075 = vpop.f32.mrb[0].mxu0
          %v4076 = vadd.f32 0.0, %v4075
          %v4077 = vpop.f32.mrb[0].mxu0
          %v4078 = vadd.f32 0.0, %v4077
          %v4079 = vpop.f32.mrb[0].mxu0
          %v4080 = vadd.f32 0.0, %v4079
          %4081 = vmatprep.mubr.bf16.mxu0 0
          %4082 = vmatmul.mubr.bf16.gmra.mrb[0].mxu0 %v3912
          %v4083 = vpop.f32.mrb[0].mxu0
          %v4084 = vadd.f32 0.0, %v4083
          %v4085 = vpop.f32.mrb[0].mxu0
          %v4086 = vadd.f32 0.0, %v4085
          %v4087 = vpop.f32.mrb[0].mxu0
          %v4088 = vadd.f32 0.0, %v4087
          %v4089 = vpop.f32.mrb[0].mxu0
          %v4090 = vadd.f32 0.0, %v4089
          %4091 = vmatprep.mubr.bf16.mxu0 0
          %4092 = vmatmul.mubr.bf16.gmra.mrb[0].mxu0 %v3913
          %v4093 = vpop.f32.mrb[0].mxu0
          %v4094 = vadd.f32 0.0, %v4093
          %v4095 = vpop.f32.mrb[0].mxu0
          %v4096 = vadd.f32 0.0, %v4095
          %v4097 = vpop.f32.mrb[0].mxu0
          %v4098 = vadd.f32 0.0, %v4097
          %v4099 = vpop.f32.mrb[0].mxu0
          %v4100 = vadd.f32 0.0, %v4099
          %4101 = vmatprep.mubr.bf16.mxu0 0
          %4102 = vmatmul.mubr.bf16.gmra.mrb[0].mxu0 %v3914
          %v4103 = vpop.f32.mrb[0].mxu0
          %v4104 = vadd.f32 0.0, %v4103
          %v4105 = vpop.f32.mrb[0].mxu0
          %v4106 = vadd.f32 0.0, %v4105
          %v4107 = vpop.f32.mrb[0].mxu0
          %v4108 = vadd.f32 0.0, %v4107
          %v4109 = vpop.f32.mrb[0].mxu0
          %v4110 = vadd.f32 0.0, %v4109
          %4111 = vmatprep.mubr.bf16.mxu0 0
          %4112 = vmatmul.mubr.bf16.gmra.mrb[0].mxu0 %v3915
          %v4113 = vpop.f32.mrb[0].mxu0
          %v4114 = vadd.f32 0.0, %v4113
          %v4115 = vpop.f32.mrb[0].mxu0
          %v4116 = vadd.f32 0.0, %v4115
          %v4117 = vpop.f32.mrb[0].mxu0
          %v4118 = vadd.f32 0.0, %v4117
          %v4119 = vpop.f32.mrb[0].mxu0
          %v4120 = vadd.f32 0.0, %v4119
          %4121 = vmatprep.mubr.bf16.mxu0 0
          %4122 = vmatmul.mubr.bf16.gmra.mrb[0].mxu0 %v3916
          %v4123 = vpop.f32.mrb[0].mxu0
          %v4124 = vadd.f32 0.0, %v4123
          %v4125 = vpop.f32.mrb[0].mxu0
          %v4126 = vadd.f32 0.0, %v4125
          %v4127 = vpop.f32.mrb[0].mxu0
          %v4128 = vadd.f32 0.0, %v4127
          %v4129 = vpop.f32.mrb[0].mxu0
          %v4130 = vadd.f32 0.0, %v4129
          %4131 = vmatprep.mubr.bf16.mxu0 0
          %4132 = vmatmul.mubr.bf16.gmra.mrb[0].mxu0 %v3917
          %v4133 = vpop.f32.mrb[0].mxu0
          %v4134 = vadd.f32 0.0, %v4133
          %v4135 = vpop.f32.mrb[0].mxu0
          %v4136 = vadd.f32 0.0, %v4135
          %v4137 = vpop.f32.mrb[0].mxu0
          %v4138 = vadd.f32 0.0, %v4137
          %v4139 = vpop.f32.mrb[0].mxu0
          %v4140 = vadd.f32 0.0, %v4139
          %4141 = vmatprep.mubr.bf16.mxu0 0
          %4142 = vmatmul.mubr.bf16.gmra.mrb[0].mxu0 %v3918
          %v4143 = vpop.f32.mrb[0].mxu0
          %v4144 = vadd.f32 0.0, %v4143
          %v4145 = vpop.f32.mrb[0].mxu0
          %v4146 = vadd.f32 0.0, %v4145
          %v4147 = vpop.f32.mrb[0].mxu0
          %v4148 = vadd.f32 0.0, %v4147
          %v4149 = vpop.f32.mrb[0].mxu0
          %v4150 = vadd.f32 0.0, %v4149
          %4151 = vmatprep.mubr.bf16.mxu0 0
          %4152 = vmatmul.mubr.bf16.gmra.mrb[0].mxu0 %v3919
          %v4153 = vpop.f32.mrb[0].mxu0
          %v4154 = vadd.f32 0.0, %v4153
          %v4155 = vpop.f32.mrb[0].mxu0
          %v4156 = vadd.f32 0.0, %v4155
          %v4157 = vpop.f32.mrb[0].mxu0
          %v4158 = vadd.f32 0.0, %v4157
          %v4159 = vpop.f32.mrb[0].mxu0
          %v4160 = vadd.f32 0.0, %v4159
          %4161 = vmatprep.mubr.bf16.mxu0 0
          %4162 = vmatmul.mubr.bf16.gmra.mrb[0].mxu0 %v3920
          %v4163 = vpop.f32.mrb[0].mxu0
          %v4164 = vadd.f32 0.0, %v4163
          %v4165 = vpop.f32.mrb[0].mxu0
          %v4166 = vadd.f32 0.0, %v4165
          %v4167 = vpop.f32.mrb[0].mxu0
          %v4168 = vadd.f32 0.0, %v4167
          %v4169 = vpop.f32.mrb[0].mxu0
          %v4170 = vadd.f32 0.0, %v4169
          %4171 = vmatprep.mubr.bf16.mxu0 0
          %4172 = vmatmul.mubr.bf16.gmra.mrb[0].mxu0 %v3921
          %v4173 = vpop.f32.mrb[0].mxu0
          %v4174 = vadd.f32 0.0, %v4173
          %v4175 = vpop.f32.mrb[0].mxu0
          %v4176 = vadd.f32 0.0, %v4175
          %v4177 = vpop.f32.mrb[0].mxu0
          %v4178 = vadd.f32 0.0, %v4177
          %v4179 = vpop.f32.mrb[0].mxu0
          %v4180 = vadd.f32 0.0, %v4179
          %4181 = vmatprep.mubr.bf16.mxu0 0
          %4182 = vmatmul.mubr.bf16.gmra.mrb[0].mxu0 %v3922
          %v4183 = vpop.f32.mrb[0].mxu0
          %v4184 = vadd.f32 0.0, %v4183
          %v4185 = vpop.f32.mrb[0].mxu0
          %v4186 = vadd.f32 0.0, %v4185
          %v4187 = vpop.f32.mrb[0].mxu0
          %v4188 = vadd.f32 0.0, %v4187
          %v4189 = vpop.f32.mrb[0].mxu0
          %v4190 = vadd.f32 0.0, %v4189
          %4191 = vmatprep.mubr.bf16.mxu0 0
          %4192 = vmatmul.mubr.bf16.gmra.mrb[0].mxu0 %v3923
          %v4193 = vpop.f32.mrb[0].mxu0
          %v4194 = vadd.f32 0.0, %v4193
          %v4195 = vpop.f32.mrb[0].mxu0
          %v4196 = vadd.f32 0.0, %v4195
          %v4197 = vpop.f32.mrb[0].mxu0
          %v4198 = vadd.f32 0.0, %v4197
          %v4199 = vpop.f32.mrb[0].mxu0
          %v4200 = vadd.f32 0.0, %v4199
          %4201 = vmatprep.mubr.bf16.mxu0 0
          %4202 = vmatmul.mubr.bf16.gmra.mrb[0].mxu0 %v3924
          %v4203 = vpop.f32.mrb[0].mxu0
          %v4204 = vadd.f32 0.0, %v4203
          %v4205 = vpop.f32.mrb[0].mxu0
          %v4206 = vadd.f32 0.0, %v4205
          %v4207 = vpop.f32.mrb[0].mxu0
          %v4208 = vadd.f32 0.0, %v4207
          %v4209 = vpop.f32.mrb[0].mxu0
          %v4210 = vadd.f32 0.0, %v4209
          %4211 = vmatprep.mubr.bf16.mxu0 0
          %4212 = vmatmul.mubr.bf16.gmra.mrb[0].mxu0 %v3925
          %v4213 = vpop.f32.mrb[0].mxu0
          %v4214 = vadd.f32 0.0, %v4213
          %v4215 = vpop.f32.mrb[0].mxu0
          %v4216 = vadd.f32 0.0, %v4215
          %v4217 = vpop.f32.mrb[0].mxu0
          %v4218 = vadd.f32 0.0, %v4217
          %v4219 = vpop.f32.mrb[0].mxu0
          %v4220 = vadd.f32 0.0, %v4219
          %4221 = vmatprep.mubr.bf16.mxu0 0
          %4222 = vmatmul.mubr.bf16.gmra.mrb[0].mxu0 %v3926
          %v4223 = vpop.f32.mrb[0].mxu0
          %v4224 = vadd.f32 0.0, %v4223
          %v4225 = vpop.f32.mrb[0].mxu0
          %v4226 = vadd.f32 0.0, %v4225
          %v4227 = vpop.f32.mrb[0].mxu0
          %v4228 = vadd.f32 0.0, %v4227
          %v4229 = vpop.f32.mrb[0].mxu0
          %v4230 = vadd.f32 0.0, %v4229
          %4231 = vmatprep.mubr.bf16.mxu0 0
          %4232 = vmatmul.mubr.bf16.gmra.mrb[0].mxu0 %v3927
          %v4233 = vpop.f32.mrb[0].mxu0
          %v4234 = vadd.f32 0.0, %v4233
          %v4235 = vpop.f32.mrb[0].mxu0
          %v4236 = vadd.f32 0.0, %v4235
          %v4237 = vpop.f32.mrb[0].mxu0
          %v4238 = vadd.f32 0.0, %v4237
          %v4239 = vpop.f32.mrb[0].mxu0
          %v4240 = vadd.f32 0.0, %v4239
          %4241 = vmatprep.mubr.bf16.mxu0 0
          %4242 = vmatmul.mubr.bf16.gmra.mrb[0].mxu0 %v3928
          %v4243 = vpop.f32.mrb[0].mxu0
          %v4244 = vadd.f32 0.0, %v4243
          %v4245 = vpop.f32.mrb[0].mxu0
          %v4246 = vadd.f32 0.0, %v4245
          %v4247 = vpop.f32.mrb[0].mxu0
          %v4248 = vadd.f32 0.0, %v4247
          %v4249 = vpop.f32.mrb[0].mxu0
          %v4250 = vadd.f32 0.0, %v4249
          %4251 = vmatprep.mubr.bf16.mxu0 0
          %4252 = vmatmul.mubr.bf16.gmra.mrb[0].mxu0 %v3929
          %v4253 = vpop.f32.mrb[0].mxu0
          %v4254 = vadd.f32 0.0, %v4253
          %v4255 = vpop.f32.mrb[0].mxu0
          %v4256 = vadd.f32 0.0, %v4255
          %v4257 = vpop.f32.mrb[0].mxu0
          %v4258 = vadd.f32 0.0, %v4257
          %v4259 = vpop.f32.mrb[0].mxu0
          %v4260 = vadd.f32 0.0, %v4259
          %4261 = vmatprep.mubr.bf16.mxu0 0
          %4262 = vmatmul.mubr.bf16.gmra.mrb[0].mxu0 %v3930
          %v4263 = vpop.f32.mrb[0].mxu0
          %v4264 = vadd.f32 0.0, %v4263
          %v4265 = vpop.f32.mrb[0].mxu0
          %v4266 = vadd.f32 0.0, %v4265
          %v4267 = vpop.f32.mrb[0].mxu0
          %v4268 = vadd.f32 0.0, %v4267
          %v4269 = vpop.f32.mrb[0].mxu0
          %v4270 = vadd.f32 0.0, %v4269
          %4271 = vmatprep.mubr.bf16.mxu0 0
          %4272 = vmatmul.mubr.bf16.gmra.mrb[0].mxu0 %v3931
          %v4273 = vpop.f32.mrb[0].mxu0
          %v4274 = vadd.f32 0.0, %v4273
          %v4275 = vpop.f32.mrb[0].mxu0
          %v4276 = vadd.f32 0.0, %v4275
          %v4277 = vpop.f32.mrb[0].mxu0
          %v4278 = vadd.f32 0.0, %v4277
          %v4279 = vpop.f32.mrb[0].mxu0
          %v4280 = vadd.f32 0.0, %v4279
          %4281 = vmatprep.mubr.bf16.mxu0 0
          %4282 = vmatmul.mubr.bf16.gmra.mrb[0].mxu0 %v3932
          %v4283 = vpop.f32.mrb[0].mxu0
          %v4284 = vadd.f32 0.0, %v4283
          %v4285 = vpop.f32.mrb[0].mxu0
          %v4286 = vadd.f32 0.0, %v4285
          %v4287 = vpop.f32.mrb[0].mxu0
          %v4288 = vadd.f32 0.0, %v4287
          %v4289 = vpop.f32.mrb[0].mxu0
          %v4290 = vadd.f32 0.0, %v4289
          %4291 = vmatprep.mubr.bf16.mxu0 0
          %4292 = vmatmul.mubr.bf16.gmra.mrb[0].mxu0 %v3933
          %v4293 = vpop.f32.mrb[0].mxu0
          %v4294 = vadd.f32 0.0, %v4293
          %v4295 = vpop.f32.mrb[0].mxu0
          %v4296 = vadd.f32 0.0, %v4295
          %v4297 = vpop.f32.mrb[0].mxu0
          %v4298 = vadd.f32 0.0, %v4297
          %v4299 = vpop.f32.mrb[0].mxu0
          %v4300 = vadd.f32 0.0, %v4299
          %4301 = vmatprep.mubr.bf16.mxu0 0
          %4302 = vmatmul.mubr.bf16.gmra.mrb[0].mxu0 %v3934
          %v4303 = vpop.f32.mrb[0].mxu0
          %v4304 = vadd.f32 0.0, %v4303
          %v4305 = vpop.f32.mrb[0].mxu0
          %v4306 = vadd.f32 0.0, %v4305
          %v4307 = vpop.f32.mrb[0].mxu0
          %v4308 = vadd.f32 0.0, %v4307
          %v4309 = vpop.f32.mrb[0].mxu0
          %v4310 = vadd.f32 0.0, %v4309
          %4311 = vmatprep.mubr.bf16.mxu0 0
          %4312 = vmatmul.mubr.bf16.gmra.mrb[0].mxu0 %v3935
          %v4313 = vpop.f32.mrb[0].mxu0
          %v4314 = vadd.f32 0.0, %v4313
          %v4315 = vpop.f32.mrb[0].mxu0
          %v4316 = vadd.f32 0.0, %v4315
          %v4317 = vpop.f32.mrb[0].mxu0
          %v4318 = vadd.f32 0.0, %v4317
          %v4319 = vpop.f32.mrb[0].mxu0
          %v4320 = vadd.f32 0.0, %v4319
          %4321 = vmatprep.mubr.bf16.mxu0 0
          %4322 = vmatmul.mubr.bf16.gmra.mrb[0].mxu0 %v3936
          %v4323 = vpop.f32.mrb[0].mxu0
          %v4324 = vadd.f32 0.0, %v4323
          %v4325 = vpop.f32.mrb[0].mxu0
          %v4326 = vadd.f32 0.0, %v4325
          %v4327 = vpop.f32.mrb[0].mxu0
          %v4328 = vadd.f32 0.0, %v4327
          %v4329 = vpop.f32.mrb[0].mxu0
          %v4330 = vadd.f32 0.0, %v4329
          %4331 = vmatprep.mubr.bf16.mxu0 0
          %4332 = vmatmul.mubr.bf16.gmra.mrb[0].mxu0 %v3937
          %v4333 = vpop.f32.mrb[0].mxu0
          %v4334 = vadd.f32 0.0, %v4333
          %v4335 = vpop.f32.mrb[0].mxu0
          %v4336 = vadd.f32 0.0, %v4335
          %v4337 = vpop.f32.mrb[0].mxu0
          %v4338 = vadd.f32 0.0, %v4337
          %v4339 = vpop.f32.mrb[0].mxu0
          %v4340 = vadd.f32 0.0, %v4339
          %4341 = vmatprep.mubr.bf16.mxu0 0
          %4342 = vmatmul.mubr.bf16.gmra.mrb[0].mxu0 %v3938
          %v4343 = vpop.f32.mrb[0].mxu0
          %v4344 = vadd.f32 0.0, %v4343
          %v4345 = vpop.f32.mrb[0].mxu0
          %v4346 = vadd.f32 0.0, %v4345
          %v4347 = vpop.f32.mrb[0].mxu0
          %v4348 = vadd.f32 0.0, %v4347
          %v4349 = vpop.f32.mrb[0].mxu0
          %v4350 = vadd.f32 0.0, %v4349
          %4351 = vmatprep.mubr.bf16.mxu0 0
          %4352 = vmatmul.mubr.bf16.gmra.mrb[0].mxu0 %v3939
          %v4353 = vpop.f32.mrb[0].mxu0
          %v4354 = vadd.f32 0.0, %v4353
          %v4355 = vpop.f32.mrb[0].mxu0
          %v4356 = vadd.f32 0.0, %v4355
          %v4357 = vpop.f32.mrb[0].mxu0
          %v4358 = vadd.f32 0.0, %v4357
          %v4359 = vpop.f32.mrb[0].mxu0
          %v4360 = vadd.f32 0.0, %v4359
          %4361 = vmatprep.mubr.bf16.mxu0 0
          %4362 = vmatmul.mubr.bf16.gmra.mrb[0].mxu0 %v3940
          %v4363 = vpop.f32.mrb[0].mxu0
          %v4364 = vadd.f32 0.0, %v4363
          %v4365 = vpop.f32.mrb[0].mxu0
          %v4366 = vadd.f32 0.0, %v4365
          %v4367 = vpop.f32.mrb[0].mxu0
          %v4368 = vadd.f32 0.0, %v4367
          %v4369 = vpop.f32.mrb[0].mxu0
          %v4370 = vadd.f32 0.0, %v4369
          %4371 = vmatprep.mubr.bf16.mxu0 0
          %4372 = vmatmul.mubr.bf16.gmra.mrb[0].mxu0 %v3941
          %v4373 = vpop.f32.mrb[0].mxu0
          %v4374 = vadd.f32 0.0, %v4373
          %v4375 = vpop.f32.mrb[0].mxu0
          %v4376 = vadd.f32 0.0, %v4375
          %v4377 = vpop.f32.mrb[0].mxu0
          %v4378 = vadd.f32 0.0, %v4377
          %v4379 = vpop.f32.mrb[0].mxu0
          %v4380 = vadd.f32 0.0, %v4379
          %4381 = vmatprep.mubr.bf16.mxu0 0
          %4382 = vmatmul.mubr.bf16.gmra.mrb[0].mxu0 %v3942
          %v4383 = vpop.f32.mrb[0].mxu0
          %v4384 = vadd.f32 0.0, %v4383
          %v4385 = vpop.f32.mrb[0].mxu0
          %v4386 = vadd.f32 0.0, %v4385
          %v4387 = vpop.f32.mrb[0].mxu0
          %v4388 = vadd.f32 0.0, %v4387
          %v4389 = vpop.f32.mrb[0].mxu0
          %v4390 = vadd.f32 0.0, %v4389
          %4391 = vdwg.mxu0
          %v4392 = vpack.c.bf16 %v4078, %v4074
          %v4393 = vpack.c.bf16 %v4088, %v4084
          %v4394 = vpack.c.bf16 %v4098, %v4094
          %v4395 = vpack.c.bf16 %v4108, %v4104
          %v4396 = vpack.c.bf16 %v4118, %v4114
          %v4397 = vpack.c.bf16 %v4128, %v4124
          %v4398 = vpack.c.bf16 %v4138, %v4134
          %v4399 = vpack.c.bf16 %v4148, %v4144
          %v4400 = vpack.c.bf16 %v4158, %v4154
          %v4401 = vpack.c.bf16 %v4168, %v4164
          %v4402 = vpack.c.bf16 %v4178, %v4174
          %v4403 = vpack.c.bf16 %v4188, %v4184
          %v4404 = vpack.c.bf16 %v4198, %v4194
          %v4405 = vpack.c.bf16 %v4208, %v4204
          %v4406 = vpack.c.bf16 %v4218, %v4214
          %v4407 = vpack.c.bf16 %v4228, %v4224
          %v4408 = vpack.c.bf16 %v4238, %v4234
          %v4409 = vpack.c.bf16 %v4248, %v4244
          %v4410 = vpack.c.bf16 %v4258, %v4254
          %v4411 = vpack.c.bf16 %v4268, %v4264
          %v4412 = vpack.c.bf16 %v4278, %v4274
          %v4413 = vpack.c.bf16 %v4288, %v4284
          %v4414 = vpack.c.bf16 %v4298, %v4294
          %v4415 = vpack.c.bf16 %v4308, %v4304
          %v4416 = vpack.c.bf16 %v4318, %v4314
          %v4417 = vpack.c.bf16 %v4328, %v4324
          %v4418 = vpack.c.bf16 %v4338, %v4334
          %v4419 = vpack.c.bf16 %v4348, %v4344
          %v4420 = vpack.c.bf16 %v4358, %v4354
          %v4421 = vpack.c.bf16 %v4368, %v4364
          %v4422 = vpack.c.bf16 %v4378, %v4374
          %v4423 = vpack.c.bf16 %v4388, %v4384
          %v4456 = vunpack.c.l.b16 %v4392
          %v4457 = vunpack.c.h.b16 %v4392
          %v4458 = vunpack.c.l.b16 %v4393
          %v4459 = vunpack.c.h.b16 %v4393
          %v4460 = vunpack.c.l.b16 %v4394
          %v4461 = vunpack.c.h.b16 %v4394
          %v4462 = vunpack.c.l.b16 %v4395
          %v4463 = vunpack.c.h.b16 %v4395
          %v4464 = vunpack.c.l.b16 %v4396
          %v4465 = vunpack.c.h.b16 %v4396
          %v4466 = vunpack.c.l.b16 %v4397
          %v4467 = vunpack.c.h.b16 %v4397
          %v4468 = vunpack.c.l.b16 %v4398
          %v4469 = vunpack.c.h.b16 %v4398
          %v4470 = vunpack.c.l.b16 %v4399
          %v4471 = vunpack.c.h.b16 %v4399
          %v4472 = vunpack.c.l.b16 %v4400
          %v4473 = vunpack.c.h.b16 %v4400
          %v4474 = vunpack.c.l.b16 %v4401
          %v4475 = vunpack.c.h.b16 %v4401
          %v4476 = vunpack.c.l.b16 %v4402
          %v4477 = vunpack.c.h.b16 %v4402
          %v4478 = vunpack.c.l.b16 %v4403
          %v4479 = vunpack.c.h.b16 %v4403
          %v4480 = vunpack.c.l.b16 %v4404
          %v4481 = vunpack.c.h.b16 %v4404
          %v4482 = vunpack.c.l.b16 %v4405
          %v4483 = vunpack.c.h.b16 %v4405
          %v4484 = vunpack.c.l.b16 %v4406
          %v4485 = vunpack.c.h.b16 %v4406
          %v4486 = vunpack.c.l.b16 %v4407
          %v4487 = vunpack.c.h.b16 %v4407
          %v4488 = vunpack.c.l.b16 %v4408
          %v4489 = vunpack.c.h.b16 %v4408
          %v4490 = vunpack.c.l.b16 %v4409
          %v4491 = vunpack.c.h.b16 %v4409
          %v4492 = vunpack.c.l.b16 %v4410
          %v4493 = vunpack.c.h.b16 %v4410
          %v4494 = vunpack.c.l.b16 %v4411
          %v4495 = vunpack.c.h.b16 %v4411
          %v4496 = vunpack.c.l.b16 %v4412
          %v4497 = vunpack.c.h.b16 %v4412
          %v4498 = vunpack.c.l.b16 %v4413
          %v4499 = vunpack.c.h.b16 %v4413
          %v4500 = vunpack.c.l.b16 %v4414
          %v4501 = vunpack.c.h.b16 %v4414
          %v4502 = vunpack.c.l.b16 %v4415
          %v4503 = vunpack.c.h.b16 %v4415
          %v4504 = vunpack.c.l.b16 %v4416
          %v4505 = vunpack.c.h.b16 %v4416
          %v4506 = vunpack.c.l.b16 %v4417
          %v4507 = vunpack.c.h.b16 %v4417
          %v4508 = vunpack.c.l.b16 %v4418
          %v4509 = vunpack.c.h.b16 %v4418
          %v4510 = vunpack.c.l.b16 %v4419
          %v4511 = vunpack.c.h.b16 %v4419
          %v4512 = vunpack.c.l.b16 %v4420
          %v4513 = vunpack.c.h.b16 %v4420
          %v4514 = vunpack.c.l.b16 %v4421
          %v4515 = vunpack.c.h.b16 %v4421
          %v4516 = vunpack.c.l.b16 %v4422
          %v4517 = vunpack.c.h.b16 %v4422
          %v4518 = vunpack.c.l.b16 %v4423
          %v4519 = vunpack.c.h.b16 %v4423
          %v4520 = vpack.c.b16 %v4456, %v4456
          %v4521 = vpack.c.b16 %v4457, %v4457
          %v4522 = vpack.c.b16 %v4458, %v4458
          %v4523 = vpack.c.b16 %v4459, %v4459
          %v4524 = vpack.c.b16 %v4460, %v4460
          %v4525 = vpack.c.b16 %v4461, %v4461
          %v4526 = vpack.c.b16 %v4462, %v4462
          %v4527 = vpack.c.b16 %v4463, %v4463
          %v4528 = vpack.c.b16 %v4464, %v4464
          %v4529 = vpack.c.b16 %v4465, %v4465
          %v4530 = vpack.c.b16 %v4466, %v4466
          %v4531 = vpack.c.b16 %v4467, %v4467
          %v4532 = vpack.c.b16 %v4468, %v4468
          %v4533 = vpack.c.b16 %v4469, %v4469
          %v4534 = vpack.c.b16 %v4470, %v4470
          %v4535 = vpack.c.b16 %v4471, %v4471
          %v4536 = vpack.c.b16 %v4472, %v4472
          %v4537 = vpack.c.b16 %v4473, %v4473
          %v4538 = vpack.c.b16 %v4474, %v4474
          %v4539 = vpack.c.b16 %v4475, %v4475
          %v4540 = vpack.c.b16 %v4476, %v4476
          %v4541 = vpack.c.b16 %v4477, %v4477
          %v4542 = vpack.c.b16 %v4478, %v4478
          %v4543 = vpack.c.b16 %v4479, %v4479
          %v4544 = vpack.c.b16 %v4480, %v4480
          %v4545 = vpack.c.b16 %v4481, %v4481
          %v4546 = vpack.c.b16 %v4482, %v4482
          %v4547 = vpack.c.b16 %v4483, %v4483
          %v4548 = vpack.c.b16 %v4484, %v4484
          %v4549 = vpack.c.b16 %v4485, %v4485
          %v4550 = vpack.c.b16 %v4486, %v4486
          %v4551 = vpack.c.b16 %v4487, %v4487
          %v4552 = vpack.c.b16 %v4488, %v4488
          %v4553 = vpack.c.b16 %v4489, %v4489
          %v4554 = vpack.c.b16 %v4490, %v4490
          %v4555 = vpack.c.b16 %v4491, %v4491
          %v4556 = vpack.c.b16 %v4492, %v4492
          %v4557 = vpack.c.b16 %v4493, %v4493
          %v4558 = vpack.c.b16 %v4494, %v4494
          %v4559 = vpack.c.b16 %v4495, %v4495
          %v4560 = vpack.c.b16 %v4496, %v4496
          %v4561 = vpack.c.b16 %v4497, %v4497
          %v4562 = vpack.c.b16 %v4498, %v4498
          %v4563 = vpack.c.b16 %v4499, %v4499
          %v4564 = vpack.c.b16 %v4500, %v4500
          %v4565 = vpack.c.b16 %v4501, %v4501
          %v4566 = vpack.c.b16 %v4502, %v4502
          %v4567 = vpack.c.b16 %v4503, %v4503
          %v4568 = vpack.c.b16 %v4504, %v4504
          %v4569 = vpack.c.b16 %v4505, %v4505
          %v4570 = vpack.c.b16 %v4506, %v4506
          %v4571 = vpack.c.b16 %v4507, %v4507
          %v4572 = vpack.c.b16 %v4508, %v4508
          %v4573 = vpack.c.b16 %v4509, %v4509
          %v4574 = vpack.c.b16 %v4510, %v4510
          %v4575 = vpack.c.b16 %v4511, %v4511
          %v4576 = vpack.c.b16 %v4512, %v4512
          %v4577 = vpack.c.b16 %v4513, %v4513
          %v4578 = vpack.c.b16 %v4514, %v4514
          %v4579 = vpack.c.b16 %v4515, %v4515
          %v4580 = vpack.c.b16 %v4516, %v4516
          %v4581 = vpack.c.b16 %v4517, %v4517
          %v4582 = vpack.c.b16 %v4518, %v4518
          %v4583 = vpack.c.b16 %v4519, %v4519
          %4648 = vst [vmem:[%s517] sm:$0xf] %v4520
          %4649 = vst [vmem:[%s517 + $0x4] sm:$0xf] %v4521
          %4650 = vst [vmem:[%s517 + $0x8] sm:$0xf] %v4522
          %4651 = vst [vmem:[%s517 + $0xc] sm:$0xf] %v4523
          %4652 = vst [vmem:[%s517 + $0x10] sm:$0xf] %v4524
          %4653 = vst [vmem:[%s517 + $0x14] sm:$0xf] %v4525
          %4654 = vst [vmem:[%s517 + $0x18] sm:$0xf] %v4526
          %4655 = vst [vmem:[%s517 + $0x1c] sm:$0xf] %v4527
          %4656 = vst [vmem:[%s517 + $0x20] sm:$0xf] %v4528
          %4657 = vst [vmem:[%s517 + $0x24] sm:$0xf] %v4529
          %4658 = vst [vmem:[%s517 + $0x28] sm:$0xf] %v4530
          %4659 = vst [vmem:[%s517 + $0x2c] sm:$0xf] %v4531
          %4660 = vst [vmem:[%s517 + $0x30] sm:$0xf] %v4532
          %4661 = vst [vmem:[%s517 + $0x34] sm:$0xf] %v4533
          %4662 = vst [vmem:[%s517 + $0x38] sm:$0xf] %v4534
          %4663 = vst [vmem:[%s517 + $0x3c] sm:$0xf] %v4535
          %4664 = vst [vmem:[%s517 + $0x40] sm:$0xf] %v4536
          %4665 = vst [vmem:[%s517 + $0x44] sm:$0xf] %v4537
          %4666 = vst [vmem:[%s517 + $0x48] sm:$0xf] %v4538
          %4667 = vst [vmem:[%s517 + $0x4c] sm:$0xf] %v4539
          %4668 = vst [vmem:[%s517 + $0x50] sm:$0xf] %v4540
          %4669 = vst [vmem:[%s517 + $0x54] sm:$0xf] %v4541
          %4670 = vst [vmem:[%s517 + $0x58] sm:$0xf] %v4542
          %4671 = vst [vmem:[%s517 + $0x5c] sm:$0xf] %v4543
          %4672 = vst [vmem:[%s517 + $0x60] sm:$0xf] %v4544
          %4673 = vst [vmem:[%s517 + $0x64] sm:$0xf] %v4545
          %4674 = vst [vmem:[%s517 + $0x68] sm:$0xf] %v4546
          %4675 = vst [vmem:[%s517 + $0x6c] sm:$0xf] %v4547
          %4676 = vst [vmem:[%s517 + $0x70] sm:$0xf] %v4548
          %4677 = vst [vmem:[%s517 + $0x74] sm:$0xf] %v4549
          %4678 = vst [vmem:[%s517 + $0x78] sm:$0xf] %v4550
          %4679 = vst [vmem:[%s517 + $0x7c] sm:$0xf] %v4551
          %4680 = vst [vmem:[%s517 + $0x80] sm:$0xf] %v4552
          %4681 = vst [vmem:[%s517 + $0x84] sm:$0xf] %v4553
          %4682 = vst [vmem:[%s517 + $0x88] sm:$0xf] %v4554
          %4683 = vst [vmem:[%s517 + $0x8c] sm:$0xf] %v4555
          %4684 = vst [vmem:[%s517 + $0x90] sm:$0xf] %v4556
          %4685 = vst [vmem:[%s517 + $0x94] sm:$0xf] %v4557
          %4686 = vst [vmem:[%s517 + $0x98] sm:$0xf] %v4558
          %4687 = vst [vmem:[%s517 + $0x9c] sm:$0xf] %v4559
          %4688 = vst [vmem:[%s517 + $0xa0] sm:$0xf] %v4560
          %4689 = vst [vmem:[%s517 + $0xa4] sm:$0xf] %v4561
          %4690 = vst [vmem:[%s517 + $0xa8] sm:$0xf] %v4562
          %4691 = vst [vmem:[%s517 + $0xac] sm:$0xf] %v4563
          %4692 = vst [vmem:[%s517 + $0xb0] sm:$0xf] %v4564
          %4693 = vst [vmem:[%s517 + $0xb4] sm:$0xf] %v4565
          %4694 = vst [vmem:[%s517 + $0xb8] sm:$0xf] %v4566
          %4695 = vst [vmem:[%s517 + $0xbc] sm:$0xf] %v4567
          %4696 = vst [vmem:[%s517 + $0xc0] sm:$0xf] %v4568
          %4697 = vst [vmem:[%s517 + $0xc4] sm:$0xf] %v4569
          %4698 = vst [vmem:[%s517 + $0xc8] sm:$0xf] %v4570
          %4699 = vst [vmem:[%s517 + $0xcc] sm:$0xf] %v4571
          %4700 = vst [vmem:[%s517 + $0xd0] sm:$0xf] %v4572
          %4701 = vst [vmem:[%s517 + $0xd4] sm:$0xf] %v4573
          %4702 = vst [vmem:[%s517 + $0xd8] sm:$0xf] %v4574
          %4703 = vst [vmem:[%s517 + $0xdc] sm:$0xf] %v4575
          %4704 = vst [vmem:[%s517 + $0xe0] sm:$0xf] %v4576
          %4705 = vst [vmem:[%s517 + $0xe4] sm:$0xf] %v4577
          %4706 = vst [vmem:[%s517 + $0xe8] sm:$0xf] %v4578
          %4707 = vst [vmem:[%s517 + $0xec] sm:$0xf] %v4579
          %4708 = vst [vmem:[%s517 + $0xf0] sm:$0xf] %v4580
          %4709 = vst [vmem:[%s517 + $0xf4] sm:$0xf] %v4581
          %4710 = vst [vmem:[%s517 + $0xf8] sm:$0xf] %v4582
          %4711 = vst [vmem:[%s517 + $0xfc] sm:$0xf] %v4583
          %v4712 = vld [vmem:[#allocation15] sm:$0x1]
          %v4714 = vlaneseq
          %v4715 = vshrl.u32 %v4714, 7
          %v4716 = vsub.s32 0, %v4715
          %v4717 = vrot.slane %v4712, %v4716
          %v4719 = vadd.f32 %v4076, %v4717
          %v4720 = vadd.f32 %v4080, %v4717
          %v4721 = vadd.f32 %v4086, %v4717
          %v4722 = vadd.f32 %v4090, %v4717
          %v4723 = vadd.f32 %v4096, %v4717
          %v4724 = vadd.f32 %v4100, %v4717
          %v4725 = vadd.f32 %v4106, %v4717
          %v4726 = vadd.f32 %v4110, %v4717
          %v4727 = vadd.f32 %v4116, %v4717
          %v4728 = vadd.f32 %v4120, %v4717
          %v4729 = vadd.f32 %v4126, %v4717
          %v4730 = vadd.f32 %v4130, %v4717
          %v4731 = vadd.f32 %v4136, %v4717
          %v4732 = vadd.f32 %v4140, %v4717
          %v4733 = vadd.f32 %v4146, %v4717
          %v4734 = vadd.f32 %v4150, %v4717
          %v4735 = vadd.f32 %v4156, %v4717
          %v4736 = vadd.f32 %v4160, %v4717
          %v4737 = vadd.f32 %v4166, %v4717
          %v4738 = vadd.f32 %v4170, %v4717
          %v4739 = vadd.f32 %v4176, %v4717
          %v4740 = vadd.f32 %v4180, %v4717
          %v4741 = vadd.f32 %v4186, %v4717
          %v4742 = vadd.f32 %v4190, %v4717
          %v4743 = vadd.f32 %v4196, %v4717
          %v4744 = vadd.f32 %v4200, %v4717
          %v4745 = vadd.f32 %v4206, %v4717
          %v4746 = vadd.f32 %v4210, %v4717
          %v4747 = vadd.f32 %v4216, %v4717
          %v4748 = vadd.f32 %v4220, %v4717
          %v4749 = vadd.f32 %v4226, %v4717
          %v4750 = vadd.f32 %v4230, %v4717
          %v4751 = vadd.f32 %v4236, %v4717
          %v4752 = vadd.f32 %v4240, %v4717
          %v4753 = vadd.f32 %v4246, %v4717
          %v4754 = vadd.f32 %v4250, %v4717
          %v4755 = vadd.f32 %v4256, %v4717
          %v4756 = vadd.f32 %v4260, %v4717
          %v4757 = vadd.f32 %v4266, %v4717
          %v4758 = vadd.f32 %v4270, %v4717
          %v4759 = vadd.f32 %v4276, %v4717
          %v4760 = vadd.f32 %v4280, %v4717
          %v4761 = vadd.f32 %v4286, %v4717
          %v4762 = vadd.f32 %v4290, %v4717
          %v4763 = vadd.f32 %v4296, %v4717
          %v4764 = vadd.f32 %v4300, %v4717
          %v4765 = vadd.f32 %v4306, %v4717
          %v4766 = vadd.f32 %v4310, %v4717
          %v4767 = vadd.f32 %v4316, %v4717
          %v4768 = vadd.f32 %v4320, %v4717
          %v4769 = vadd.f32 %v4326, %v4717
          %v4770 = vadd.f32 %v4330, %v4717
          %v4771 = vadd.f32 %v4336, %v4717
          %v4772 = vadd.f32 %v4340, %v4717
          %v4773 = vadd.f32 %v4346, %v4717
          %v4774 = vadd.f32 %v4350, %v4717
          %v4775 = vadd.f32 %v4356, %v4717
          %v4776 = vadd.f32 %v4360, %v4717
          %v4777 = vadd.f32 %v4366, %v4717
          %v4778 = vadd.f32 %v4370, %v4717
          %v4779 = vadd.f32 %v4376, %v4717
          %v4780 = vadd.f32 %v4380, %v4717
          %v4781 = vadd.f32 %v4386, %v4717
          %v4782 = vadd.f32 %v4390, %v4717
          %v4783 = vpack.c.bf16 %v4720, %v4719
          %v4784 = vpack.c.bf16 %v4722, %v4721
          %v4785 = vpack.c.bf16 %v4724, %v4723
          %v4786 = vpack.c.bf16 %v4726, %v4725
          %v4787 = vpack.c.bf16 %v4728, %v4727
          %v4788 = vpack.c.bf16 %v4730, %v4729
          %v4789 = vpack.c.bf16 %v4732, %v4731
          %v4790 = vpack.c.bf16 %v4734, %v4733
          %v4791 = vpack.c.bf16 %v4736, %v4735
          %v4792 = vpack.c.bf16 %v4738, %v4737
          %v4793 = vpack.c.bf16 %v4740, %v4739
          %v4794 = vpack.c.bf16 %v4742, %v4741
          %v4795 = vpack.c.bf16 %v4744, %v4743
          %v4796 = vpack.c.bf16 %v4746, %v4745
          %v4797 = vpack.c.bf16 %v4748, %v4747
          %v4798 = vpack.c.bf16 %v4750, %v4749
          %v4799 = vpack.c.bf16 %v4752, %v4751
          %v4800 = vpack.c.bf16 %v4754, %v4753
          %v4801 = vpack.c.bf16 %v4756, %v4755
          %v4802 = vpack.c.bf16 %v4758, %v4757
          %v4803 = vpack.c.bf16 %v4760, %v4759
          %v4804 = vpack.c.bf16 %v4762, %v4761
          %v4805 = vpack.c.bf16 %v4764, %v4763
          %v4806 = vpack.c.bf16 %v4766, %v4765
          %v4807 = vpack.c.bf16 %v4768, %v4767
          %v4808 = vpack.c.bf16 %v4770, %v4769
          %v4809 = vpack.c.bf16 %v4772, %v4771
          %v4810 = vpack.c.bf16 %v4774, %v4773
          %v4811 = vpack.c.bf16 %v4776, %v4775
          %v4812 = vpack.c.bf16 %v4778, %v4777
          %v4813 = vpack.c.bf16 %v4780, %v4779
          %v4814 = vpack.c.bf16 %v4782, %v4781
          %v4847 = vunpack.c.l.b16 %v4783
          %v4848 = vunpack.c.h.b16 %v4783
          %v4849 = vunpack.c.l.b16 %v4784
          %v4850 = vunpack.c.h.b16 %v4784
          %v4851 = vunpack.c.l.b16 %v4785
          %v4852 = vunpack.c.h.b16 %v4785
          %v4853 = vunpack.c.l.b16 %v4786
          %v4854 = vunpack.c.h.b16 %v4786
          %v4855 = vunpack.c.l.b16 %v4787
          %v4856 = vunpack.c.h.b16 %v4787
          %v4857 = vunpack.c.l.b16 %v4788
          %v4858 = vunpack.c.h.b16 %v4788
          %v4859 = vunpack.c.l.b16 %v4789
          %v4860 = vunpack.c.h.b16 %v4789
          %v4861 = vunpack.c.l.b16 %v4790
          %v4862 = vunpack.c.h.b16 %v4790
          %v4863 = vunpack.c.l.b16 %v4791
          %v4864 = vunpack.c.h.b16 %v4791
          %v4865 = vunpack.c.l.b16 %v4792
          %v4866 = vunpack.c.h.b16 %v4792
          %v4867 = vunpack.c.l.b16 %v4793
          %v4868 = vunpack.c.h.b16 %v4793
          %v4869 = vunpack.c.l.b16 %v4794
          %v4870 = vunpack.c.h.b16 %v4794
          %v4871 = vunpack.c.l.b16 %v4795
          %v4872 = vunpack.c.h.b16 %v4795
          %v4873 = vunpack.c.l.b16 %v4796
          %v4874 = vunpack.c.h.b16 %v4796
          %v4875 = vunpack.c.l.b16 %v4797
          %v4876 = vunpack.c.h.b16 %v4797
          %v4877 = vunpack.c.l.b16 %v4798
          %v4878 = vunpack.c.h.b16 %v4798
          %v4879 = vunpack.c.l.b16 %v4799
          %v4880 = vunpack.c.h.b16 %v4799
          %v4881 = vunpack.c.l.b16 %v4800
          %v4882 = vunpack.c.h.b16 %v4800
          %v4883 = vunpack.c.l.b16 %v4801
          %v4884 = vunpack.c.h.b16 %v4801
          %v4885 = vunpack.c.l.b16 %v4802
          %v4886 = vunpack.c.h.b16 %v4802
          %v4887 = vunpack.c.l.b16 %v4803
          %v4888 = vunpack.c.h.b16 %v4803
          %v4889 = vunpack.c.l.b16 %v4804
          %v4890 = vunpack.c.h.b16 %v4804
          %v4891 = vunpack.c.l.b16 %v4805
          %v4892 = vunpack.c.h.b16 %v4805
          %v4893 = vunpack.c.l.b16 %v4806
          %v4894 = vunpack.c.h.b16 %v4806
          %v4895 = vunpack.c.l.b16 %v4807
          %v4896 = vunpack.c.h.b16 %v4807
          %v4897 = vunpack.c.l.b16 %v4808
          %v4898 = vunpack.c.h.b16 %v4808
          %v4899 = vunpack.c.l.b16 %v4809
          %v4900 = vunpack.c.h.b16 %v4809
          %v4901 = vunpack.c.l.b16 %v4810
          %v4902 = vunpack.c.h.b16 %v4810
          %v4903 = vunpack.c.l.b16 %v4811
          %v4904 = vunpack.c.h.b16 %v4811
          %v4905 = vunpack.c.l.b16 %v4812
          %v4906 = vunpack.c.h.b16 %v4812
          %v4907 = vunpack.c.l.b16 %v4813
          %v4908 = vunpack.c.h.b16 %v4813
          %v4909 = vunpack.c.l.b16 %v4814
          %v4910 = vunpack.c.h.b16 %v4814
          %v4911 = vpack.c.b16 %v4847, %v4847
          %v4912 = vpack.c.b16 %v4848, %v4848
          %v4913 = vpack.c.b16 %v4849, %v4849
          %v4914 = vpack.c.b16 %v4850, %v4850
          %v4915 = vpack.c.b16 %v4851, %v4851
          %v4916 = vpack.c.b16 %v4852, %v4852
          %v4917 = vpack.c.b16 %v4853, %v4853
          %v4918 = vpack.c.b16 %v4854, %v4854
          %v4919 = vpack.c.b16 %v4855, %v4855
          %v4920 = vpack.c.b16 %v4856, %v4856
          %v4921 = vpack.c.b16 %v4857, %v4857
          %v4922 = vpack.c.b16 %v4858, %v4858
          %v4923 = vpack.c.b16 %v4859, %v4859
          %v4924 = vpack.c.b16 %v4860, %v4860
          %v4925 = vpack.c.b16 %v4861, %v4861
          %v4926 = vpack.c.b16 %v4862, %v4862
          %v4927 = vpack.c.b16 %v4863, %v4863
          %v4928 = vpack.c.b16 %v4864, %v4864
          %v4929 = vpack.c.b16 %v4865, %v4865
          %v4930 = vpack.c.b16 %v4866, %v4866
          %v4931 = vpack.c.b16 %v4867, %v4867
          %v4932 = vpack.c.b16 %v4868, %v4868
          %v4933 = vpack.c.b16 %v4869, %v4869
          %v4934 = vpack.c.b16 %v4870, %v4870
          %v4935 = vpack.c.b16 %v4871, %v4871
          %v4936 = vpack.c.b16 %v4872, %v4872
          %v4937 = vpack.c.b16 %v4873, %v4873
          %v4938 = vpack.c.b16 %v4874, %v4874
          %v4939 = vpack.c.b16 %v4875, %v4875
          %v4940 = vpack.c.b16 %v4876, %v4876
          %v4941 = vpack.c.b16 %v4877, %v4877
          %v4942 = vpack.c.b16 %v4878, %v4878
          %v4943 = vpack.c.b16 %v4879, %v4879
          %v4944 = vpack.c.b16 %v4880, %v4880
          %v4945 = vpack.c.b16 %v4881, %v4881
          %v4946 = vpack.c.b16 %v4882, %v4882
          %v4947 = vpack.c.b16 %v4883, %v4883
          %v4948 = vpack.c.b16 %v4884, %v4884
          %v4949 = vpack.c.b16 %v4885, %v4885
          %v4950 = vpack.c.b16 %v4886, %v4886
          %v4951 = vpack.c.b16 %v4887, %v4887
          %v4952 = vpack.c.b16 %v4888, %v4888
          %v4953 = vpack.c.b16 %v4889, %v4889
          %v4954 = vpack.c.b16 %v4890, %v4890
          %v4955 = vpack.c.b16 %v4891, %v4891
          %v4956 = vpack.c.b16 %v4892, %v4892
          %v4957 = vpack.c.b16 %v4893, %v4893
          %v4958 = vpack.c.b16 %v4894, %v4894
          %v4959 = vpack.c.b16 %v4895, %v4895
          %v4960 = vpack.c.b16 %v4896, %v4896
          %v4961 = vpack.c.b16 %v4897, %v4897
          %v4962 = vpack.c.b16 %v4898, %v4898
          %v4963 = vpack.c.b16 %v4899, %v4899
          %v4964 = vpack.c.b16 %v4900, %v4900
          %v4965 = vpack.c.b16 %v4901, %v4901
          %v4966 = vpack.c.b16 %v4902, %v4902
          %v4967 = vpack.c.b16 %v4903, %v4903
          %v4968 = vpack.c.b16 %v4904, %v4904
          %v4969 = vpack.c.b16 %v4905, %v4905
          %v4970 = vpack.c.b16 %v4906, %v4906
          %v4971 = vpack.c.b16 %v4907, %v4907
          %v4972 = vpack.c.b16 %v4908, %v4908
          %v4973 = vpack.c.b16 %v4909, %v4909
          %v4974 = vpack.c.b16 %v4910, %v4910
          %5039 = vst [vmem:[%s524] sm:$0xf] %v4911
          %5040 = vst [vmem:[%s524 + $0x4] sm:$0xf] %v4912
          %5041 = vst [vmem:[%s524 + $0x8] sm:$0xf] %v4913
          %5042 = vst [vmem:[%s524 + $0xc] sm:$0xf] %v4914
          %5043 = vst [vmem:[%s524 + $0x10] sm:$0xf] %v4915
          %5044 = vst [vmem:[%s524 + $0x14] sm:$0xf] %v4916
          %5045 = vst [vmem:[%s524 + $0x18] sm:$0xf] %v4917
          %5046 = vst [vmem:[%s524 + $0x1c] sm:$0xf] %v4918
          %5047 = vst [vmem:[%s524 + $0x20] sm:$0xf] %v4919
          %5048 = vst [vmem:[%s524 + $0x24] sm:$0xf] %v4920
          %5049 = vst [vmem:[%s524 + $0x28] sm:$0xf] %v4921
          %5050 = vst [vmem:[%s524 + $0x2c] sm:$0xf] %v4922
          %5051 = vst [vmem:[%s524 + $0x30] sm:$0xf] %v4923
          %5052 = vst [vmem:[%s524 + $0x34] sm:$0xf] %v4924
          %5053 = vst [vmem:[%s524 + $0x38] sm:$0xf] %v4925
          %5054 = vst [vmem:[%s524 + $0x3c] sm:$0xf] %v4926
          %5055 = vst [vmem:[%s524 + $0x40] sm:$0xf] %v4927
          %5056 = vst [vmem:[%s524 + $0x44] sm:$0xf] %v4928
          %5057 = vst [vmem:[%s524 + $0x48] sm:$0xf] %v4929
          %5058 = vst [vmem:[%s524 + $0x4c] sm:$0xf] %v4930
          %5059 = vst [vmem:[%s524 + $0x50] sm:$0xf] %v4931
          %5060 = vst [vmem:[%s524 + $0x54] sm:$0xf] %v4932
          %5061 = vst [vmem:[%s524 + $0x58] sm:$0xf] %v4933
          %5062 = vst [vmem:[%s524 + $0x5c] sm:$0xf] %v4934
          %5063 = vst [vmem:[%s524 + $0x60] sm:$0xf] %v4935
          %5064 = vst [vmem:[%s524 + $0x64] sm:$0xf] %v4936
          %5065 = vst [vmem:[%s524 + $0x68] sm:$0xf] %v4937
          %5066 = vst [vmem:[%s524 + $0x6c] sm:$0xf] %v4938
          %5067 = vst [vmem:[%s524 + $0x70] sm:$0xf] %v4939
          %5068 = vst [vmem:[%s524 + $0x74] sm:$0xf] %v4940
          %5069 = vst [vmem:[%s524 + $0x78] sm:$0xf] %v4941
          %5070 = vst [vmem:[%s524 + $0x7c] sm:$0xf] %v4942
          %5071 = vst [vmem:[%s524 + $0x80] sm:$0xf] %v4943
          %5072 = vst [vmem:[%s524 + $0x84] sm:$0xf] %v4944
          %5073 = vst [vmem:[%s524 + $0x88] sm:$0xf] %v4945
          %5074 = vst [vmem:[%s524 + $0x8c] sm:$0xf] %v4946
          %5075 = vst [vmem:[%s524 + $0x90] sm:$0xf] %v4947
          %5076 = vst [vmem:[%s524 + $0x94] sm:$0xf] %v4948
          %5077 = vst [vmem:[%s524 + $0x98] sm:$0xf] %v4949
          %5078 = vst [vmem:[%s524 + $0x9c] sm:$0xf] %v4950
          %5079 = vst [vmem:[%s524 + $0xa0] sm:$0xf] %v4951
          %5080 = vst [vmem:[%s524 + $0xa4] sm:$0xf] %v4952
          %5081 = vst [vmem:[%s524 + $0xa8] sm:$0xf] %v4953
          %5082 = vst [vmem:[%s524 + $0xac] sm:$0xf] %v4954
          %5083 = vst [vmem:[%s524 + $0xb0] sm:$0xf] %v4955
          %5084 = vst [vmem:[%s524 + $0xb4] sm:$0xf] %v4956
          %5085 = vst [vmem:[%s524 + $0xb8] sm:$0xf] %v4957
          %5086 = vst [vmem:[%s524 + $0xbc] sm:$0xf] %v4958
          %5087 = vst [vmem:[%s524 + $0xc0] sm:$0xf] %v4959
          %5088 = vst [vmem:[%s524 + $0xc4] sm:$0xf] %v4960
          %5089 = vst [vmem:[%s524 + $0xc8] sm:$0xf] %v4961
          %5090 = vst [vmem:[%s524 + $0xcc] sm:$0xf] %v4962
          %5091 = vst [vmem:[%s524 + $0xd0] sm:$0xf] %v4963
          %5092 = vst [vmem:[%s524 + $0xd4] sm:$0xf] %v4964
          %5093 = vst [vmem:[%s524 + $0xd8] sm:$0xf] %v4965
          %5094 = vst [vmem:[%s524 + $0xdc] sm:$0xf] %v4966
          %5095 = vst [vmem:[%s524 + $0xe0] sm:$0xf] %v4967
          %5096 = vst [vmem:[%s524 + $0xe4] sm:$0xf] %v4968
          %5097 = vst [vmem:[%s524 + $0xe8] sm:$0xf] %v4969
          %5098 = vst [vmem:[%s524 + $0xec] sm:$0xf] %v4970
          %5099 = vst [vmem:[%s524 + $0xf0] sm:$0xf] %v4971
          %5100 = vst [vmem:[%s524 + $0xf4] sm:$0xf] %v4972
          %5101 = vst [vmem:[%s524 + $0xf8] sm:$0xf] %v4973
          %5102 = vst [vmem:[%s524 + $0xfc] sm:$0xf] %v4974
        $region92: #{tpu_custom_call.1} parent=51 // pred_fallthru
          _
        %s5103 = sand.u32 %s241, 1
        %s5104 = scalar_lea.sflag [#allocation5], %s5103
        %s5105 = sand.u32 %s241, 1
        %s5106 = smul.addr %s5105, 256
        %s5107 = scalar_lea.vmem [#allocation17], %s5106
        %s5108 = sand.u32 %s267, 1
        %s5109 = scalar_lea.sflag [#allocation19], %s5108
        %s5110 = sand.u32 %s267, 1
        %s5111 = smul.addr %s5110, 256
        %s5112 = scalar_lea.vmem [#allocation18], %s5111
        // Predicated region
        $region93: #{tpu_custom_call.1} parent=51 // pred_check
          %p5113 = pneg %p251
        $region94: #{tpu_custom_call.1} parent=51 // pred_check_branch
          %5115 = sbr.rel (%p5113) target = $region96
        $region95: #{tpu_custom_call.1} parent=51 // pred_region
          %s5116 = smul.u32 64, %s40
          %s5118 = ssub.s32 4096, 4096
          %5119 = vsyncadd %s5104, %s5118
          %s5120 = smul.addr %s5116, 64
          %s5121 = scalar_lea.hbm %s8, %s5120
          %s5122 = sshll.u32 %s5107, 4
          %s5123 = int_to_ptr.vmem [resolvable:$true] %s5122
          %5128 = dma.vmem_to_hbm [thread:$0]  %s5123, 4096, %s5121, %s5104, 64, 64, 4
        $region96: #{tpu_custom_call.1} parent=51 // pred_fallthru
          _
        // Predicated region
        $region97: #{tpu_custom_call.1} parent=51 // pred_check
          %p5129 = pneg %p277
        $region98: #{tpu_custom_call.1} parent=51 // pred_check_branch
          %5131 = sbr.rel (%p5129) target = $region100
        $region99: #{tpu_custom_call.1} parent=51 // pred_region
          %s5132 = smul.u32 64, %s40
          %s5134 = ssub.s32 4096, 4096
          %5135 = vsyncadd %s5109, %s5134
          %s5136 = smul.addr %s5132, 64
          %s5137 = scalar_lea.hbm %s9, %s5136
          %s5138 = sshll.u32 %s5112, 4
          %s5139 = int_to_ptr.vmem [resolvable:$true] %s5138
          %5144 = dma.vmem_to_hbm [thread:$0]  %s5139, 4096, %s5137, %s5109, 64, 64, 4
        $region100: #{tpu_custom_call.1} parent=51 // pred_fallthru
          _
      $region52: #{tpu_custom_call.1} parent=5 // pred_fallthru
        _
      %p5145 = scmp.le.s32.totalorder 2, %s31
      // Predicated region
      $region101: #{tpu_custom_call.1} parent=5 // pred_check
        %p5146 = pneg %p5145
      $region102: #{tpu_custom_call.1} parent=5 // pred_check_branch
        %5148 = sbr.rel (%p5146) target = $region104
      $region103: #{tpu_custom_call.1} parent=5 // pred_region
        %s5149 = ssub.s32 %s31, 2
        // Predicated region
        $region105: #{tpu_custom_call.1} parent=103 // pred_check
          %p5150 = pneg %p257
        $region106: #{tpu_custom_call.1} parent=103 // pred_check_branch
          %5152 = sbr.rel (%p5150) target = $region108
        $region107: #{tpu_custom_call.1} parent=103 // pred_region
          %s5153 = sand.u32 %s242, 1
          %s5154 = scalar_lea.sflag [#allocation5], %s5153
          %s5155 = sand.u32 %s242, 1
          %s5156 = smul.addr %s5155, 256
          %s5157 = scalar_lea.vmem [#allocation17], %s5156
          %5158 = dma.done %s5154, 4096
        $region108: #{tpu_custom_call.1} parent=103 // pred_fallthru
          _
        // Predicated region
        $region109: #{tpu_custom_call.1} parent=103 // pred_check
          %p5159 = pneg %p283
        $region110: #{tpu_custom_call.1} parent=103 // pred_check_branch
          %5161 = sbr.rel (%p5159) target = $region112
        $region111: #{tpu_custom_call.1} parent=103 // pred_region
          %s5162 = sand.u32 %s268, 1
          %s5163 = scalar_lea.sflag [#allocation19], %s5162
          %s5164 = sand.u32 %s268, 1
          %s5165 = smul.addr %s5164, 256
          %s5166 = scalar_lea.vmem [#allocation18], %s5165
          %5167 = dma.done %s5163, 4096
        $region112: #{tpu_custom_call.1} parent=103 // pred_fallthru
          _
      $region104: #{tpu_custom_call.1} parent=5 // pred_fallthru
        _
    $region6: #{tpu_custom_call.1} parent=1 // loop_footer
      %s35 = sadd.s32 1, %s31
    $region7: #{tpu_custom_call.1} parent=1 // loop_footer_branch
      %30 = sbr.rel target = $region3
    $region8: #{tpu_custom_call.1} parent=1 // loop_exit
      _
    %5168 = vsyncpa [#allocation4], 1
    %s5169 = scalar_lea.sflag [#allocation4], 1
    %5170 = vsyncpa %s5169, 1
    %5171 = vsyncpa [#allocation7], 1
    %s5172 = scalar_lea.sflag [#allocation7], 1
    %5173 = vsyncpa %s5172, 1
    %5174 = vsyncpa [#allocation10], 1
    %5175 = vsyncpa [#allocation13], 1
    %5176 = vsyncpa [#allocation16], 1
    %5177 = vsyncpa [#allocation5], 1
    %s5178 = scalar_lea.sflag [#allocation5], 1
    %5179 = vsyncpa %s5178, 1
    %5180 = vsyncpa [#allocation19], 1
    %s5181 = scalar_lea.sflag [#allocation19], 1
    %5182 = vsyncpa %s5181, 1

</llo_original>
